<compile_context>
chip_gen: v7x
topology: tpu7x:2x2x1
jax: 0.10.0
libtpu: 0.0.40
codegen_flags: <defaults>
</compile_context>

<pallas_src>
import jax
import jax.numpy as jnp
from jax.experimental import pallas as pl
from jax.experimental.pallas import tpu as pltpu


def rcab_kernel(x_ref, band1_ref, b1_ref, band2_ref, b2_ref,
                sdn_ref, sup_ref, wd_ref, bd_ref, wu_ref, bu_ref,
                o_ref):
    """All tensors are lane-dense: pixels live in a (H, W*C) layout."""

    def conv3x3(inp, band_ref, b_ref):
        # dy == 1 (same row): width taps + channel contraction fused, K = W*C.
        acc = jnp.dot(inp, band_ref[1], preferred_element_type=jnp.float32)
        # dy == 0 / dy == 2: shift rows with tiny (H, H) sub/super-diagonal
        # matmuls (the zero row implements SAME zero padding along H), then
        # reuse the banded matmul.  No misaligned slices, no pad buffer.
        up = jnp.dot(sdn_ref[...], inp, preferred_element_type=jnp.float32)   # row h <- inp[h-1]
        acc = acc + jnp.dot(up, band_ref[0], preferred_element_type=jnp.float32)
        dn = jnp.dot(sup_ref[...], inp, preferred_element_type=jnp.float32)   # row h <- inp[h+1]
        acc = acc + jnp.dot(dn, band_ref[2], preferred_element_type=jnp.float32)
        return acc + b_ref[...]                                               # (1, W*C) bias

    x2d = x_ref[0].astype(jnp.float32)                        # (H, W*C)
    mid = jnp.maximum(conv3x3(x2d, band1_ref, b1_ref), 0.0)   # conv -> ReLU
    res = conv3x3(mid, band2_ref, b2_ref)                     # conv

    # CALayer.  Pool over H here; the pool over W and the squeeze 1x1 conv are
    # folded into wd_ref (tiled over W, scaled by 1/(H*W)) on the host, and
    # the excite 1x1 conv is tiled over W so the gate comes out already
    # broadcast along the W*C lane axis.
    pooled = jnp.sum(res, axis=0, keepdims=True)                              # (1, W*C)
    hid = jnp.dot(pooled, wd_ref[...], preferred_element_type=jnp.float32) + bd_ref[...]
    hid = jnp.maximum(hid, 0.0)                                               # (1, C // r)
    z = jnp.dot(hid, wu_ref[...], preferred_element_type=jnp.float32) + bu_ref[...]
    gate = pl.reciprocal(1.0 + jnp.exp(-z), approx=True)                      # sigmoid (EUP)

    # Channel attention + residual skip; x is re-read here so it is not kept
    # live across both convs.  Lane-dense (H, W*C) store.
    out = res * gate + x_ref[0].astype(jnp.float32)
    o_ref[0] = out.astype(o_ref.dtype)


def _banded_conv_weights(w_hwio, W):
    """(3, 3, Cin, Cout) HWIO -> (3, W*Cin, W*Cout) block-banded matrices.

    band[dy][win*Cin + ci, w*Cout + co] = w_hwio[dy, dx, ci, co] with
    win = w + dx - 1; entries falling outside [0, W) are simply absent, which
    implements SAME zero padding along the width axis.
    """
    kh, kw = w_hwio.shape[0], w_hwio.shape[1]
    rows = []
    for dy in range(kh):
        band = sum(jnp.kron(jnp.eye(W, k=1 - dx, dtype=w_hwio.dtype),
                            w_hwio[dy, dx])
                   for dx in range(kw))
        rows.append(band)
    return jnp.stack(rows)


def rcab_forward(x_nhwc, params):
    """x_nhwc: (B, H, W, C).  params: (w1, b1, w2, b2, wd, bd, wu, bu) with
    3x3 convs in HWIO and the 1x1 squeeze/excite convs as (Cin, Cout)/(1, C)."""
    B, H, W, C = x_nhwc.shape
    w1, b1, w2, b2, wd, bd, wu, bu = params
    WC = W * C

    # Host-side, one-time weight re-layout (all grid-invariant kernel inputs).
    band1 = _banded_conv_weights(w1, W)               # (3, WC, WC)
    band2 = _banded_conv_weights(w2, W)               # (3, WC, WC)
    b1_wc = jnp.tile(b1, (1, W))                      # (1, WC)
    b2_wc = jnp.tile(b2, (1, W))                      # (1, WC)
    sdn = jnp.eye(H, k=-1, dtype=jnp.float32)         # row h <- row h-1 (top row 0)
    sup = jnp.eye(H, k=1, dtype=jnp.float32)          # row h <- row h+1 (bottom row 0)
    wd_wc = jnp.tile(wd, (W, 1)) * (1.0 / (H * W))    # (WC, Cr), mean folded in
    wu_wc = jnp.tile(wu, (1, W))                      # (Cr, WC), gate W-broadcast
    bu_wc = jnp.tile(bu, (1, W))                      # (1, WC)

    x2d = x_nhwc.reshape(B, H, WC)                    # lane-dense layout

    def const_spec(shape):
        n = len(shape)
        return pl.BlockSpec(shape, lambda b, n=n: (0,) * n)

    # NOTE: for production spatial sizes, add an H-tile grid axis with a 2-row
    # halo and tile W (or fall back to im2col) to bound the banded weights and
    # keep live VMEM under the v7x 64 MiB budget; at these shapes the banded
    # weights are 2 x 3 MiB and everything fits comfortably.
    out2d = pl.pallas_call(
        rcab_kernel,
        out_shape=jax.ShapeDtypeStruct((B, H, WC), x_nhwc.dtype),
        grid=(B,),
        in_specs=[
            pl.BlockSpec((1, H, WC), lambda b: (b, 0, 0)),   # x, lane-dense
            const_spec(band1.shape), const_spec(b1_wc.shape),
            const_spec(band2.shape), const_spec(b2_wc.shape),
            const_spec(sdn.shape), const_spec(sup.shape),
            const_spec(wd_wc.shape), const_spec(bd.shape),
            const_spec(wu_wc.shape), const_spec(bu_wc.shape),
        ],
        out_specs=pl.BlockSpec((1, H, WC), lambda b: (b, 0, 0)),
        compiler_params=pltpu.CompilerParams(
            dimension_semantics=("parallel",),
            vmem_limit_bytes=48 * 1024 * 1024),
    )(x2d, band1, b1_wc, band2, b2_wc, sdn, sup, wd_wc, bd, wu_wc, bu_wc)

    return out2d.reshape(B, H, W, C)


def rcab_ref(x, params):
    """Pure-JAX reference (NHWC) mirroring the PyTorch forward."""
    w1, b1, w2, b2, wd, bd, wu, bu = params

    def conv(v, w, b):
        y = jax.lax.conv_general_dilated(
            v, w, (1, 1), 'SAME',
            dimension_numbers=('NHWC', 'HWIO', 'NHWC'),
            precision='highest')
        return y + b.reshape(1, 1, 1, -1)

    mid = jax.nn.relu(conv(x, w1, b1))
    res = conv(mid, w2, b2)
    pooled = res.mean(axis=(1, 2))                               # (B, C)
    hid = jax.nn.relu(pooled @ wd + bd)                          # (B, Cr)
    gate = jax.nn.sigmoid(hid @ wu + bu)                         # (B, C)
    return res * gate[:, None, None, :] + x


if __name__ == "__main__":
    # RCAB(conv=default_conv, n_feat=32, kernel_size=3, reduction=8)
    B, H, W, C, reduction = 2, 16, 16, 32, 8
    Cr = C // reduction

    key = jax.random.PRNGKey(0)
    ks = jax.random.split(key, 9)
    x = jax.random.normal(ks[0], (B, H, W, C), jnp.float32)

    # deterministic synthetic parameters (same shapes as the nn.Module's)
    w1 = jax.random.normal(ks[1], (3, 3, C, C), jnp.float32) * 0.05
    b1 = jax.random.normal(ks[2], (1, C), jnp.float32) * 0.05
    w2 = jax.random.normal(ks[3], (3, 3, C, C), jnp.float32) * 0.05
    b2 = jax.random.normal(ks[4], (1, C), jnp.float32) * 0.05
    wd = jax.random.normal(ks[5], (C, Cr), jnp.float32) * 0.1
    bd = jax.random.normal(ks[6], (1, Cr), jnp.float32) * 0.1
    wu = jax.random.normal(ks[7], (Cr, C), jnp.float32) * 0.1
    bu = jax.random.normal(ks[8], (1, C), jnp.float32) * 0.1
    params = (w1, b1, w2, b2, wd, bd, wu, bu)

    out = rcab_forward(x, params)
    out = jax.block_until_ready(out)

    ref = rcab_ref(x, params)
    assert out.shape == (B, H, W, C)
    assert bool(jnp.allclose(out, ref, atol=1e-2, rtol=1e-2)), (
        "mismatch vs reference; max abs err="
        + str(float(jnp.max(jnp.abs(out - ref)))))

    print("KERNEL_OK")
</pallas_src>

<mosaic_0001>
module attributes {stable_mosaic.version = 11 : i64} {
  func.func @rcab_kernel(%arg0: i32, %arg1: memref<1x16x512xf32, #tpu.memory_space<vmem>>, %arg2: memref<3x512x512xf32, #tpu.memory_space<vmem>>, %arg3: memref<1x512xf32, #tpu.memory_space<vmem>>, %arg4: memref<3x512x512xf32, #tpu.memory_space<vmem>>, %arg5: memref<1x512xf32, #tpu.memory_space<vmem>>, %arg6: memref<16x16xf32, #tpu.memory_space<vmem>>, %arg7: memref<16x16xf32, #tpu.memory_space<vmem>>, %arg8: memref<512x4xf32, #tpu.memory_space<vmem>>, %arg9: memref<1x4xf32, #tpu.memory_space<vmem>>, %arg10: memref<4x512xf32, #tpu.memory_space<vmem>>, %arg11: memref<1x512xf32, #tpu.memory_space<vmem>>, %arg12: memref<1x16x512xf32, #tpu.memory_space<vmem>>) attributes {dimension_semantics = [#tpu.dimension_semantics<parallel>], iteration_bounds = array<i64: 2>, scalar_prefetch = 0 : i64, scratch_operands = 0 : i64, tpu.core_type = #tpu.core_type<tc>, window_params = [{transform_indices = @transform_0, window_bounds = array<i64: 1, 16, 512>}, {pipeline_mode = #tpu.pipeline_mode<synchronous>, transform_indices = @transform_1, window_bounds = array<i64: 3, 512, 512>}, {pipeline_mode = #tpu.pipeline_mode<synchronous>, transform_indices = @transform_2, window_bounds = array<i64: 1, 512>}, {pipeline_mode = #tpu.pipeline_mode<synchronous>, transform_indices = @transform_3, window_bounds = array<i64: 3, 512, 512>}, {pipeline_mode = #tpu.pipeline_mode<synchronous>, transform_indices = @transform_4, window_bounds = array<i64: 1, 512>}, {pipeline_mode = #tpu.pipeline_mode<synchronous>, transform_indices = @transform_5, window_bounds = array<i64: 16, 16>}, {pipeline_mode = #tpu.pipeline_mode<synchronous>, transform_indices = @transform_6, window_bounds = array<i64: 16, 16>}, {pipeline_mode = #tpu.pipeline_mode<synchronous>, transform_indices = @transform_7, window_bounds = array<i64: 512, 4>}, {pipeline_mode = #tpu.pipeline_mode<synchronous>, transform_indices = @transform_8, window_bounds = array<i64: 1, 4>}, {pipeline_mode = #tpu.pipeline_mode<synchronous>, transform_indices = @transform_9, window_bounds = array<i64: 4, 512>}, {pipeline_mode = #tpu.pipeline_mode<synchronous>, transform_indices = @transform_10, window_bounds = array<i64: 1, 512>}, {transform_indices = @transform_11, window_bounds = array<i64: 1, 16, 512>}]} {
    %c0 = arith.constant 0 : index
    %c0_0 = arith.constant 0 : index
    %c0_1 = arith.constant 0 : index
    %0 = vector.load %arg1[%c0, %c0_0, %c0_1] : memref<1x16x512xf32, #tpu.memory_space<vmem>>, vector<1x16x512xf32>
    %1 = vector.shape_cast %0 : vector<1x16x512xf32> to vector<16x512xf32>
    %c1 = arith.constant 1 : index
    %c0_2 = arith.constant 0 : index
    %c0_3 = arith.constant 0 : index
    %2 = vector.load %arg2[%c1, %c0_2, %c0_3] : memref<3x512x512xf32, #tpu.memory_space<vmem>>, vector<1x512x512xf32>
    %3 = vector.shape_cast %2 : vector<1x512x512xf32> to vector<512x512xf32>
    %cst = arith.constant dense<0.000000e+00> : vector<16x512xf32>
    %4 = tpu.matmul %1, %3, %cst {dimension_numbers = #tpu.dot_dimension_numbers<[1], [0], [0], [1], [0, 0, 1, 1], [], []>} : vector<16x512xf32>, vector<512x512xf32>, vector<16x512xf32> -> vector<16x512xf32>
    %c0_4 = arith.constant 0 : index
    %c0_5 = arith.constant 0 : index
    %5 = vector.load %arg6[%c0_4, %c0_5] : memref<16x16xf32, #tpu.memory_space<vmem>>, vector<16x16xf32>
    %cst_6 = arith.constant dense<0.000000e+00> : vector<16x512xf32>
    %6 = tpu.matmul %5, %1, %cst_6 {dimension_numbers = #tpu.dot_dimension_numbers<[1], [0], [0], [1], [0, 0, 1, 1], [], []>} : vector<16x16xf32>, vector<16x512xf32>, vector<16x512xf32> -> vector<16x512xf32>
    %c0_7 = arith.constant 0 : index
    %c0_8 = arith.constant 0 : index
    %c0_9 = arith.constant 0 : index
    %7 = vector.load %arg2[%c0_7, %c0_8, %c0_9] : memref<3x512x512xf32, #tpu.memory_space<vmem>>, vector<1x512x512xf32>
    %8 = vector.shape_cast %7 : vector<1x512x512xf32> to vector<512x512xf32>
    %cst_10 = arith.constant dense<0.000000e+00> : vector<16x512xf32>
    %9 = tpu.matmul %6, %8, %cst_10 {dimension_numbers = #tpu.dot_dimension_numbers<[1], [0], [0], [1], [0, 0, 1, 1], [], []>} : vector<16x512xf32>, vector<512x512xf32>, vector<16x512xf32> -> vector<16x512xf32>
    %10 = arith.addf %4, %9 : vector<16x512xf32>
    %c0_11 = arith.constant 0 : index
    %c0_12 = arith.constant 0 : index
    %11 = vector.load %arg7[%c0_11, %c0_12] : memref<16x16xf32, #tpu.memory_space<vmem>>, vector<16x16xf32>
    %cst_13 = arith.constant dense<0.000000e+00> : vector<16x512xf32>
    %12 = tpu.matmul %11, %1, %cst_13 {dimension_numbers = #tpu.dot_dimension_numbers<[1], [0], [0], [1], [0, 0, 1, 1], [], []>} : vector<16x16xf32>, vector<16x512xf32>, vector<16x512xf32> -> vector<16x512xf32>
    %c2 = arith.constant 2 : index
    %c0_14 = arith.constant 0 : index
    %c0_15 = arith.constant 0 : index
    %13 = vector.load %arg2[%c2, %c0_14, %c0_15] : memref<3x512x512xf32, #tpu.memory_space<vmem>>, vector<1x512x512xf32>
    %14 = vector.shape_cast %13 : vector<1x512x512xf32> to vector<512x512xf32>
    %cst_16 = arith.constant dense<0.000000e+00> : vector<16x512xf32>
    %15 = tpu.matmul %12, %14, %cst_16 {dimension_numbers = #tpu.dot_dimension_numbers<[1], [0], [0], [1], [0, 0, 1, 1], [], []>} : vector<16x512xf32>, vector<512x512xf32>, vector<16x512xf32> -> vector<16x512xf32>
    %16 = arith.addf %10, %15 : vector<16x512xf32>
    %c0_17 = arith.constant 0 : index
    %c0_18 = arith.constant 0 : index
    %17 = vector.load %arg3[%c0_17, %c0_18] : memref<1x512xf32, #tpu.memory_space<vmem>>, vector<1x512xf32>
    %18 = vector.broadcast %17 : vector<1x512xf32> to vector<16x512xf32>
    %19 = arith.addf %16, %18 : vector<16x512xf32>
    %cst_19 = arith.constant 0.000000e+00 : f32
    %20 = vector.broadcast %cst_19 : f32 to vector<16x512xf32>
    %21 = arith.maximumf %19, %20 : vector<16x512xf32>
    %c1_20 = arith.constant 1 : index
    %c0_21 = arith.constant 0 : index
    %c0_22 = arith.constant 0 : index
    %22 = vector.load %arg4[%c1_20, %c0_21, %c0_22] : memref<3x512x512xf32, #tpu.memory_space<vmem>>, vector<1x512x512xf32>
    %23 = vector.shape_cast %22 : vector<1x512x512xf32> to vector<512x512xf32>
    %cst_23 = arith.constant dense<0.000000e+00> : vector<16x512xf32>
    %24 = tpu.matmul %21, %23, %cst_23 {dimension_numbers = #tpu.dot_dimension_numbers<[1], [0], [0], [1], [0, 0, 1, 1], [], []>} : vector<16x512xf32>, vector<512x512xf32>, vector<16x512xf32> -> vector<16x512xf32>
    %c0_24 = arith.constant 0 : index
    %c0_25 = arith.constant 0 : index
    %25 = vector.load %arg6[%c0_24, %c0_25] : memref<16x16xf32, #tpu.memory_space<vmem>>, vector<16x16xf32>
    %cst_26 = arith.constant dense<0.000000e+00> : vector<16x512xf32>
    %26 = tpu.matmul %25, %21, %cst_26 {dimension_numbers = #tpu.dot_dimension_numbers<[1], [0], [0], [1], [0, 0, 1, 1], [], []>} : vector<16x16xf32>, vector<16x512xf32>, vector<16x512xf32> -> vector<16x512xf32>
    %c0_27 = arith.constant 0 : index
    %c0_28 = arith.constant 0 : index
    %c0_29 = arith.constant 0 : index
    %27 = vector.load %arg4[%c0_27, %c0_28, %c0_29] : memref<3x512x512xf32, #tpu.memory_space<vmem>>, vector<1x512x512xf32>
    %28 = vector.shape_cast %27 : vector<1x512x512xf32> to vector<512x512xf32>
    %cst_30 = arith.constant dense<0.000000e+00> : vector<16x512xf32>
    %29 = tpu.matmul %26, %28, %cst_30 {dimension_numbers = #tpu.dot_dimension_numbers<[1], [0], [0], [1], [0, 0, 1, 1], [], []>} : vector<16x512xf32>, vector<512x512xf32>, vector<16x512xf32> -> vector<16x512xf32>
    %30 = arith.addf %24, %29 : vector<16x512xf32>
    %c0_31 = arith.constant 0 : index
    %c0_32 = arith.constant 0 : index
    %31 = vector.load %arg7[%c0_31, %c0_32] : memref<16x16xf32, #tpu.memory_space<vmem>>, vector<16x16xf32>
    %cst_33 = arith.constant dense<0.000000e+00> : vector<16x512xf32>
    %32 = tpu.matmul %31, %21, %cst_33 {dimension_numbers = #tpu.dot_dimension_numbers<[1], [0], [0], [1], [0, 0, 1, 1], [], []>} : vector<16x16xf32>, vector<16x512xf32>, vector<16x512xf32> -> vector<16x512xf32>
    %c2_34 = arith.constant 2 : index
    %c0_35 = arith.constant 0 : index
    %c0_36 = arith.constant 0 : index
    %33 = vector.load %arg4[%c2_34, %c0_35, %c0_36] : memref<3x512x512xf32, #tpu.memory_space<vmem>>, vector<1x512x512xf32>
    %34 = vector.shape_cast %33 : vector<1x512x512xf32> to vector<512x512xf32>
    %cst_37 = arith.constant dense<0.000000e+00> : vector<16x512xf32>
    %35 = tpu.matmul %32, %34, %cst_37 {dimension_numbers = #tpu.dot_dimension_numbers<[1], [0], [0], [1], [0, 0, 1, 1], [], []>} : vector<16x512xf32>, vector<512x512xf32>, vector<16x512xf32> -> vector<16x512xf32>
    %36 = arith.addf %30, %35 : vector<16x512xf32>
    %c0_38 = arith.constant 0 : index
    %c0_39 = arith.constant 0 : index
    %37 = vector.load %arg5[%c0_38, %c0_39] : memref<1x512xf32, #tpu.memory_space<vmem>>, vector<1x512xf32>
    %38 = vector.broadcast %37 : vector<1x512xf32> to vector<16x512xf32>
    %39 = arith.addf %36, %38 : vector<16x512xf32>
    %cst_40 = arith.constant dense<0.000000e+00> : vector<512xf32>
    %40 = vector.multi_reduction <add>, %39, %cst_40 [0] : vector<16x512xf32> to vector<512xf32>
    %41 = vector.shape_cast %40 : vector<512xf32> to vector<1x512xf32>
    %c0_41 = arith.constant 0 : index
    %c0_42 = arith.constant 0 : index
    %42 = vector.load %arg8[%c0_41, %c0_42] : memref<512x4xf32, #tpu.memory_space<vmem>>, vector<512x4xf32>
    %cst_43 = arith.constant dense<0.000000e+00> : vector<1x4xf32>
    %43 = tpu.matmul %41, %42, %cst_43 {dimension_numbers = #tpu.dot_dimension_numbers<[1], [0], [0], [1], [0, 0, 1, 1], [], []>} : vector<1x512xf32>, vector<512x4xf32>, vector<1x4xf32> -> vector<1x4xf32>
    %c0_44 = arith.constant 0 : index
    %c0_45 = arith.constant 0 : index
    %44 = vector.load %arg9[%c0_44, %c0_45] : memref<1x4xf32, #tpu.memory_space<vmem>>, vector<1x4xf32>
    %45 = arith.addf %43, %44 : vector<1x4xf32>
    %cst_46 = arith.constant 0.000000e+00 : f32
    %46 = vector.broadcast %cst_46 : f32 to vector<1x4xf32>
    %47 = arith.maximumf %45, %46 : vector<1x4xf32>
    %c0_47 = arith.constant 0 : index
    %c0_48 = arith.constant 0 : index
    %48 = vector.load %arg10[%c0_47, %c0_48] : memref<4x512xf32, #tpu.memory_space<vmem>>, vector<4x512xf32>
    %cst_49 = arith.constant dense<0.000000e+00> : vector<1x512xf32>
    %49 = tpu.matmul %47, %48, %cst_49 {dimension_numbers = #tpu.dot_dimension_numbers<[1], [0], [0], [1], [0, 0, 1, 1], [], []>} : vector<1x4xf32>, vector<4x512xf32>, vector<1x512xf32> -> vector<1x512xf32>
    %c0_50 = arith.constant 0 : index
    %c0_51 = arith.constant 0 : index
    %50 = vector.load %arg11[%c0_50, %c0_51] : memref<1x512xf32, #tpu.memory_space<vmem>>, vector<1x512xf32>
    %51 = arith.addf %49, %50 : vector<1x512xf32>
    %cst_52 = arith.constant 0.000000e+00 : f32
    %52 = vector.broadcast %cst_52 : f32 to vector<1x512xf32>
    %53 = arith.subf %52, %51 : vector<1x512xf32>
    %54 = math.exp %53 : vector<1x512xf32>
    %cst_53 = arith.constant 1.000000e+00 : f32
    %55 = vector.broadcast %cst_53 : f32 to vector<1x512xf32>
    %56 = arith.addf %55, %54 : vector<1x512xf32>
    %57 = tpu.reciprocal %56 {approx = true} : vector<1x512xf32> -> vector<1x512xf32>
    %58 = vector.broadcast %57 : vector<1x512xf32> to vector<16x512xf32>
    %59 = arith.mulf %39, %58 : vector<16x512xf32>
    %c0_54 = arith.constant 0 : index
    %c0_55 = arith.constant 0 : index
    %c0_56 = arith.constant 0 : index
    %60 = vector.load %arg1[%c0_54, %c0_55, %c0_56] : memref<1x16x512xf32, #tpu.memory_space<vmem>>, vector<1x16x512xf32>
    %61 = vector.shape_cast %60 : vector<1x16x512xf32> to vector<16x512xf32>
    %62 = arith.addf %59, %61 : vector<16x512xf32>
    %c0_57 = arith.constant 0 : index
    %c0_58 = arith.constant 0 : index
    %c0_59 = arith.constant 0 : index
    %63 = vector.load %arg12[%c0_57, %c0_58, %c0_59] : memref<1x16x512xf32, #tpu.memory_space<vmem>>, vector<1x16x512xf32>
    %64 = vector.shape_cast %63 : vector<1x16x512xf32> to vector<16x512xf32>
    %65 = vector.shape_cast %62 : vector<16x512xf32> to vector<1x16x512xf32>
    tpu.vector_store %arg12[%c0_57, %c0_58, %c0_59], %65 {strides = array<i32>} : memref<1x16x512xf32, #tpu.memory_space<vmem>>, vector<1x16x512xf32>,
    return
  }
  func.func @transform_0(%arg0: i32) -> (i32, i32, i32) {
    %c0_i32 = arith.constant 0 : i32
    %c0_i32_0 = arith.constant 0 : i32
    %c0_i32_1 = arith.constant 0 : i32
    return %arg0, %c0_i32, %c0_i32_0 : i32, i32, i32
  }
  func.func @transform_1(%arg0: i32) -> (i32, i32, i32) {
    %c0_i32 = arith.constant 0 : i32
    %c0_i32_0 = arith.constant 0 : i32
    %c0_i32_1 = arith.constant 0 : i32
    %c0_i32_2 = arith.constant 0 : i32
    return %c0_i32, %c0_i32_0, %c0_i32_1 : i32, i32, i32
  }
  func.func @transform_2(%arg0: i32) -> (i32, i32) {
    %c0_i32 = arith.constant 0 : i32
    %c0_i32_0 = arith.constant 0 : i32
    %c0_i32_1 = arith.constant 0 : i32
    return %c0_i32, %c0_i32_0 : i32, i32
  }
  func.func @transform_3(%arg0: i32) -> (i32, i32, i32) {
    %c0_i32 = arith.constant 0 : i32
    %c0_i32_0 = arith.constant 0 : i32
    %c0_i32_1 = arith.constant 0 : i32
    %c0_i32_2 = arith.constant 0 : i32
    return %c0_i32, %c0_i32_0, %c0_i32_1 : i32, i32, i32
  }
  func.func @transform_4(%arg0: i32) -> (i32, i32) {
    %c0_i32 = arith.constant 0 : i32
    %c0_i32_0 = arith.constant 0 : i32
    %c0_i32_1 = arith.constant 0 : i32
    return %c0_i32, %c0_i32_0 : i32, i32
  }
  func.func @transform_5(%arg0: i32) -> (i32, i32) {
    %c0_i32 = arith.constant 0 : i32
    %c0_i32_0 = arith.constant 0 : i32
    %c0_i32_1 = arith.constant 0 : i32
    return %c0_i32, %c0_i32_0 : i32, i32
  }
  func.func @transform_6(%arg0: i32) -> (i32, i32) {
    %c0_i32 = arith.constant 0 : i32
    %c0_i32_0 = arith.constant 0 : i32
    %c0_i32_1 = arith.constant 0 : i32
    return %c0_i32, %c0_i32_0 : i32, i32
  }
  func.func @transform_7(%arg0: i32) -> (i32, i32) {
    %c0_i32 = arith.constant 0 : i32
    %c0_i32_0 = arith.constant 0 : i32
    %c0_i32_1 = arith.constant 0 : i32
    return %c0_i32, %c0_i32_0 : i32, i32
  }
  func.func @transform_8(%arg0: i32) -> (i32, i32) {
    %c0_i32 = arith.constant 0 : i32
    %c0_i32_0 = arith.constant 0 : i32
    %c0_i32_1 = arith.constant 0 : i32
    return %c0_i32, %c0_i32_0 : i32, i32
  }
  func.func @transform_9(%arg0: i32) -> (i32, i32) {
    %c0_i32 = arith.constant 0 : i32
    %c0_i32_0 = arith.constant 0 : i32
    %c0_i32_1 = arith.constant 0 : i32
    return %c0_i32, %c0_i32_0 : i32, i32
  }
  func.func @transform_10(%arg0: i32) -> (i32, i32) {
    %c0_i32 = arith.constant 0 : i32
    %c0_i32_0 = arith.constant 0 : i32
    %c0_i32_1 = arith.constant 0 : i32
    return %c0_i32, %c0_i32_0 : i32, i32
  }
  func.func @transform_11(%arg0: i32) -> (i32, i32, i32) {
    %c0_i32 = arith.constant 0 : i32
    %c0_i32_0 = arith.constant 0 : i32
    %c0_i32_1 = arith.constant 0 : i32
    return %arg0, %c0_i32, %c0_i32_0 : i32, i32, i32
  }
}

</mosaic_0001>

<llo_original>
// kernel: tpu_custom_call.1
$region0: #{tpu_custom_call.1}
  #allocation0 [shape = 'u32[]', space=smem, size = 0x4, offset = 0x4, fixed_abs, tag = 'smem constant byte address 0x4 - core index']
  #allocation1 [shape = 'u32[144,128]{1,0:T(1,128)}', space=vmem, size = 0x12000, scoped, tag = 'internal scratch']
  %s0 = inlined_call_operand.hbm [shape: f32[2,16,512], index: 0, kind: input, shape index: {}]
  %s1 = inlined_call_operand.hbm [shape: f32[3,512,512], index: 1, kind: input, shape index: {}]
  %s2 = inlined_call_operand.hbm [shape: f32[1,512], index: 2, kind: input, shape index: {}]
  %s3 = inlined_call_operand.hbm [shape: f32[3,512,512], index: 3, kind: input, shape index: {}]
  %s4 = inlined_call_operand.hbm [shape: f32[1,512], index: 4, kind: input, shape index: {}]
  %s5 = inlined_call_operand.hbm [shape: f32[16,16], index: 5, kind: input, shape index: {}]
  %s6 = inlined_call_operand.hbm [shape: f32[16,16], index: 6, kind: input, shape index: {}]
  %s7 = inlined_call_operand.vmem [shape: f32[512,4], index: 7, kind: input, shape index: {}]
  %s8 = inlined_call_operand.hbm [shape: f32[1,4], index: 8, kind: input, shape index: {}]
  %s9 = inlined_call_operand.hbm [shape: f32[4,512], index: 9, kind: input, shape index: {}]
  %s10 = inlined_call_operand.hbm [shape: f32[1,512], index: 10, kind: input, shape index: {}]
  %s11 = inlined_call_operand.hbm [shape: f32[2,16,512], index: 11, kind: output, shape index: {}]
  %s12 = sld [smem:[#allocation0]]
  $region117: #{tpu_custom_call.1} parent=0
    _
  %s14 = ssub.s32 1, %s12
  %s15 = scalar_select 0, %s14, %s12
  $region1: #{tpu_custom_call.1} parent=0
    #allocation2 [shape = 'u8[65536]{0}', space=vmem, size = 0x10000, scoped, tag = 'input window, operand 0']
    #allocation3 [shape = 's32[2]{0}', space=sflag, size = 0x8, scoped, tag = 'scoped memory for tpu_custom_call.1']
    #allocation4 [shape = 's32[2]{0}', space=sflag, size = 0x8, scoped, tag = 'scoped memory for tpu_custom_call.1']
    #allocation5 [shape = 'u8[3145728]{0}', space=vmem, size = 0x300000, scoped, tag = 'input window, operand 1, single buffered']
    #allocation6 [shape = 's32[1]{0}', space=sflag, size = 0x4, scoped, tag = 'scoped memory for tpu_custom_call.1']
    #allocation7 [shape = 'u8[2048]{0}', space=vmem, size = 0x800, scoped, tag = 'input window, operand 2, single buffered']
    #allocation8 [shape = 'u8[3145728]{0}', space=vmem, size = 0x300000, scoped, tag = 'input window, operand 3, single buffered']
    #allocation9 [shape = 's32[1]{0}', space=sflag, size = 0x4, scoped, tag = 'scoped memory for tpu_custom_call.1']
    #allocation10 [shape = 'u8[2048]{0}', space=vmem, size = 0x800, scoped, tag = 'input window, operand 4, single buffered']
    #allocation11 [shape = 'u8[8192]{0}', space=vmem, size = 0x2000, scoped, tag = 'input window, operand 5, single buffered']
    #allocation12 [shape = 's32[1]{0}', space=sflag, size = 0x4, scoped, tag = 'scoped memory for tpu_custom_call.1']
    #allocation13 [shape = 'u8[8192]{0}', space=vmem, size = 0x2000, scoped, tag = 'input window, operand 6, single buffered']
    #allocation14 [shape = 'u8[512]{0}', space=vmem, size = 0x400, scoped, tag = 'input window, operand 8, single buffered']
    #allocation15 [shape = 's32[1]{0}', space=sflag, size = 0x4, scoped, tag = 'scoped memory for tpu_custom_call.1']
    #allocation16 [shape = 'u8[8192]{0}', space=vmem, size = 0x2000, scoped, tag = 'input window, operand 9, single buffered']
    #allocation17 [shape = 'u8[2048]{0}', space=vmem, size = 0x800, scoped, tag = 'input window, operand 10, single buffered']
    #allocation18 [shape = 's32[1]{0}', space=sflag, size = 0x4, scoped, tag = 'scoped memory for tpu_custom_call.1']
    #allocation19 [shape = 'u8[65536]{0}', space=vmem, size = 0x10000, scoped, tag = 'output window, operand 0']
    %16 = vsyncpa [#allocation3], 0
    %s17 = scalar_lea.sflag [#allocation3], 1
    %18 = vsyncpa %s17, 0
    %19 = vsyncpa [#allocation6], 0
    %20 = vsyncpa [#allocation9], 0
    %21 = vsyncpa [#allocation12], 0
    %22 = vsyncpa [#allocation15], 0
    %23 = vsyncpa [#allocation18], 0
    %24 = vsyncpa [#allocation4], 0
    %s25 = scalar_lea.sflag [#allocation4], 1
    %26 = vsyncpa %s25, 0
    loop: start=0, step=1, limit=4
    $region2: #{tpu_custom_call.1} parent=1 // loop_pre_header
      _
    $region3: #{tpu_custom_call.1} parent=1 // loop_header
      %s28 = sphi 0, %s32
      %p29 = scmp.ge.s32.totalorder %s28, 4
      %s38 = sphi 0, %s40
      %s41 = sphi 0, %s38
      %s42 = sphi 0, %s41
      %s58 = sphi 0, %s42
      %s62 = sphi 0, %s62
      %s64 = sphi 0, %s62
      %s65 = sphi 0, %s64
      %s79 = sphi 0, %s65
      %s83 = sphi 0, %s83
      %s85 = sphi 0, %s83
      %s86 = sphi 0, %s85
      %s100 = sphi 0, %s86
      %s104 = sphi 0, %s104
      %s106 = sphi 0, %s104
      %s107 = sphi 0, %s106
      %s121 = sphi 0, %s107
      %s125 = sphi 0, %s125
      %s127 = sphi 0, %s125
      %s128 = sphi 0, %s127
      %s142 = sphi 0, %s128
      %s146 = sphi 0, %s146
      %s148 = sphi 0, %s146
      %s149 = sphi 0, %s148
      %s163 = sphi 0, %s149
      %s167 = sphi 0, %s167
      %s169 = sphi 0, %s167
      %s170 = sphi 0, %s169
      %s184 = sphi 0, %s170
      %s188 = sphi 0, %s188
      %s190 = sphi 0, %s188
      %s191 = sphi 0, %s190
      %s205 = sphi 0, %s191
      %s209 = sphi 0, %s209
      %s211 = sphi 0, %s209
      %s212 = sphi 0, %s211
      %s226 = sphi 0, %s212
      %s230 = sphi 0, %s230
      %s232 = sphi 0, %s230
      %s233 = sphi 0, %s232
      %s247 = sphi 0, %s233
      %s251 = sphi 0, %s251
      %s253 = sphi 0, %s251
      %s254 = sphi 0, %s253
      %s268 = sphi 0, %s254
      %s274 = sphi 0, %s276
      %s277 = sphi 0, %s274
      %s278 = sphi 0, %s277
      %s294 = sphi 0, %s278
    $region4: #{tpu_custom_call.1} parent=1 // loop_header_branch
      %31 = sbr.rel (%p29) target = $region8
    $region5: #{tpu_custom_call.1} parent=1 // loop_body
      %s33 = ssub.s32 %s28, 1
      %s34 = ssub.s32 %s28, 2
      %s35 = sadd.s32 %s28, 1
      %s36 = ssub.s32 %s28, %s35
      %p37 = scmp.eq.s32.totalorder %s36, 0
      %s39 = sadd.s32 %s38, 1
      %s40 = scalar_select %p37, %s38, %s39
      %p43 = pneg %p37
      %p44 = scmp.eq.s32.totalorder %s28, 1
      %p45 = por %p43, %p44
      %p46 = scmp.ne.s32.totalorder %s38, %s41
      %p47 = scmp.eq.s32.totalorder %s28, 0
      %p48 = por %p46, %p47
      %p49 = scmp.ne.s32.totalorder %s38, %s41
      %p50 = scmp.eq.s32.totalorder %s33, 1
      %p51 = por %p49, %p50
      %p52 = scmp.ne.s32.totalorder %s41, %s42
      %p53 = scmp.eq.s32.totalorder %s33, 0
      %p54 = por %p52, %p53
      %p55 = scmp.ne.s32.totalorder %s41, %s42
      %p56 = scmp.eq.s32.totalorder %s34, 1
      %p57 = por %p55, %p56
      %p59 = scmp.ne.s32.totalorder %s42, %s58
      %p60 = scmp.eq.s32.totalorder %s34, 0
      %p61 = por %p59, %p60
      %s63 = sadd.s32 %s62, 1
      %p66 = scmp.eq.s32.totalorder %s28, 1
      %p67 = scmp.ne.s32.totalorder %s62, %s64
      %p68 = scmp.eq.s32.totalorder %s28, 0
      %p69 = por %p67, %p68
      %p70 = scmp.ne.s32.totalorder %s62, %s64
      %p71 = scmp.eq.s32.totalorder %s33, 1
      %p72 = por %p70, %p71
      %p73 = scmp.ne.s32.totalorder %s64, %s65
      %p74 = scmp.eq.s32.totalorder %s33, 0
      %p75 = por %p73, %p74
      %p76 = scmp.ne.s32.totalorder %s64, %s65
      %p77 = scmp.eq.s32.totalorder %s34, 1
      %p78 = por %p76, %p77
      %p80 = scmp.ne.s32.totalorder %s65, %s79
      %p81 = scmp.eq.s32.totalorder %s34, 0
      %p82 = por %p80, %p81
      %s84 = sadd.s32 %s83, 1
      %p87 = scmp.eq.s32.totalorder %s28, 1
      %p88 = scmp.ne.s32.totalorder %s83, %s85
      %p89 = scmp.eq.s32.totalorder %s28, 0
      %p90 = por %p88, %p89
      %p91 = scmp.ne.s32.totalorder %s83, %s85
      %p92 = scmp.eq.s32.totalorder %s33, 1
      %p93 = por %p91, %p92
      %p94 = scmp.ne.s32.totalorder %s85, %s86
      %p95 = scmp.eq.s32.totalorder %s33, 0
      %p96 = por %p94, %p95
      %p97 = scmp.ne.s32.totalorder %s85, %s86
      %p98 = scmp.eq.s32.totalorder %s34, 1
      %p99 = por %p97, %p98
      %p101 = scmp.ne.s32.totalorder %s86, %s100
      %p102 = scmp.eq.s32.totalorder %s34, 0
      %p103 = por %p101, %p102
      %s105 = sadd.s32 %s104, 1
      %p108 = scmp.eq.s32.totalorder %s28, 1
      %p109 = scmp.ne.s32.totalorder %s104, %s106
      %p110 = scmp.eq.s32.totalorder %s28, 0
      %p111 = por %p109, %p110
      %p112 = scmp.ne.s32.totalorder %s104, %s106
      %p113 = scmp.eq.s32.totalorder %s33, 1
      %p114 = por %p112, %p113
      %p115 = scmp.ne.s32.totalorder %s106, %s107
      %p116 = scmp.eq.s32.totalorder %s33, 0
      %p117 = por %p115, %p116
      %p118 = scmp.ne.s32.totalorder %s106, %s107
      %p119 = scmp.eq.s32.totalorder %s34, 1
      %p120 = por %p118, %p119
      %p122 = scmp.ne.s32.totalorder %s107, %s121
      %p123 = scmp.eq.s32.totalorder %s34, 0
      %p124 = por %p122, %p123
      %s126 = sadd.s32 %s125, 1
      %p129 = scmp.eq.s32.totalorder %s28, 1
      %p130 = scmp.ne.s32.totalorder %s125, %s127
      %p131 = scmp.eq.s32.totalorder %s28, 0
      %p132 = por %p130, %p131
      %p133 = scmp.ne.s32.totalorder %s125, %s127
      %p134 = scmp.eq.s32.totalorder %s33, 1
      %p135 = por %p133, %p134
      %p136 = scmp.ne.s32.totalorder %s127, %s128
      %p137 = scmp.eq.s32.totalorder %s33, 0
      %p138 = por %p136, %p137
      %p139 = scmp.ne.s32.totalorder %s127, %s128
      %p140 = scmp.eq.s32.totalorder %s34, 1
      %p141 = por %p139, %p140
      %p143 = scmp.ne.s32.totalorder %s128, %s142
      %p144 = scmp.eq.s32.totalorder %s34, 0
      %p145 = por %p143, %p144
      %s147 = sadd.s32 %s146, 1
      %p150 = scmp.eq.s32.totalorder %s28, 1
      %p151 = scmp.ne.s32.totalorder %s146, %s148
      %p152 = scmp.eq.s32.totalorder %s28, 0
      %p153 = por %p151, %p152
      %p154 = scmp.ne.s32.totalorder %s146, %s148
      %p155 = scmp.eq.s32.totalorder %s33, 1
      %p156 = por %p154, %p155
      %p157 = scmp.ne.s32.totalorder %s148, %s149
      %p158 = scmp.eq.s32.totalorder %s33, 0
      %p159 = por %p157, %p158
      %p160 = scmp.ne.s32.totalorder %s148, %s149
      %p161 = scmp.eq.s32.totalorder %s34, 1
      %p162 = por %p160, %p161
      %p164 = scmp.ne.s32.totalorder %s149, %s163
      %p165 = scmp.eq.s32.totalorder %s34, 0
      %p166 = por %p164, %p165
      %s168 = sadd.s32 %s167, 1
      %p171 = scmp.eq.s32.totalorder %s28, 1
      %p172 = scmp.ne.s32.totalorder %s167, %s169
      %p173 = scmp.eq.s32.totalorder %s28, 0
      %p174 = por %p172, %p173
      %p175 = scmp.ne.s32.totalorder %s167, %s169
      %p176 = scmp.eq.s32.totalorder %s33, 1
      %p177 = por %p175, %p176
      %p178 = scmp.ne.s32.totalorder %s169, %s170
      %p179 = scmp.eq.s32.totalorder %s33, 0
      %p180 = por %p178, %p179
      %p181 = scmp.ne.s32.totalorder %s169, %s170
      %p182 = scmp.eq.s32.totalorder %s34, 1
      %p183 = por %p181, %p182
      %p185 = scmp.ne.s32.totalorder %s170, %s184
      %p186 = scmp.eq.s32.totalorder %s34, 0
      %p187 = por %p185, %p186
      %s189 = sadd.s32 %s188, 1
      %p192 = scmp.eq.s32.totalorder %s28, 1
      %p193 = scmp.ne.s32.totalorder %s188, %s190
      %p194 = scmp.eq.s32.totalorder %s28, 0
      %p195 = por %p193, %p194
      %p196 = scmp.ne.s32.totalorder %s188, %s190
      %p197 = scmp.eq.s32.totalorder %s33, 1
      %p198 = por %p196, %p197
      %p199 = scmp.ne.s32.totalorder %s190, %s191
      %p200 = scmp.eq.s32.totalorder %s33, 0
      %p201 = por %p199, %p200
      %p202 = scmp.ne.s32.totalorder %s190, %s191
      %p203 = scmp.eq.s32.totalorder %s34, 1
      %p204 = por %p202, %p203
      %p206 = scmp.ne.s32.totalorder %s191, %s205
      %p207 = scmp.eq.s32.totalorder %s34, 0
      %p208 = por %p206, %p207
      %s210 = sadd.s32 %s209, 1
      %p213 = scmp.eq.s32.totalorder %s28, 1
      %p214 = scmp.ne.s32.totalorder %s209, %s211
      %p215 = scmp.eq.s32.totalorder %s28, 0
      %p216 = por %p214, %p215
      %p217 = scmp.ne.s32.totalorder %s209, %s211
      %p218 = scmp.eq.s32.totalorder %s33, 1
      %p219 = por %p217, %p218
      %p220 = scmp.ne.s32.totalorder %s211, %s212
      %p221 = scmp.eq.s32.totalorder %s33, 0
      %p222 = por %p220, %p221
      %p223 = scmp.ne.s32.totalorder %s211, %s212
      %p224 = scmp.eq.s32.totalorder %s34, 1
      %p225 = por %p223, %p224
      %p227 = scmp.ne.s32.totalorder %s212, %s226
      %p228 = scmp.eq.s32.totalorder %s34, 0
      %p229 = por %p227, %p228
      %s231 = sadd.s32 %s230, 1
      %p234 = scmp.eq.s32.totalorder %s28, 1
      %p235 = scmp.ne.s32.totalorder %s230, %s232
      %p236 = scmp.eq.s32.totalorder %s28, 0
      %p237 = por %p235, %p236
      %p238 = scmp.ne.s32.totalorder %s230, %s232
      %p239 = scmp.eq.s32.totalorder %s33, 1
      %p240 = por %p238, %p239
      %p241 = scmp.ne.s32.totalorder %s232, %s233
      %p242 = scmp.eq.s32.totalorder %s33, 0
      %p243 = por %p241, %p242
      %p244 = scmp.ne.s32.totalorder %s232, %s233
      %p245 = scmp.eq.s32.totalorder %s34, 1
      %p246 = por %p244, %p245
      %p248 = scmp.ne.s32.totalorder %s233, %s247
      %p249 = scmp.eq.s32.totalorder %s34, 0
      %p250 = por %p248, %p249
      %s252 = sadd.s32 %s251, 1
      %p255 = scmp.eq.s32.totalorder %s28, 1
      %p256 = scmp.ne.s32.totalorder %s251, %s253
      %p257 = scmp.eq.s32.totalorder %s28, 0
      %p258 = por %p256, %p257
      %p259 = scmp.ne.s32.totalorder %s251, %s253
      %p260 = scmp.eq.s32.totalorder %s33, 1
      %p261 = por %p259, %p260
      %p262 = scmp.ne.s32.totalorder %s253, %s254
      %p263 = scmp.eq.s32.totalorder %s33, 0
      %p264 = por %p262, %p263
      %p265 = scmp.ne.s32.totalorder %s253, %s254
      %p266 = scmp.eq.s32.totalorder %s34, 1
      %p267 = por %p265, %p266
      %p269 = scmp.ne.s32.totalorder %s254, %s268
      %p270 = scmp.eq.s32.totalorder %s34, 0
      %p271 = por %p269, %p270
      %s272 = ssub.s32 %s28, %s35
      %p273 = scmp.eq.s32.totalorder %s272, 0
      %s275 = sadd.s32 %s274, 1
      %s276 = scalar_select %p273, %s274, %s275
      %p279 = pneg %p273
      %p280 = scmp.eq.s32.totalorder %s28, 1
      %p281 = por %p279, %p280
      %p282 = scmp.ne.s32.totalorder %s274, %s277
      %p283 = scmp.eq.s32.totalorder %s28, 0
      %p284 = por %p282, %p283
      %p285 = scmp.ne.s32.totalorder %s274, %s277
      %p286 = scmp.eq.s32.totalorder %s33, 1
      %p287 = por %p285, %p286
      %p288 = scmp.ne.s32.totalorder %s277, %s278
      %p289 = scmp.eq.s32.totalorder %s33, 0
      %p290 = por %p288, %p289
      %p291 = scmp.ne.s32.totalorder %s277, %s278
      %p292 = scmp.eq.s32.totalorder %s34, 1
      %p293 = por %p291, %p292
      %p295 = scmp.ne.s32.totalorder %s278, %s294
      %p296 = scmp.eq.s32.totalorder %s34, 0
      %p297 = por %p295, %p296
      %p298 = scmp.le.s32.totalorder 1, %s28
      %p299 = scmp.lt.s32.totalorder %s28, 3
      %p300 = pnand %p298, %p299
      %p301 = pneg %p300
      // Predicated region
      $region9: #{tpu_custom_call.1} parent=5 // pred_check
        _
      $region10: #{tpu_custom_call.1} parent=5 // pred_check_branch
        %303 = sbr.rel (%p300) target = $region12
      $region11: #{tpu_custom_call.1} parent=5 // pred_region
        %s304 = ssub.s32 %s28, 1
        // Predicated region
        $region13: #{tpu_custom_call.1} parent=11 // pred_check
          %p305 = pneg %p75
        $region14: #{tpu_custom_call.1} parent=11 // pred_check_branch
          %307 = sbr.rel (%p305) target = $region16
        $region15: #{tpu_custom_call.1} parent=11 // pred_region
          %s309 = ssub.s32 98304, 98304
          %310 = vsyncadd [#allocation6], %s309
          %s311 = sshll.u32 [#allocation5], 4
          %s312 = int_to_ptr.vmem [resolvable:$true] %s311
          %317 = dma.hbm_to_vmem [thread:$0]  %s1, 98304, %s312, [#allocation6], 512, 512, 32
        $region16: #{tpu_custom_call.1} parent=11 // pred_fallthru
          _
        // Predicated region
        $region17: #{tpu_custom_call.1} parent=11 // pred_check
          %p318 = pneg %p96
        $region18: #{tpu_custom_call.1} parent=11 // pred_check_branch
          %320 = sbr.rel (%p318) target = $region20
        $region19: #{tpu_custom_call.1} parent=11 // pred_region
          %s322 = ssub.s32 64, 64
          %323 = vsyncadd [#allocation6], %s322
          %s325 = sshll.u32 [#allocation7], 4
          %s326 = int_to_ptr.vmem [resolvable:$true] %s325
          %328 = dma.hbm_to_vmem [thread:$0]  %s2, 64, %s326, [#allocation6]
        $region20: #{tpu_custom_call.1} parent=11 // pred_fallthru
          _
        // Predicated region
        $region21: #{tpu_custom_call.1} parent=11 // pred_check
          %p329 = pneg %p117
        $region22: #{tpu_custom_call.1} parent=11 // pred_check_branch
          %331 = sbr.rel (%p329) target = $region24
        $region23: #{tpu_custom_call.1} parent=11 // pred_region
          %s333 = ssub.s32 98304, 98304
          %334 = vsyncadd [#allocation9], %s333
          %s335 = sshll.u32 [#allocation8], 4
          %s336 = int_to_ptr.vmem [resolvable:$true] %s335
          %341 = dma.hbm_to_vmem [thread:$0]  %s3, 98304, %s336, [#allocation9], 512, 512, 32
        $region24: #{tpu_custom_call.1} parent=11 // pred_fallthru
          _
        // Predicated region
        $region25: #{tpu_custom_call.1} parent=11 // pred_check
          %p342 = pneg %p138
        $region26: #{tpu_custom_call.1} parent=11 // pred_check_branch
          %344 = sbr.rel (%p342) target = $region28
        $region27: #{tpu_custom_call.1} parent=11 // pred_region
          %s346 = ssub.s32 64, 64
          %347 = vsyncadd [#allocation9], %s346
          %s349 = sshll.u32 [#allocation10], 4
          %s350 = int_to_ptr.vmem [resolvable:$true] %s349
          %352 = dma.hbm_to_vmem [thread:$0]  %s4, 64, %s350, [#allocation9]
        $region28: #{tpu_custom_call.1} parent=11 // pred_fallthru
          _
        // Predicated region
        $region29: #{tpu_custom_call.1} parent=11 // pred_check
          %p353 = pneg %p159
        $region30: #{tpu_custom_call.1} parent=11 // pred_check_branch
          %355 = sbr.rel (%p353) target = $region32
        $region31: #{tpu_custom_call.1} parent=11 // pred_region
          %s357 = ssub.s32 256, 256
          %358 = vsyncadd [#allocation12], %s357
          %s359 = sshll.u32 [#allocation11], 4
          %s360 = int_to_ptr.vmem [resolvable:$true] %s359
          %365 = dma.hbm_to_vmem [thread:$0]  %s5, 256, %s360, [#allocation12], 128, 128, 8
        $region32: #{tpu_custom_call.1} parent=11 // pred_fallthru
          _
        // Predicated region
        $region33: #{tpu_custom_call.1} parent=11 // pred_check
          %p366 = pneg %p180
        $region34: #{tpu_custom_call.1} parent=11 // pred_check_branch
          %368 = sbr.rel (%p366) target = $region36
        $region35: #{tpu_custom_call.1} parent=11 // pred_region
          %s370 = ssub.s32 256, 256
          %371 = vsyncadd [#allocation12], %s370
          %s372 = sshll.u32 [#allocation13], 4
          %s373 = int_to_ptr.vmem [resolvable:$true] %s372
          %378 = dma.hbm_to_vmem [thread:$0]  %s6, 256, %s373, [#allocation12], 128, 128, 8
        $region36: #{tpu_custom_call.1} parent=11 // pred_fallthru
          _
        // Predicated region
        $region37: #{tpu_custom_call.1} parent=11 // pred_check
          %p379 = pneg %p201
        $region38: #{tpu_custom_call.1} parent=11 // pred_check_branch
          %381 = sbr.rel (%p379) target = $region40
        $region39: #{tpu_custom_call.1} parent=11 // pred_region
          _
        $region40: #{tpu_custom_call.1} parent=11 // pred_fallthru
          _
        // Predicated region
        $region41: #{tpu_custom_call.1} parent=11 // pred_check
          %p382 = pneg %p222
        $region42: #{tpu_custom_call.1} parent=11 // pred_check_branch
          %384 = sbr.rel (%p382) target = $region44
        $region43: #{tpu_custom_call.1} parent=11 // pred_region
          %s386 = ssub.s32 16, 16
          %387 = vsyncadd [#allocation15], %s386
          %s389 = sshll.u32 [#allocation14], 4
          %s390 = int_to_ptr.vmem [resolvable:$true] %s389
          %392 = dma.hbm_to_vmem [thread:$0]  %s8, 16, %s390, [#allocation15]
        $region44: #{tpu_custom_call.1} parent=11 // pred_fallthru
          _
        // Predicated region
        $region45: #{tpu_custom_call.1} parent=11 // pred_check
          %p393 = pneg %p243
        $region46: #{tpu_custom_call.1} parent=11 // pred_check_branch
          %395 = sbr.rel (%p393) target = $region48
        $region47: #{tpu_custom_call.1} parent=11 // pred_region
          %s397 = ssub.s32 256, 256
          %398 = vsyncadd [#allocation15], %s397
          %s400 = sshll.u32 [#allocation16], 4
          %s401 = int_to_ptr.vmem [resolvable:$true] %s400
          %403 = dma.hbm_to_vmem [thread:$0]  %s9, 256, %s401, [#allocation15]
        $region48: #{tpu_custom_call.1} parent=11 // pred_fallthru
          _
        // Predicated region
        $region49: #{tpu_custom_call.1} parent=11 // pred_check
          %p404 = pneg %p264
        $region50: #{tpu_custom_call.1} parent=11 // pred_check_branch
          %406 = sbr.rel (%p404) target = $region52
        $region51: #{tpu_custom_call.1} parent=11 // pred_region
          %s408 = ssub.s32 64, 64
          %409 = vsyncadd [#allocation18], %s408
          %s411 = sshll.u32 [#allocation17], 4
          %s412 = int_to_ptr.vmem [resolvable:$true] %s411
          %414 = dma.hbm_to_vmem [thread:$0]  %s10, 64, %s412, [#allocation18]
        $region52: #{tpu_custom_call.1} parent=11 // pred_fallthru
          _
      $region12: #{tpu_custom_call.1} parent=5 // pred_fallthru
        _
      %p415 = scmp.lt.s32.totalorder %s28, 2
      // Predicated region
      $region53: #{tpu_custom_call.1} parent=5 // pred_check
        %p416 = pneg %p415
      $region54: #{tpu_custom_call.1} parent=5 // pred_check_branch
        %418 = sbr.rel (%p416) target = $region56
      $region55: #{tpu_custom_call.1} parent=5 // pred_region
        // Predicated region
        $region57: #{tpu_custom_call.1} parent=55 // pred_check
          %p419 = pneg %p48
        $region58: #{tpu_custom_call.1} parent=55 // pred_check_branch
          %421 = sbr.rel (%p419) target = $region60
        $region59: #{tpu_custom_call.1} parent=55 // pred_region
          %s422 = sand.u32 %s38, 1
          %s423 = scalar_lea.sflag [#allocation3], %s422
          %s424 = sand.u32 %s38, 1
          %s425 = smul.addr %s424, 64
          %s426 = scalar_lea.vmem [#allocation2], %s425
          %s428 = ssub.s32 1024, 1024
          %429 = vsyncadd %s423, %s428
          %s430 = smul.addr %s28, 8
          %s431 = smul.addr %s430, 128
          %s432 = scalar_lea.hbm %s0, %s431
          %s433 = sshll.u32 %s426, 4
          %s434 = int_to_ptr.vmem [resolvable:$true] %s433
          %439 = dma.hbm_to_vmem [thread:$0]  %s432, 1024, %s434, %s423, 512, 512, 32
        $region60: #{tpu_custom_call.1} parent=55 // pred_fallthru
          _
      $region56: #{tpu_custom_call.1} parent=5 // pred_fallthru
        _
      %p440 = scmp.le.s32.totalorder 1, %s28
      %p441 = scmp.lt.s32.totalorder %s28, 3
      %p442 = pnand %p440, %p441
      %p443 = pneg %p442
      // Predicated region
      $region61: #{tpu_custom_call.1} parent=5 // pred_check
        _
      $region62: #{tpu_custom_call.1} parent=5 // pred_check_branch
        %445 = sbr.rel (%p442) target = $region64
      $region63: #{tpu_custom_call.1} parent=5 // pred_region
        %s446 = ssub.s32 %s28, 1
        %s447 = sand.u32 %s41, 1
        %s448 = scalar_lea.sflag [#allocation3], %s447
        %s449 = sand.u32 %s41, 1
        %s450 = smul.addr %s449, 64
        %s451 = scalar_lea.vmem [#allocation2], %s450
        // Predicated region
        $region65: #{tpu_custom_call.1} parent=63 // pred_check
          %p452 = pneg %p54
        $region66: #{tpu_custom_call.1} parent=63 // pred_check_branch
          %454 = sbr.rel (%p452) target = $region68
        $region67: #{tpu_custom_call.1} parent=63 // pred_region
          %455 = dma.done %s448, 1024
        $region68: #{tpu_custom_call.1} parent=63 // pred_fallthru
          _
        // Predicated region
        $region69: #{tpu_custom_call.1} parent=63 // pred_check
          %p456 = pneg %p75
        $region70: #{tpu_custom_call.1} parent=63 // pred_check_branch
          %458 = sbr.rel (%p456) target = $region72
        $region71: #{tpu_custom_call.1} parent=63 // pred_region
          %459 = dma.done [#allocation6], 98304
        $region72: #{tpu_custom_call.1} parent=63 // pred_fallthru
          _
        // Predicated region
        $region73: #{tpu_custom_call.1} parent=63 // pred_check
          %p460 = pneg %p96
        $region74: #{tpu_custom_call.1} parent=63 // pred_check_branch
          %462 = sbr.rel (%p460) target = $region76
        $region75: #{tpu_custom_call.1} parent=63 // pred_region
          %463 = dma.done [#allocation6], 64
        $region76: #{tpu_custom_call.1} parent=63 // pred_fallthru
          _
        // Predicated region
        $region77: #{tpu_custom_call.1} parent=63 // pred_check
          %p464 = pneg %p117
        $region78: #{tpu_custom_call.1} parent=63 // pred_check_branch
          %466 = sbr.rel (%p464) target = $region80
        $region79: #{tpu_custom_call.1} parent=63 // pred_region
          %467 = dma.done [#allocation9], 98304
        $region80: #{tpu_custom_call.1} parent=63 // pred_fallthru
          _
        // Predicated region
        $region81: #{tpu_custom_call.1} parent=63 // pred_check
          %p468 = pneg %p138
        $region82: #{tpu_custom_call.1} parent=63 // pred_check_branch
          %470 = sbr.rel (%p468) target = $region84
        $region83: #{tpu_custom_call.1} parent=63 // pred_region
          %471 = dma.done [#allocation9], 64
        $region84: #{tpu_custom_call.1} parent=63 // pred_fallthru
          _
        // Predicated region
        $region85: #{tpu_custom_call.1} parent=63 // pred_check
          %p472 = pneg %p159
        $region86: #{tpu_custom_call.1} parent=63 // pred_check_branch
          %474 = sbr.rel (%p472) target = $region88
        $region87: #{tpu_custom_call.1} parent=63 // pred_region
          %475 = dma.done [#allocation12], 256
        $region88: #{tpu_custom_call.1} parent=63 // pred_fallthru
          _
        // Predicated region
        $region89: #{tpu_custom_call.1} parent=63 // pred_check
          %p476 = pneg %p180
        $region90: #{tpu_custom_call.1} parent=63 // pred_check_branch
          %478 = sbr.rel (%p476) target = $region92
        $region91: #{tpu_custom_call.1} parent=63 // pred_region
          %479 = dma.done [#allocation12], 256
        $region92: #{tpu_custom_call.1} parent=63 // pred_fallthru
          _
        // Predicated region
        $region93: #{tpu_custom_call.1} parent=63 // pred_check
          %p480 = pneg %p222
        $region94: #{tpu_custom_call.1} parent=63 // pred_check_branch
          %482 = sbr.rel (%p480) target = $region96
        $region95: #{tpu_custom_call.1} parent=63 // pred_region
          %483 = dma.done [#allocation15], 16
        $region96: #{tpu_custom_call.1} parent=63 // pred_fallthru
          _
        // Predicated region
        $region97: #{tpu_custom_call.1} parent=63 // pred_check
          %p484 = pneg %p243
        $region98: #{tpu_custom_call.1} parent=63 // pred_check_branch
          %486 = sbr.rel (%p484) target = $region100
        $region99: #{tpu_custom_call.1} parent=63 // pred_region
          %487 = dma.done [#allocation15], 256
        $region100: #{tpu_custom_call.1} parent=63 // pred_fallthru
          _
        // Predicated region
        $region101: #{tpu_custom_call.1} parent=63 // pred_check
          %p488 = pneg %p264
        $region102: #{tpu_custom_call.1} parent=63 // pred_check_branch
          %490 = sbr.rel (%p488) target = $region104
        $region103: #{tpu_custom_call.1} parent=63 // pred_region
          %491 = dma.done [#allocation18], 64
        $region104: #{tpu_custom_call.1} parent=63 // pred_fallthru
          _
        %s492 = sand.u32 %s41, 1
        %s493 = scalar_lea.sflag [#allocation3], %s492
        %s494 = sand.u32 %s41, 1
        %s495 = smul.addr %s494, 64
        %s496 = scalar_lea.vmem [#allocation2], %s495
        %p497 = pneg %p54
        %p498 = pneg %p51
        %p499 = pneg %p75
        %p500 = pneg %p72
        %p501 = pneg %p96
        %p502 = pneg %p93
        %p503 = pneg %p117
        %p504 = pneg %p114
        %p505 = pneg %p138
        %p506 = pneg %p135
        %p507 = pneg %p159
        %p508 = pneg %p156
        %p509 = pneg %p180
        %p510 = pneg %p177
        %p511 = pneg %p201
        %p512 = pneg %p198
        %p513 = pneg %p222
        %p514 = pneg %p219
        %p515 = pneg %p243
        %p516 = pneg %p240
        %p517 = pneg %p264
        %p518 = pneg %p261
        %p519 = pneg %p290
        %p520 = pneg %p287
        %s521 = sand.u32 %s277, 1
        %s522 = scalar_lea.sflag [#allocation4], %s521
        %s523 = sand.u32 %s277, 1
        %s524 = smul.addr %s523, 64
        %s525 = scalar_lea.vmem [#allocation19], %s524
        %v526 = vld [vmem:[%s451] sm:$0xff]
        %v527 = vld [vmem:[%s451 + $0x8] sm:$0xff]
        %v528 = vld [vmem:[%s451 + $0x10] sm:$0xff]
        %v529 = vld [vmem:[%s451 + $0x18] sm:$0xff]
        %v530 = vld [vmem:[%s451 + $0x20] sm:$0xff]
        %v531 = vld [vmem:[%s451 + $0x28] sm:$0xff]
        %v532 = vld [vmem:[%s451 + $0x30] sm:$0xff]
        %v533 = vld [vmem:[%s451 + $0x38] sm:$0xff]
        %s534 = scalar_lea.vmem [#allocation5], 2048
        %v535 = vld [vmem:[%s534] sm:$0xff]
        %v536 = vld [vmem:[%s534 + $0x8] sm:$0xff]
        %v537 = vld [vmem:[%s534 + $0x10] sm:$0xff]
        %v538 = vld [vmem:[%s534 + $0x18] sm:$0xff]
        %v539 = vld [vmem:[%s534 + $0x20] sm:$0xff]
        %v540 = vld [vmem:[%s534 + $0x28] sm:$0xff]
        %v541 = vld [vmem:[%s534 + $0x30] sm:$0xff]
        %v542 = vld [vmem:[%s534 + $0x38] sm:$0xff]
        %v543 = vld [vmem:[%s534 + $0x40] sm:$0xff]
        %v544 = vld [vmem:[%s534 + $0x48] sm:$0xff]
        %v545 = vld [vmem:[%s534 + $0x50] sm:$0xff]
        %v546 = vld [vmem:[%s534 + $0x58] sm:$0xff]
        %v547 = vld [vmem:[%s534 + $0x60] sm:$0xff]
        %v548 = vld [vmem:[%s534 + $0x68] sm:$0xff]
        %v549 = vld [vmem:[%s534 + $0x70] sm:$0xff]
        %v550 = vld [vmem:[%s534 + $0x78] sm:$0xff]
        %v551 = vld [vmem:[%s534 + $0x80] sm:$0xff]
        %v552 = vld [vmem:[%s534 + $0x88] sm:$0xff]
        %v553 = vld [vmem:[%s534 + $0x90] sm:$0xff]
        %v554 = vld [vmem:[%s534 + $0x98] sm:$0xff]
        %v555 = vld [vmem:[%s534 + $0xa0] sm:$0xff]
        %v556 = vld [vmem:[%s534 + $0xa8] sm:$0xff]
        %v557 = vld [vmem:[%s534 + $0xb0] sm:$0xff]
        %v558 = vld [vmem:[%s534 + $0xb8] sm:$0xff]
        %v559 = vld [vmem:[%s534 + $0xc0] sm:$0xff]
        %v560 = vld [vmem:[%s534 + $0xc8] sm:$0xff]
        %v561 = vld [vmem:[%s534 + $0xd0] sm:$0xff]
        %v562 = vld [vmem:[%s534 + $0xd8] sm:$0xff]
        %v563 = vld [vmem:[%s534 + $0xe0] sm:$0xff]
        %v564 = vld [vmem:[%s534 + $0xe8] sm:$0xff]
        %v565 = vld [vmem:[%s534 + $0xf0] sm:$0xff]
        %v566 = vld [vmem:[%s534 + $0xf8] sm:$0xff]
        %v567 = vld [vmem:[%s534 + $0x100] sm:$0xff]
        %v568 = vld [vmem:[%s534 + $0x108] sm:$0xff]
        %v569 = vld [vmem:[%s534 + $0x110] sm:$0xff]
        %v570 = vld [vmem:[%s534 + $0x118] sm:$0xff]
        %v571 = vld [vmem:[%s534 + $0x120] sm:$0xff]
        %v572 = vld [vmem:[%s534 + $0x128] sm:$0xff]
        %v573 = vld [vmem:[%s534 + $0x130] sm:$0xff]
        %v574 = vld [vmem:[%s534 + $0x138] sm:$0xff]
        %v575 = vld [vmem:[%s534 + $0x140] sm:$0xff]
        %v576 = vld [vmem:[%s534 + $0x148] sm:$0xff]
        %v577 = vld [vmem:[%s534 + $0x150] sm:$0xff]
        %v578 = vld [vmem:[%s534 + $0x158] sm:$0xff]
        %v579 = vld [vmem:[%s534 + $0x160] sm:$0xff]
        %v580 = vld [vmem:[%s534 + $0x168] sm:$0xff]
        %v581 = vld [vmem:[%s534 + $0x170] sm:$0xff]
        %v582 = vld [vmem:[%s534 + $0x178] sm:$0xff]
        %v583 = vld [vmem:[%s534 + $0x180] sm:$0xff]
        %v584 = vld [vmem:[%s534 + $0x188] sm:$0xff]
        %v585 = vld [vmem:[%s534 + $0x190] sm:$0xff]
        %v586 = vld [vmem:[%s534 + $0x198] sm:$0xff]
        %v587 = vld [vmem:[%s534 + $0x1a0] sm:$0xff]
        %v588 = vld [vmem:[%s534 + $0x1a8] sm:$0xff]
        %v589 = vld [vmem:[%s534 + $0x1b0] sm:$0xff]
        %v590 = vld [vmem:[%s534 + $0x1b8] sm:$0xff]
        %v591 = vld [vmem:[%s534 + $0x1c0] sm:$0xff]
        %v592 = vld [vmem:[%s534 + $0x1c8] sm:$0xff]
        %v593 = vld [vmem:[%s534 + $0x1d0] sm:$0xff]
        %v594 = vld [vmem:[%s534 + $0x1d8] sm:$0xff]
        %v595 = vld [vmem:[%s534 + $0x1e0] sm:$0xff]
        %v596 = vld [vmem:[%s534 + $0x1e8] sm:$0xff]
        %v597 = vld [vmem:[%s534 + $0x1f0] sm:$0xff]
        %v598 = vld [vmem:[%s534 + $0x1f8] sm:$0xff]
        %v599 = vld [vmem:[%s534 + $0x200] sm:$0xff]
        %v600 = vld [vmem:[%s534 + $0x208] sm:$0xff]
        %v601 = vld [vmem:[%s534 + $0x210] sm:$0xff]
        %v602 = vld [vmem:[%s534 + $0x218] sm:$0xff]
        %v603 = vld [vmem:[%s534 + $0x220] sm:$0xff]
        %v604 = vld [vmem:[%s534 + $0x228] sm:$0xff]
        %v605 = vld [vmem:[%s534 + $0x230] sm:$0xff]
        %v606 = vld [vmem:[%s534 + $0x238] sm:$0xff]
        %v607 = vld [vmem:[%s534 + $0x240] sm:$0xff]
        %v608 = vld [vmem:[%s534 + $0x248] sm:$0xff]
        %v609 = vld [vmem:[%s534 + $0x250] sm:$0xff]
        %v610 = vld [vmem:[%s534 + $0x258] sm:$0xff]
        %v611 = vld [vmem:[%s534 + $0x260] sm:$0xff]
        %v612 = vld [vmem:[%s534 + $0x268] sm:$0xff]
        %v613 = vld [vmem:[%s534 + $0x270] sm:$0xff]
        %v614 = vld [vmem:[%s534 + $0x278] sm:$0xff]
        %v615 = vld [vmem:[%s534 + $0x280] sm:$0xff]
        %v616 = vld [vmem:[%s534 + $0x288] sm:$0xff]
        %v617 = vld [vmem:[%s534 + $0x290] sm:$0xff]
        %v618 = vld [vmem:[%s534 + $0x298] sm:$0xff]
        %v619 = vld [vmem:[%s534 + $0x2a0] sm:$0xff]
        %v620 = vld [vmem:[%s534 + $0x2a8] sm:$0xff]
        %v621 = vld [vmem:[%s534 + $0x2b0] sm:$0xff]
        %v622 = vld [vmem:[%s534 + $0x2b8] sm:$0xff]
        %v623 = vld [vmem:[%s534 + $0x2c0] sm:$0xff]
        %v624 = vld [vmem:[%s534 + $0x2c8] sm:$0xff]
        %v625 = vld [vmem:[%s534 + $0x2d0] sm:$0xff]
        %v626 = vld [vmem:[%s534 + $0x2d8] sm:$0xff]
        %v627 = vld [vmem:[%s534 + $0x2e0] sm:$0xff]
        %v628 = vld [vmem:[%s534 + $0x2e8] sm:$0xff]
        %v629 = vld [vmem:[%s534 + $0x2f0] sm:$0xff]
        %v630 = vld [vmem:[%s534 + $0x2f8] sm:$0xff]
        %v631 = vld [vmem:[%s534 + $0x300] sm:$0xff]
        %v632 = vld [vmem:[%s534 + $0x308] sm:$0xff]
        %v633 = vld [vmem:[%s534 + $0x310] sm:$0xff]
        %v634 = vld [vmem:[%s534 + $0x318] sm:$0xff]
        %v635 = vld [vmem:[%s534 + $0x320] sm:$0xff]
        %v636 = vld [vmem:[%s534 + $0x328] sm:$0xff]
        %v637 = vld [vmem:[%s534 + $0x330] sm:$0xff]
        %v638 = vld [vmem:[%s534 + $0x338] sm:$0xff]
        %v639 = vld [vmem:[%s534 + $0x340] sm:$0xff]
        %v640 = vld [vmem:[%s534 + $0x348] sm:$0xff]
        %v641 = vld [vmem:[%s534 + $0x350] sm:$0xff]
        %v642 = vld [vmem:[%s534 + $0x358] sm:$0xff]
        %v643 = vld [vmem:[%s534 + $0x360] sm:$0xff]
        %v644 = vld [vmem:[%s534 + $0x368] sm:$0xff]
        %v645 = vld [vmem:[%s534 + $0x370] sm:$0xff]
        %v646 = vld [vmem:[%s534 + $0x378] sm:$0xff]
        %v647 = vld [vmem:[%s534 + $0x380] sm:$0xff]
        %v648 = vld [vmem:[%s534 + $0x388] sm:$0xff]
        %v649 = vld [vmem:[%s534 + $0x390] sm:$0xff]
        %v650 = vld [vmem:[%s534 + $0x398] sm:$0xff]
        %v651 = vld [vmem:[%s534 + $0x3a0] sm:$0xff]
        %v652 = vld [vmem:[%s534 + $0x3a8] sm:$0xff]
        %v653 = vld [vmem:[%s534 + $0x3b0] sm:$0xff]
        %v654 = vld [vmem:[%s534 + $0x3b8] sm:$0xff]
        %v655 = vld [vmem:[%s534 + $0x3c0] sm:$0xff]
        %v656 = vld [vmem:[%s534 + $0x3c8] sm:$0xff]
        %v657 = vld [vmem:[%s534 + $0x3d0] sm:$0xff]
        %v658 = vld [vmem:[%s534 + $0x3d8] sm:$0xff]
        %v659 = vld [vmem:[%s534 + $0x3e0] sm:$0xff]
        %v660 = vld [vmem:[%s534 + $0x3e8] sm:$0xff]
        %v661 = vld [vmem:[%s534 + $0x3f0] sm:$0xff]
        %v662 = vld [vmem:[%s534 + $0x3f8] sm:$0xff]
        %v663 = vld [vmem:[%s534 + $0x400] sm:$0xff]
        %v664 = vld [vmem:[%s534 + $0x408] sm:$0xff]
        %v665 = vld [vmem:[%s534 + $0x410] sm:$0xff]
        %v666 = vld [vmem:[%s534 + $0x418] sm:$0xff]
        %v667 = vld [vmem:[%s534 + $0x420] sm:$0xff]
        %v668 = vld [vmem:[%s534 + $0x428] sm:$0xff]
        %v669 = vld [vmem:[%s534 + $0x430] sm:$0xff]
        %v670 = vld [vmem:[%s534 + $0x438] sm:$0xff]
        %v671 = vld [vmem:[%s534 + $0x440] sm:$0xff]
        %v672 = vld [vmem:[%s534 + $0x448] sm:$0xff]
        %v673 = vld [vmem:[%s534 + $0x450] sm:$0xff]
        %v674 = vld [vmem:[%s534 + $0x458] sm:$0xff]
        %v675 = vld [vmem:[%s534 + $0x460] sm:$0xff]
        %v676 = vld [vmem:[%s534 + $0x468] sm:$0xff]
        %v677 = vld [vmem:[%s534 + $0x470] sm:$0xff]
        %v678 = vld [vmem:[%s534 + $0x478] sm:$0xff]
        %v679 = vld [vmem:[%s534 + $0x480] sm:$0xff]
        %v680 = vld [vmem:[%s534 + $0x488] sm:$0xff]
        %v681 = vld [vmem:[%s534 + $0x490] sm:$0xff]
        %v682 = vld [vmem:[%s534 + $0x498] sm:$0xff]
        %v683 = vld [vmem:[%s534 + $0x4a0] sm:$0xff]
        %v684 = vld [vmem:[%s534 + $0x4a8] sm:$0xff]
        %v685 = vld [vmem:[%s534 + $0x4b0] sm:$0xff]
        %v686 = vld [vmem:[%s534 + $0x4b8] sm:$0xff]
        %v687 = vld [vmem:[%s534 + $0x4c0] sm:$0xff]
        %v688 = vld [vmem:[%s534 + $0x4c8] sm:$0xff]
        %v689 = vld [vmem:[%s534 + $0x4d0] sm:$0xff]
        %v690 = vld [vmem:[%s534 + $0x4d8] sm:$0xff]
        %v691 = vld [vmem:[%s534 + $0x4e0] sm:$0xff]
        %v692 = vld [vmem:[%s534 + $0x4e8] sm:$0xff]
        %v693 = vld [vmem:[%s534 + $0x4f0] sm:$0xff]
        %v694 = vld [vmem:[%s534 + $0x4f8] sm:$0xff]
        %v695 = vld [vmem:[%s534 + $0x500] sm:$0xff]
        %v696 = vld [vmem:[%s534 + $0x508] sm:$0xff]
        %v697 = vld [vmem:[%s534 + $0x510] sm:$0xff]
        %v698 = vld [vmem:[%s534 + $0x518] sm:$0xff]
        %v699 = vld [vmem:[%s534 + $0x520] sm:$0xff]
        %v700 = vld [vmem:[%s534 + $0x528] sm:$0xff]
        %v701 = vld [vmem:[%s534 + $0x530] sm:$0xff]
        %v702 = vld [vmem:[%s534 + $0x538] sm:$0xff]
        %v703 = vld [vmem:[%s534 + $0x540] sm:$0xff]
        %v704 = vld [vmem:[%s534 + $0x548] sm:$0xff]
        %v705 = vld [vmem:[%s534 + $0x550] sm:$0xff]
        %v706 = vld [vmem:[%s534 + $0x558] sm:$0xff]
        %v707 = vld [vmem:[%s534 + $0x560] sm:$0xff]
        %v708 = vld [vmem:[%s534 + $0x568] sm:$0xff]
        %v709 = vld [vmem:[%s534 + $0x570] sm:$0xff]
        %v710 = vld [vmem:[%s534 + $0x578] sm:$0xff]
        %v711 = vld [vmem:[%s534 + $0x580] sm:$0xff]
        %v712 = vld [vmem:[%s534 + $0x588] sm:$0xff]
        %v713 = vld [vmem:[%s534 + $0x590] sm:$0xff]
        %v714 = vld [vmem:[%s534 + $0x598] sm:$0xff]
        %v715 = vld [vmem:[%s534 + $0x5a0] sm:$0xff]
        %v716 = vld [vmem:[%s534 + $0x5a8] sm:$0xff]
        %v717 = vld [vmem:[%s534 + $0x5b0] sm:$0xff]
        %v718 = vld [vmem:[%s534 + $0x5b8] sm:$0xff]
        %v719 = vld [vmem:[%s534 + $0x5c0] sm:$0xff]
        %v720 = vld [vmem:[%s534 + $0x5c8] sm:$0xff]
        %v721 = vld [vmem:[%s534 + $0x5d0] sm:$0xff]
        %v722 = vld [vmem:[%s534 + $0x5d8] sm:$0xff]
        %v723 = vld [vmem:[%s534 + $0x5e0] sm:$0xff]
        %v724 = vld [vmem:[%s534 + $0x5e8] sm:$0xff]
        %v725 = vld [vmem:[%s534 + $0x5f0] sm:$0xff]
        %v726 = vld [vmem:[%s534 + $0x5f8] sm:$0xff]
        %v727 = vld [vmem:[%s534 + $0x600] sm:$0xff]
        %v728 = vld [vmem:[%s534 + $0x608] sm:$0xff]
        %v729 = vld [vmem:[%s534 + $0x610] sm:$0xff]
        %v730 = vld [vmem:[%s534 + $0x618] sm:$0xff]
        %v731 = vld [vmem:[%s534 + $0x620] sm:$0xff]
        %v732 = vld [vmem:[%s534 + $0x628] sm:$0xff]
        %v733 = vld [vmem:[%s534 + $0x630] sm:$0xff]
        %v734 = vld [vmem:[%s534 + $0x638] sm:$0xff]
        %v735 = vld [vmem:[%s534 + $0x640] sm:$0xff]
        %v736 = vld [vmem:[%s534 + $0x648] sm:$0xff]
        %v737 = vld [vmem:[%s534 + $0x650] sm:$0xff]
        %v738 = vld [vmem:[%s534 + $0x658] sm:$0xff]
        %v739 = vld [vmem:[%s534 + $0x660] sm:$0xff]
        %v740 = vld [vmem:[%s534 + $0x668] sm:$0xff]
        %v741 = vld [vmem:[%s534 + $0x670] sm:$0xff]
        %v742 = vld [vmem:[%s534 + $0x678] sm:$0xff]
        %v743 = vld [vmem:[%s534 + $0x680] sm:$0xff]
        %v744 = vld [vmem:[%s534 + $0x688] sm:$0xff]
        %v745 = vld [vmem:[%s534 + $0x690] sm:$0xff]
        %v746 = vld [vmem:[%s534 + $0x698] sm:$0xff]
        %v747 = vld [vmem:[%s534 + $0x6a0] sm:$0xff]
        %v748 = vld [vmem:[%s534 + $0x6a8] sm:$0xff]
        %v749 = vld [vmem:[%s534 + $0x6b0] sm:$0xff]
        %v750 = vld [vmem:[%s534 + $0x6b8] sm:$0xff]
        %v751 = vld [vmem:[%s534 + $0x6c0] sm:$0xff]
        %v752 = vld [vmem:[%s534 + $0x6c8] sm:$0xff]
        %v753 = vld [vmem:[%s534 + $0x6d0] sm:$0xff]
        %v754 = vld [vmem:[%s534 + $0x6d8] sm:$0xff]
        %v755 = vld [vmem:[%s534 + $0x6e0] sm:$0xff]
        %v756 = vld [vmem:[%s534 + $0x6e8] sm:$0xff]
        %v757 = vld [vmem:[%s534 + $0x6f0] sm:$0xff]
        %v758 = vld [vmem:[%s534 + $0x6f8] sm:$0xff]
        %v759 = vld [vmem:[%s534 + $0x700] sm:$0xff]
        %v760 = vld [vmem:[%s534 + $0x708] sm:$0xff]
        %v761 = vld [vmem:[%s534 + $0x710] sm:$0xff]
        %v762 = vld [vmem:[%s534 + $0x718] sm:$0xff]
        %v763 = vld [vmem:[%s534 + $0x720] sm:$0xff]
        %v764 = vld [vmem:[%s534 + $0x728] sm:$0xff]
        %v765 = vld [vmem:[%s534 + $0x730] sm:$0xff]
        %v766 = vld [vmem:[%s534 + $0x738] sm:$0xff]
        %v767 = vld [vmem:[%s534 + $0x740] sm:$0xff]
        %v768 = vld [vmem:[%s534 + $0x748] sm:$0xff]
        %v769 = vld [vmem:[%s534 + $0x750] sm:$0xff]
        %v770 = vld [vmem:[%s534 + $0x758] sm:$0xff]
        %v771 = vld [vmem:[%s534 + $0x760] sm:$0xff]
        %v772 = vld [vmem:[%s534 + $0x768] sm:$0xff]
        %v773 = vld [vmem:[%s534 + $0x770] sm:$0xff]
        %v774 = vld [vmem:[%s534 + $0x778] sm:$0xff]
        %v775 = vld [vmem:[%s534 + $0x780] sm:$0xff]
        %v776 = vld [vmem:[%s534 + $0x788] sm:$0xff]
        %v777 = vld [vmem:[%s534 + $0x790] sm:$0xff]
        %v778 = vld [vmem:[%s534 + $0x798] sm:$0xff]
        %v779 = vld [vmem:[%s534 + $0x7a0] sm:$0xff]
        %v780 = vld [vmem:[%s534 + $0x7a8] sm:$0xff]
        %v781 = vld [vmem:[%s534 + $0x7b0] sm:$0xff]
        %v782 = vld [vmem:[%s534 + $0x7b8] sm:$0xff]
        %v783 = vld [vmem:[%s534 + $0x7c0] sm:$0xff]
        %v784 = vld [vmem:[%s534 + $0x7c8] sm:$0xff]
        %v785 = vld [vmem:[%s534 + $0x7d0] sm:$0xff]
        %v786 = vld [vmem:[%s534 + $0x7d8] sm:$0xff]
        %v787 = vld [vmem:[%s534 + $0x7e0] sm:$0xff]
        %v788 = vld [vmem:[%s534 + $0x7e8] sm:$0xff]
        %v789 = vld [vmem:[%s534 + $0x7f0] sm:$0xff]
        %v790 = vld [vmem:[%s534 + $0x7f8] sm:$0xff]
        %v791 = vld [vmem:[#allocation11] sm:$0xff]
        %v792 = vld [vmem:[#allocation11 + $0x8] sm:$0xff]
        %vm793 = vcmask 130048
        %v795 = vsel %vm793, %v791, 0
        %v798 = vsel %vm793, %v792, 0
        %800 = vmatprep.subr.mxu0 %v527
        %801 = vmatpush1.msra.mxu0 %v526
        %802 = vmatprep.subr.mxu0 %v531
        %803 = vmatpush1.msra.mxu0 %v530
        %804 = vmatprep.subr.mxu0 0.0
        %805 = vmatpush1.msra.mxu0 0.0
        %806 = vmatprep.subr.mxu0 0.0
        %807 = vmatpush1.msra.mxu0 0.0
        %808 = vmatprep.subr.mxu0 0.0
        %809 = vmatpush1.msra.mxu0 0.0
        %810 = vmatprep.subr.mxu0 0.0
        %811 = vmatpush1.msra.mxu0 0.0
        %812 = vmatprep.subr.mxu0 0.0
        %813 = vmatpush1.msra.mxu0 0.0
        %814 = vmatprep.subr.mxu0 0.0
        %815 = vmatpush1.msra.mxu0 0.0
        %816 = vmatprep.subr.mxu0 0.0
        %817 = vmatpush1.msra.mxu0 0.0
        %818 = vmatprep.subr.mxu0 0.0
        %819 = vmatpush1.msra.mxu0 0.0
        %820 = vmatprep.subr.mxu0 0.0
        %821 = vmatpush1.msra.mxu0 0.0
        %822 = vmatprep.subr.mxu0 0.0
        %823 = vmatpush1.msra.mxu0 0.0
        %824 = vmatprep.subr.mxu0 0.0
        %825 = vmatpush1.msra.mxu0 0.0
        %826 = vmatprep.subr.mxu0 0.0
        %827 = vmatpush1.msra.mxu0 0.0
        %828 = vmatprep.subr.mxu0 0.0
        %829 = vmatpush1.msra.mxu0 0.0
        %830 = vmatprep.subr.mxu0 0.0
        %831 = vmatpush1.msra.mxu0 0.0
        %832 = vmatprep.subr.mxu0 0.0
        %833 = vmatpush1.msra.mxu0 0.0
        %834 = vmatprep.subr.mxu0 0.0
        %835 = vmatpush1.msra.mxu0 0.0
        %836 = vmatprep.subr.mxu0 0.0
        %837 = vmatpush1.msra.mxu0 0.0
        %838 = vmatprep.subr.mxu0 0.0
        %839 = vmatpush1.msra.mxu0 0.0
        %840 = vmatprep.subr.mxu0 0.0
        %841 = vmatpush1.msra.mxu0 0.0
        %842 = vmatprep.subr.mxu0 0.0
        %843 = vmatpush1.msra.mxu0 0.0
        %844 = vmatprep.subr.mxu0 0.0
        %845 = vmatpush1.msra.mxu0 0.0
        %846 = vmatprep.subr.mxu0 0.0
        %847 = vmatpush1.msra.mxu0 0.0
        %848 = vmatprep.subr.mxu0 0.0
        %849 = vmatpush1.msra.mxu0 0.0
        %850 = vmatprep.subr.mxu0 0.0
        %851 = vmatpush1.msra.mxu0 0.0
        %852 = vmatprep.subr.mxu0 0.0
        %853 = vmatpush1.msra.mxu0 0.0
        %854 = vmatprep.subr.mxu0 0.0
        %855 = vmatpush1.msra.mxu0 0.0
        %856 = vmatprep.subr.mxu0 0.0
        %857 = vmatpush1.msra.mxu0 0.0
        %858 = vmatprep.subr.mxu0 0.0
        %859 = vmatpush1.msra.mxu0 0.0
        %860 = vmatprep.subr.mxu0 0.0
        %861 = vmatpush1.msra.mxu0 0.0
        %862 = vmatprep.subr.mxu0 0.0
        %863 = vmatpush1.msra.mxu0 0.0
        %864 = vmatprep.mubr.f32.mxu0 0.0
        %865 = vmatmul.mubr.f32.gmra.mrb[0].mxu0 %v795
        %v866 = vpop.f32.mrb[0].mxu0
        %v867 = vadd.f32 0.0, %v866
        %v868 = vpop.f32.mrb[0].mxu0
        %v869 = vadd.f32 0.0, %v868
        %870 = vmatprep.mubr.f32.mxu0 0.0
        %871 = vmatmul.mubr.f32.gmra.mrb[0].mxu0 %v798
        %v872 = vpop.f32.mrb[0].mxu0
        %v873 = vadd.f32 0.0, %v872
        %v874 = vpop.f32.mrb[0].mxu0
        %v875 = vadd.f32 0.0, %v874
        %876 = vdwg.mxu0
        %877 = vmatprep.subr.mxu0 %v529
        %878 = vmatpush1.msra.mxu0 %v528
        %879 = vmatprep.subr.mxu0 %v533
        %880 = vmatpush1.msra.mxu0 %v532
        %881 = vmatprep.subr.mxu0 0.0
        %882 = vmatpush1.msra.mxu0 0.0
        %883 = vmatprep.subr.mxu0 0.0
        %884 = vmatpush1.msra.mxu0 0.0
        %885 = vmatprep.subr.mxu0 0.0
        %886 = vmatpush1.msra.mxu0 0.0
        %887 = vmatprep.subr.mxu0 0.0
        %888 = vmatpush1.msra.mxu0 0.0
        %889 = vmatprep.subr.mxu0 0.0
        %890 = vmatpush1.msra.mxu0 0.0
        %891 = vmatprep.subr.mxu0 0.0
        %892 = vmatpush1.msra.mxu0 0.0
        %893 = vmatprep.subr.mxu0 0.0
        %894 = vmatpush1.msra.mxu0 0.0
        %895 = vmatprep.subr.mxu0 0.0
        %896 = vmatpush1.msra.mxu0 0.0
        %897 = vmatprep.subr.mxu0 0.0
        %898 = vmatpush1.msra.mxu0 0.0
        %899 = vmatprep.subr.mxu0 0.0
        %900 = vmatpush1.msra.mxu0 0.0
        %901 = vmatprep.subr.mxu0 0.0
        %902 = vmatpush1.msra.mxu0 0.0
        %903 = vmatprep.subr.mxu0 0.0
        %904 = vmatpush1.msra.mxu0 0.0
        %905 = vmatprep.subr.mxu0 0.0
        %906 = vmatpush1.msra.mxu0 0.0
        %907 = vmatprep.subr.mxu0 0.0
        %908 = vmatpush1.msra.mxu0 0.0
        %909 = vmatprep.subr.mxu0 0.0
        %910 = vmatpush1.msra.mxu0 0.0
        %911 = vmatprep.subr.mxu0 0.0
        %912 = vmatpush1.msra.mxu0 0.0
        %913 = vmatprep.subr.mxu0 0.0
        %914 = vmatpush1.msra.mxu0 0.0
        %915 = vmatprep.subr.mxu0 0.0
        %916 = vmatpush1.msra.mxu0 0.0
        %917 = vmatprep.subr.mxu0 0.0
        %918 = vmatpush1.msra.mxu0 0.0
        %919 = vmatprep.subr.mxu0 0.0
        %920 = vmatpush1.msra.mxu0 0.0
        %921 = vmatprep.subr.mxu0 0.0
        %922 = vmatpush1.msra.mxu0 0.0
        %923 = vmatprep.subr.mxu0 0.0
        %924 = vmatpush1.msra.mxu0 0.0
        %925 = vmatprep.subr.mxu0 0.0
        %926 = vmatpush1.msra.mxu0 0.0
        %927 = vmatprep.subr.mxu0 0.0
        %928 = vmatpush1.msra.mxu0 0.0
        %929 = vmatprep.subr.mxu0 0.0
        %930 = vmatpush1.msra.mxu0 0.0
        %931 = vmatprep.subr.mxu0 0.0
        %932 = vmatpush1.msra.mxu0 0.0
        %933 = vmatprep.subr.mxu0 0.0
        %934 = vmatpush1.msra.mxu0 0.0
        %935 = vmatprep.subr.mxu0 0.0
        %936 = vmatpush1.msra.mxu0 0.0
        %937 = vmatprep.subr.mxu0 0.0
        %938 = vmatpush1.msra.mxu0 0.0
        %939 = vmatprep.subr.mxu0 0.0
        %940 = vmatpush1.msra.mxu0 0.0
        %941 = vmatprep.mubr.f32.mxu0 0.0
        %942 = vmatmul.mubr.f32.gmra.mrb[0].mxu0 %v795
        %v943 = vpop.f32.mrb[0].mxu0
        %v944 = vadd.f32 0.0, %v943
        %v945 = vpop.f32.mrb[0].mxu0
        %v946 = vadd.f32 0.0, %v945
        %947 = vmatprep.mubr.f32.mxu0 0.0
        %948 = vmatmul.mubr.f32.gmra.mrb[0].mxu0 %v798
        %v949 = vpop.f32.mrb[0].mxu0
        %v950 = vadd.f32 0.0, %v949
        %v951 = vpop.f32.mrb[0].mxu0
        %v952 = vadd.f32 0.0, %v951
        %953 = vdwg.mxu0
        %v954 = vld [vmem:[#allocation5] sm:$0xff]
        %v955 = vld [vmem:[#allocation5 + $0x8] sm:$0xff]
        %v956 = vld [vmem:[#allocation5 + $0x10] sm:$0xff]
        %v957 = vld [vmem:[#allocation5 + $0x18] sm:$0xff]
        %v958 = vld [vmem:[#allocation5 + $0x20] sm:$0xff]
        %v959 = vld [vmem:[#allocation5 + $0x28] sm:$0xff]
        %v960 = vld [vmem:[#allocation5 + $0x30] sm:$0xff]
        %v961 = vld [vmem:[#allocation5 + $0x38] sm:$0xff]
        %v962 = vld [vmem:[#allocation5 + $0x40] sm:$0xff]
        %v963 = vld [vmem:[#allocation5 + $0x48] sm:$0xff]
        %v964 = vld [vmem:[#allocation5 + $0x50] sm:$0xff]
        %v965 = vld [vmem:[#allocation5 + $0x58] sm:$0xff]
        %v966 = vld [vmem:[#allocation5 + $0x60] sm:$0xff]
        %v967 = vld [vmem:[#allocation5 + $0x68] sm:$0xff]
        %v968 = vld [vmem:[#allocation5 + $0x70] sm:$0xff]
        %v969 = vld [vmem:[#allocation5 + $0x78] sm:$0xff]
        %v970 = vld [vmem:[#allocation5 + $0x80] sm:$0xff]
        %v971 = vld [vmem:[#allocation5 + $0x88] sm:$0xff]
        %v972 = vld [vmem:[#allocation5 + $0x90] sm:$0xff]
        %v973 = vld [vmem:[#allocation5 + $0x98] sm:$0xff]
        %v974 = vld [vmem:[#allocation5 + $0xa0] sm:$0xff]
        %v975 = vld [vmem:[#allocation5 + $0xa8] sm:$0xff]
        %v976 = vld [vmem:[#allocation5 + $0xb0] sm:$0xff]
        %v977 = vld [vmem:[#allocation5 + $0xb8] sm:$0xff]
        %v978 = vld [vmem:[#allocation5 + $0xc0] sm:$0xff]
        %v979 = vld [vmem:[#allocation5 + $0xc8] sm:$0xff]
        %v980 = vld [vmem:[#allocation5 + $0xd0] sm:$0xff]
        %v981 = vld [vmem:[#allocation5 + $0xd8] sm:$0xff]
        %v982 = vld [vmem:[#allocation5 + $0xe0] sm:$0xff]
        %v983 = vld [vmem:[#allocation5 + $0xe8] sm:$0xff]
        %v984 = vld [vmem:[#allocation5 + $0xf0] sm:$0xff]
        %v985 = vld [vmem:[#allocation5 + $0xf8] sm:$0xff]
        %v986 = vld [vmem:[#allocation5 + $0x100] sm:$0xff]
        %v987 = vld [vmem:[#allocation5 + $0x108] sm:$0xff]
        %v988 = vld [vmem:[#allocation5 + $0x110] sm:$0xff]
        %v989 = vld [vmem:[#allocation5 + $0x118] sm:$0xff]
        %v990 = vld [vmem:[#allocation5 + $0x120] sm:$0xff]
        %v991 = vld [vmem:[#allocation5 + $0x128] sm:$0xff]
        %v992 = vld [vmem:[#allocation5 + $0x130] sm:$0xff]
        %v993 = vld [vmem:[#allocation5 + $0x138] sm:$0xff]
        %v994 = vld [vmem:[#allocation5 + $0x140] sm:$0xff]
        %v995 = vld [vmem:[#allocation5 + $0x148] sm:$0xff]
        %v996 = vld [vmem:[#allocation5 + $0x150] sm:$0xff]
        %v997 = vld [vmem:[#allocation5 + $0x158] sm:$0xff]
        %v998 = vld [vmem:[#allocation5 + $0x160] sm:$0xff]
        %v999 = vld [vmem:[#allocation5 + $0x168] sm:$0xff]
        %v1000 = vld [vmem:[#allocation5 + $0x170] sm:$0xff]
        %v1001 = vld [vmem:[#allocation5 + $0x178] sm:$0xff]
        %v1002 = vld [vmem:[#allocation5 + $0x180] sm:$0xff]
        %v1003 = vld [vmem:[#allocation5 + $0x188] sm:$0xff]
        %v1004 = vld [vmem:[#allocation5 + $0x190] sm:$0xff]
        %v1005 = vld [vmem:[#allocation5 + $0x198] sm:$0xff]
        %v1006 = vld [vmem:[#allocation5 + $0x1a0] sm:$0xff]
        %v1007 = vld [vmem:[#allocation5 + $0x1a8] sm:$0xff]
        %v1008 = vld [vmem:[#allocation5 + $0x1b0] sm:$0xff]
        %v1009 = vld [vmem:[#allocation5 + $0x1b8] sm:$0xff]
        %v1010 = vld [vmem:[#allocation5 + $0x1c0] sm:$0xff]
        %v1011 = vld [vmem:[#allocation5 + $0x1c8] sm:$0xff]
        %v1012 = vld [vmem:[#allocation5 + $0x1d0] sm:$0xff]
        %v1013 = vld [vmem:[#allocation5 + $0x1d8] sm:$0xff]
        %v1014 = vld [vmem:[#allocation5 + $0x1e0] sm:$0xff]
        %v1015 = vld [vmem:[#allocation5 + $0x1e8] sm:$0xff]
        %v1016 = vld [vmem:[#allocation5 + $0x1f0] sm:$0xff]
        %v1017 = vld [vmem:[#allocation5 + $0x1f8] sm:$0xff]
        %v1018 = vld [vmem:[#allocation5 + $0x200] sm:$0xff]
        %v1019 = vld [vmem:[#allocation5 + $0x208] sm:$0xff]
        %v1020 = vld [vmem:[#allocation5 + $0x210] sm:$0xff]
        %v1021 = vld [vmem:[#allocation5 + $0x218] sm:$0xff]
        %v1022 = vld [vmem:[#allocation5 + $0x220] sm:$0xff]
        %v1023 = vld [vmem:[#allocation5 + $0x228] sm:$0xff]
        %v1024 = vld [vmem:[#allocation5 + $0x230] sm:$0xff]
        %v1025 = vld [vmem:[#allocation5 + $0x238] sm:$0xff]
        %v1026 = vld [vmem:[#allocation5 + $0x240] sm:$0xff]
        %v1027 = vld [vmem:[#allocation5 + $0x248] sm:$0xff]
        %v1028 = vld [vmem:[#allocation5 + $0x250] sm:$0xff]
        %v1029 = vld [vmem:[#allocation5 + $0x258] sm:$0xff]
        %v1030 = vld [vmem:[#allocation5 + $0x260] sm:$0xff]
        %v1031 = vld [vmem:[#allocation5 + $0x268] sm:$0xff]
        %v1032 = vld [vmem:[#allocation5 + $0x270] sm:$0xff]
        %v1033 = vld [vmem:[#allocation5 + $0x278] sm:$0xff]
        %v1034 = vld [vmem:[#allocation5 + $0x280] sm:$0xff]
        %v1035 = vld [vmem:[#allocation5 + $0x288] sm:$0xff]
        %v1036 = vld [vmem:[#allocation5 + $0x290] sm:$0xff]
        %v1037 = vld [vmem:[#allocation5 + $0x298] sm:$0xff]
        %v1038 = vld [vmem:[#allocation5 + $0x2a0] sm:$0xff]
        %v1039 = vld [vmem:[#allocation5 + $0x2a8] sm:$0xff]
        %v1040 = vld [vmem:[#allocation5 + $0x2b0] sm:$0xff]
        %v1041 = vld [vmem:[#allocation5 + $0x2b8] sm:$0xff]
        %v1042 = vld [vmem:[#allocation5 + $0x2c0] sm:$0xff]
        %v1043 = vld [vmem:[#allocation5 + $0x2c8] sm:$0xff]
        %v1044 = vld [vmem:[#allocation5 + $0x2d0] sm:$0xff]
        %v1045 = vld [vmem:[#allocation5 + $0x2d8] sm:$0xff]
        %v1046 = vld [vmem:[#allocation5 + $0x2e0] sm:$0xff]
        %v1047 = vld [vmem:[#allocation5 + $0x2e8] sm:$0xff]
        %v1048 = vld [vmem:[#allocation5 + $0x2f0] sm:$0xff]
        %v1049 = vld [vmem:[#allocation5 + $0x2f8] sm:$0xff]
        %v1050 = vld [vmem:[#allocation5 + $0x300] sm:$0xff]
        %v1051 = vld [vmem:[#allocation5 + $0x308] sm:$0xff]
        %v1052 = vld [vmem:[#allocation5 + $0x310] sm:$0xff]
        %v1053 = vld [vmem:[#allocation5 + $0x318] sm:$0xff]
        %v1054 = vld [vmem:[#allocation5 + $0x320] sm:$0xff]
        %v1055 = vld [vmem:[#allocation5 + $0x328] sm:$0xff]
        %v1056 = vld [vmem:[#allocation5 + $0x330] sm:$0xff]
        %v1057 = vld [vmem:[#allocation5 + $0x338] sm:$0xff]
        %v1058 = vld [vmem:[#allocation5 + $0x340] sm:$0xff]
        %v1059 = vld [vmem:[#allocation5 + $0x348] sm:$0xff]
        %v1060 = vld [vmem:[#allocation5 + $0x350] sm:$0xff]
        %v1061 = vld [vmem:[#allocation5 + $0x358] sm:$0xff]
        %v1062 = vld [vmem:[#allocation5 + $0x360] sm:$0xff]
        %v1063 = vld [vmem:[#allocation5 + $0x368] sm:$0xff]
        %v1064 = vld [vmem:[#allocation5 + $0x370] sm:$0xff]
        %v1065 = vld [vmem:[#allocation5 + $0x378] sm:$0xff]
        %v1066 = vld [vmem:[#allocation5 + $0x380] sm:$0xff]
        %v1067 = vld [vmem:[#allocation5 + $0x388] sm:$0xff]
        %v1068 = vld [vmem:[#allocation5 + $0x390] sm:$0xff]
        %v1069 = vld [vmem:[#allocation5 + $0x398] sm:$0xff]
        %v1070 = vld [vmem:[#allocation5 + $0x3a0] sm:$0xff]
        %v1071 = vld [vmem:[#allocation5 + $0x3a8] sm:$0xff]
        %v1072 = vld [vmem:[#allocation5 + $0x3b0] sm:$0xff]
        %v1073 = vld [vmem:[#allocation5 + $0x3b8] sm:$0xff]
        %v1074 = vld [vmem:[#allocation5 + $0x3c0] sm:$0xff]
        %v1075 = vld [vmem:[#allocation5 + $0x3c8] sm:$0xff]
        %v1076 = vld [vmem:[#allocation5 + $0x3d0] sm:$0xff]
        %v1077 = vld [vmem:[#allocation5 + $0x3d8] sm:$0xff]
        %v1078 = vld [vmem:[#allocation5 + $0x3e0] sm:$0xff]
        %v1079 = vld [vmem:[#allocation5 + $0x3e8] sm:$0xff]
        %v1080 = vld [vmem:[#allocation5 + $0x3f0] sm:$0xff]
        %v1081 = vld [vmem:[#allocation5 + $0x3f8] sm:$0xff]
        %v1082 = vld [vmem:[#allocation5 + $0x400] sm:$0xff]
        %v1083 = vld [vmem:[#allocation5 + $0x408] sm:$0xff]
        %v1084 = vld [vmem:[#allocation5 + $0x410] sm:$0xff]
        %v1085 = vld [vmem:[#allocation5 + $0x418] sm:$0xff]
        %v1086 = vld [vmem:[#allocation5 + $0x420] sm:$0xff]
        %v1087 = vld [vmem:[#allocation5 + $0x428] sm:$0xff]
        %v1088 = vld [vmem:[#allocation5 + $0x430] sm:$0xff]
        %v1089 = vld [vmem:[#allocation5 + $0x438] sm:$0xff]
        %v1090 = vld [vmem:[#allocation5 + $0x440] sm:$0xff]
        %v1091 = vld [vmem:[#allocation5 + $0x448] sm:$0xff]
        %v1092 = vld [vmem:[#allocation5 + $0x450] sm:$0xff]
        %v1093 = vld [vmem:[#allocation5 + $0x458] sm:$0xff]
        %v1094 = vld [vmem:[#allocation5 + $0x460] sm:$0xff]
        %v1095 = vld [vmem:[#allocation5 + $0x468] sm:$0xff]
        %v1096 = vld [vmem:[#allocation5 + $0x470] sm:$0xff]
        %v1097 = vld [vmem:[#allocation5 + $0x478] sm:$0xff]
        %v1098 = vld [vmem:[#allocation5 + $0x480] sm:$0xff]
        %v1099 = vld [vmem:[#allocation5 + $0x488] sm:$0xff]
        %v1100 = vld [vmem:[#allocation5 + $0x490] sm:$0xff]
        %v1101 = vld [vmem:[#allocation5 + $0x498] sm:$0xff]
        %v1102 = vld [vmem:[#allocation5 + $0x4a0] sm:$0xff]
        %v1103 = vld [vmem:[#allocation5 + $0x4a8] sm:$0xff]
        %v1104 = vld [vmem:[#allocation5 + $0x4b0] sm:$0xff]
        %v1105 = vld [vmem:[#allocation5 + $0x4b8] sm:$0xff]
        %v1106 = vld [vmem:[#allocation5 + $0x4c0] sm:$0xff]
        %v1107 = vld [vmem:[#allocation5 + $0x4c8] sm:$0xff]
        %v1108 = vld [vmem:[#allocation5 + $0x4d0] sm:$0xff]
        %v1109 = vld [vmem:[#allocation5 + $0x4d8] sm:$0xff]
        %v1110 = vld [vmem:[#allocation5 + $0x4e0] sm:$0xff]
        %v1111 = vld [vmem:[#allocation5 + $0x4e8] sm:$0xff]
        %v1112 = vld [vmem:[#allocation5 + $0x4f0] sm:$0xff]
        %v1113 = vld [vmem:[#allocation5 + $0x4f8] sm:$0xff]
        %v1114 = vld [vmem:[#allocation5 + $0x500] sm:$0xff]
        %v1115 = vld [vmem:[#allocation5 + $0x508] sm:$0xff]
        %v1116 = vld [vmem:[#allocation5 + $0x510] sm:$0xff]
        %v1117 = vld [vmem:[#allocation5 + $0x518] sm:$0xff]
        %v1118 = vld [vmem:[#allocation5 + $0x520] sm:$0xff]
        %v1119 = vld [vmem:[#allocation5 + $0x528] sm:$0xff]
        %v1120 = vld [vmem:[#allocation5 + $0x530] sm:$0xff]
        %v1121 = vld [vmem:[#allocation5 + $0x538] sm:$0xff]
        %v1122 = vld [vmem:[#allocation5 + $0x540] sm:$0xff]
        %v1123 = vld [vmem:[#allocation5 + $0x548] sm:$0xff]
        %v1124 = vld [vmem:[#allocation5 + $0x550] sm:$0xff]
        %v1125 = vld [vmem:[#allocation5 + $0x558] sm:$0xff]
        %v1126 = vld [vmem:[#allocation5 + $0x560] sm:$0xff]
        %v1127 = vld [vmem:[#allocation5 + $0x568] sm:$0xff]
        %v1128 = vld [vmem:[#allocation5 + $0x570] sm:$0xff]
        %v1129 = vld [vmem:[#allocation5 + $0x578] sm:$0xff]
        %v1130 = vld [vmem:[#allocation5 + $0x580] sm:$0xff]
        %v1131 = vld [vmem:[#allocation5 + $0x588] sm:$0xff]
        %v1132 = vld [vmem:[#allocation5 + $0x590] sm:$0xff]
        %v1133 = vld [vmem:[#allocation5 + $0x598] sm:$0xff]
        %v1134 = vld [vmem:[#allocation5 + $0x5a0] sm:$0xff]
        %v1135 = vld [vmem:[#allocation5 + $0x5a8] sm:$0xff]
        %v1136 = vld [vmem:[#allocation5 + $0x5b0] sm:$0xff]
        %v1137 = vld [vmem:[#allocation5 + $0x5b8] sm:$0xff]
        %v1138 = vld [vmem:[#allocation5 + $0x5c0] sm:$0xff]
        %v1139 = vld [vmem:[#allocation5 + $0x5c8] sm:$0xff]
        %v1140 = vld [vmem:[#allocation5 + $0x5d0] sm:$0xff]
        %v1141 = vld [vmem:[#allocation5 + $0x5d8] sm:$0xff]
        %v1142 = vld [vmem:[#allocation5 + $0x5e0] sm:$0xff]
        %v1143 = vld [vmem:[#allocation5 + $0x5e8] sm:$0xff]
        %v1144 = vld [vmem:[#allocation5 + $0x5f0] sm:$0xff]
        %v1145 = vld [vmem:[#allocation5 + $0x5f8] sm:$0xff]
        %v1146 = vld [vmem:[#allocation5 + $0x600] sm:$0xff]
        %v1147 = vld [vmem:[#allocation5 + $0x608] sm:$0xff]
        %v1148 = vld [vmem:[#allocation5 + $0x610] sm:$0xff]
        %v1149 = vld [vmem:[#allocation5 + $0x618] sm:$0xff]
        %v1150 = vld [vmem:[#allocation5 + $0x620] sm:$0xff]
        %v1151 = vld [vmem:[#allocation5 + $0x628] sm:$0xff]
        %v1152 = vld [vmem:[#allocation5 + $0x630] sm:$0xff]
        %v1153 = vld [vmem:[#allocation5 + $0x638] sm:$0xff]
        %v1154 = vld [vmem:[#allocation5 + $0x640] sm:$0xff]
        %v1155 = vld [vmem:[#allocation5 + $0x648] sm:$0xff]
        %v1156 = vld [vmem:[#allocation5 + $0x650] sm:$0xff]
        %v1157 = vld [vmem:[#allocation5 + $0x658] sm:$0xff]
        %v1158 = vld [vmem:[#allocation5 + $0x660] sm:$0xff]
        %v1159 = vld [vmem:[#allocation5 + $0x668] sm:$0xff]
        %v1160 = vld [vmem:[#allocation5 + $0x670] sm:$0xff]
        %v1161 = vld [vmem:[#allocation5 + $0x678] sm:$0xff]
        %v1162 = vld [vmem:[#allocation5 + $0x680] sm:$0xff]
        %v1163 = vld [vmem:[#allocation5 + $0x688] sm:$0xff]
        %v1164 = vld [vmem:[#allocation5 + $0x690] sm:$0xff]
        %v1165 = vld [vmem:[#allocation5 + $0x698] sm:$0xff]
        %v1166 = vld [vmem:[#allocation5 + $0x6a0] sm:$0xff]
        %v1167 = vld [vmem:[#allocation5 + $0x6a8] sm:$0xff]
        %v1168 = vld [vmem:[#allocation5 + $0x6b0] sm:$0xff]
        %v1169 = vld [vmem:[#allocation5 + $0x6b8] sm:$0xff]
        %v1170 = vld [vmem:[#allocation5 + $0x6c0] sm:$0xff]
        %v1171 = vld [vmem:[#allocation5 + $0x6c8] sm:$0xff]
        %v1172 = vld [vmem:[#allocation5 + $0x6d0] sm:$0xff]
        %v1173 = vld [vmem:[#allocation5 + $0x6d8] sm:$0xff]
        %v1174 = vld [vmem:[#allocation5 + $0x6e0] sm:$0xff]
        %v1175 = vld [vmem:[#allocation5 + $0x6e8] sm:$0xff]
        %v1176 = vld [vmem:[#allocation5 + $0x6f0] sm:$0xff]
        %v1177 = vld [vmem:[#allocation5 + $0x6f8] sm:$0xff]
        %v1178 = vld [vmem:[#allocation5 + $0x700] sm:$0xff]
        %v1179 = vld [vmem:[#allocation5 + $0x708] sm:$0xff]
        %v1180 = vld [vmem:[#allocation5 + $0x710] sm:$0xff]
        %v1181 = vld [vmem:[#allocation5 + $0x718] sm:$0xff]
        %v1182 = vld [vmem:[#allocation5 + $0x720] sm:$0xff]
        %v1183 = vld [vmem:[#allocation5 + $0x728] sm:$0xff]
        %v1184 = vld [vmem:[#allocation5 + $0x730] sm:$0xff]
        %v1185 = vld [vmem:[#allocation5 + $0x738] sm:$0xff]
        %v1186 = vld [vmem:[#allocation5 + $0x740] sm:$0xff]
        %v1187 = vld [vmem:[#allocation5 + $0x748] sm:$0xff]
        %v1188 = vld [vmem:[#allocation5 + $0x750] sm:$0xff]
        %v1189 = vld [vmem:[#allocation5 + $0x758] sm:$0xff]
        %v1190 = vld [vmem:[#allocation5 + $0x760] sm:$0xff]
        %v1191 = vld [vmem:[#allocation5 + $0x768] sm:$0xff]
        %v1192 = vld [vmem:[#allocation5 + $0x770] sm:$0xff]
        %v1193 = vld [vmem:[#allocation5 + $0x778] sm:$0xff]
        %v1194 = vld [vmem:[#allocation5 + $0x780] sm:$0xff]
        %v1195 = vld [vmem:[#allocation5 + $0x788] sm:$0xff]
        %v1196 = vld [vmem:[#allocation5 + $0x790] sm:$0xff]
        %v1197 = vld [vmem:[#allocation5 + $0x798] sm:$0xff]
        %v1198 = vld [vmem:[#allocation5 + $0x7a0] sm:$0xff]
        %v1199 = vld [vmem:[#allocation5 + $0x7a8] sm:$0xff]
        %v1200 = vld [vmem:[#allocation5 + $0x7b0] sm:$0xff]
        %v1201 = vld [vmem:[#allocation5 + $0x7b8] sm:$0xff]
        %v1202 = vld [vmem:[#allocation5 + $0x7c0] sm:$0xff]
        %v1203 = vld [vmem:[#allocation5 + $0x7c8] sm:$0xff]
        %v1204 = vld [vmem:[#allocation5 + $0x7d0] sm:$0xff]
        %v1205 = vld [vmem:[#allocation5 + $0x7d8] sm:$0xff]
        %v1206 = vld [vmem:[#allocation5 + $0x7e0] sm:$0xff]
        %v1207 = vld [vmem:[#allocation5 + $0x7e8] sm:$0xff]
        %v1208 = vld [vmem:[#allocation5 + $0x7f0] sm:$0xff]
        %v1209 = vld [vmem:[#allocation5 + $0x7f8] sm:$0xff]
        %1210 = vmatprep.subr.mxu0 %v955
        %1211 = vmatpush1.msra.mxu0 %v954
        %1212 = vmatprep.subr.mxu0 %v959
        %1213 = vmatpush1.msra.mxu0 %v958
        %1214 = vmatprep.subr.mxu0 %v963
        %1215 = vmatpush1.msra.mxu0 %v962
        %1216 = vmatprep.subr.mxu0 %v967
        %1217 = vmatpush1.msra.mxu0 %v966
        %1218 = vmatprep.subr.mxu0 %v971
        %1219 = vmatpush1.msra.mxu0 %v970
        %1220 = vmatprep.subr.mxu0 %v975
        %1221 = vmatpush1.msra.mxu0 %v974
        %1222 = vmatprep.subr.mxu0 %v979
        %1223 = vmatpush1.msra.mxu0 %v978
        %1224 = vmatprep.subr.mxu0 %v983
        %1225 = vmatpush1.msra.mxu0 %v982
        %1226 = vmatprep.subr.mxu0 %v987
        %1227 = vmatpush1.msra.mxu0 %v986
        %1228 = vmatprep.subr.mxu0 %v991
        %1229 = vmatpush1.msra.mxu0 %v990
        %1230 = vmatprep.subr.mxu0 %v995
        %1231 = vmatpush1.msra.mxu0 %v994
        %1232 = vmatprep.subr.mxu0 %v999
        %1233 = vmatpush1.msra.mxu0 %v998
        %1234 = vmatprep.subr.mxu0 %v1003
        %1235 = vmatpush1.msra.mxu0 %v1002
        %1236 = vmatprep.subr.mxu0 %v1007
        %1237 = vmatpush1.msra.mxu0 %v1006
        %1238 = vmatprep.subr.mxu0 %v1011
        %1239 = vmatpush1.msra.mxu0 %v1010
        %1240 = vmatprep.subr.mxu0 %v1015
        %1241 = vmatpush1.msra.mxu0 %v1014
        %1242 = vmatprep.subr.mxu0 %v1019
        %1243 = vmatpush1.msra.mxu0 %v1018
        %1244 = vmatprep.subr.mxu0 %v1023
        %1245 = vmatpush1.msra.mxu0 %v1022
        %1246 = vmatprep.subr.mxu0 %v1027
        %1247 = vmatpush1.msra.mxu0 %v1026
        %1248 = vmatprep.subr.mxu0 %v1031
        %1249 = vmatpush1.msra.mxu0 %v1030
        %1250 = vmatprep.subr.mxu0 %v1035
        %1251 = vmatpush1.msra.mxu0 %v1034
        %1252 = vmatprep.subr.mxu0 %v1039
        %1253 = vmatpush1.msra.mxu0 %v1038
        %1254 = vmatprep.subr.mxu0 %v1043
        %1255 = vmatpush1.msra.mxu0 %v1042
        %1256 = vmatprep.subr.mxu0 %v1047
        %1257 = vmatpush1.msra.mxu0 %v1046
        %1258 = vmatprep.subr.mxu0 %v1051
        %1259 = vmatpush1.msra.mxu0 %v1050
        %1260 = vmatprep.subr.mxu0 %v1055
        %1261 = vmatpush1.msra.mxu0 %v1054
        %1262 = vmatprep.subr.mxu0 %v1059
        %1263 = vmatpush1.msra.mxu0 %v1058
        %1264 = vmatprep.subr.mxu0 %v1063
        %1265 = vmatpush1.msra.mxu0 %v1062
        %1266 = vmatprep.subr.mxu0 %v1067
        %1267 = vmatpush1.msra.mxu0 %v1066
        %1268 = vmatprep.subr.mxu0 %v1071
        %1269 = vmatpush1.msra.mxu0 %v1070
        %1270 = vmatprep.subr.mxu0 %v1075
        %1271 = vmatpush1.msra.mxu0 %v1074
        %1272 = vmatprep.subr.mxu0 %v1079
        %1273 = vmatpush1.msra.mxu0 %v1078
        %1274 = vmatprep.mubr.f32.mxu0 %v869
        %1275 = vmatmul.mubr.f32.gmra.mrb[0].mxu0 %v867
        %v1276 = vpop.f32.mrb[0].mxu0
        %v1277 = vadd.f32 0.0, %v1276
        %v1278 = vpop.f32.mrb[0].mxu0
        %v1279 = vadd.f32 0.0, %v1278
        %1280 = vmatprep.mubr.f32.mxu0 %v875
        %1281 = vmatmul.mubr.f32.gmra.mrb[0].mxu0 %v873
        %v1282 = vpop.f32.mrb[0].mxu0
        %v1283 = vadd.f32 0.0, %v1282
        %v1284 = vpop.f32.mrb[0].mxu0
        %v1285 = vadd.f32 0.0, %v1284
        %1286 = vdwg.mxu0
        %1287 = vmatprep.subr.mxu0 %v1083
        %1288 = vmatpush1.msra.mxu0 %v1082
        %1289 = vmatprep.subr.mxu0 %v1087
        %1290 = vmatpush1.msra.mxu0 %v1086
        %1291 = vmatprep.subr.mxu0 %v1091
        %1292 = vmatpush1.msra.mxu0 %v1090
        %1293 = vmatprep.subr.mxu0 %v1095
        %1294 = vmatpush1.msra.mxu0 %v1094
        %1295 = vmatprep.subr.mxu0 %v1099
        %1296 = vmatpush1.msra.mxu0 %v1098
        %1297 = vmatprep.subr.mxu0 %v1103
        %1298 = vmatpush1.msra.mxu0 %v1102
        %1299 = vmatprep.subr.mxu0 %v1107
        %1300 = vmatpush1.msra.mxu0 %v1106
        %1301 = vmatprep.subr.mxu0 %v1111
        %1302 = vmatpush1.msra.mxu0 %v1110
        %1303 = vmatprep.subr.mxu0 %v1115
        %1304 = vmatpush1.msra.mxu0 %v1114
        %1305 = vmatprep.subr.mxu0 %v1119
        %1306 = vmatpush1.msra.mxu0 %v1118
        %1307 = vmatprep.subr.mxu0 %v1123
        %1308 = vmatpush1.msra.mxu0 %v1122
        %1309 = vmatprep.subr.mxu0 %v1127
        %1310 = vmatpush1.msra.mxu0 %v1126
        %1311 = vmatprep.subr.mxu0 %v1131
        %1312 = vmatpush1.msra.mxu0 %v1130
        %1313 = vmatprep.subr.mxu0 %v1135
        %1314 = vmatpush1.msra.mxu0 %v1134
        %1315 = vmatprep.subr.mxu0 %v1139
        %1316 = vmatpush1.msra.mxu0 %v1138
        %1317 = vmatprep.subr.mxu0 %v1143
        %1318 = vmatpush1.msra.mxu0 %v1142
        %1319 = vmatprep.subr.mxu0 %v1147
        %1320 = vmatpush1.msra.mxu0 %v1146
        %1321 = vmatprep.subr.mxu0 %v1151
        %1322 = vmatpush1.msra.mxu0 %v1150
        %1323 = vmatprep.subr.mxu0 %v1155
        %1324 = vmatpush1.msra.mxu0 %v1154
        %1325 = vmatprep.subr.mxu0 %v1159
        %1326 = vmatpush1.msra.mxu0 %v1158
        %1327 = vmatprep.subr.mxu0 %v1163
        %1328 = vmatpush1.msra.mxu0 %v1162
        %1329 = vmatprep.subr.mxu0 %v1167
        %1330 = vmatpush1.msra.mxu0 %v1166
        %1331 = vmatprep.subr.mxu0 %v1171
        %1332 = vmatpush1.msra.mxu0 %v1170
        %1333 = vmatprep.subr.mxu0 %v1175
        %1334 = vmatpush1.msra.mxu0 %v1174
        %1335 = vmatprep.subr.mxu0 %v1179
        %1336 = vmatpush1.msra.mxu0 %v1178
        %1337 = vmatprep.subr.mxu0 %v1183
        %1338 = vmatpush1.msra.mxu0 %v1182
        %1339 = vmatprep.subr.mxu0 %v1187
        %1340 = vmatpush1.msra.mxu0 %v1186
        %1341 = vmatprep.subr.mxu0 %v1191
        %1342 = vmatpush1.msra.mxu0 %v1190
        %1343 = vmatprep.subr.mxu0 %v1195
        %1344 = vmatpush1.msra.mxu0 %v1194
        %1345 = vmatprep.subr.mxu0 %v1199
        %1346 = vmatpush1.msra.mxu0 %v1198
        %1347 = vmatprep.subr.mxu0 %v1203
        %1348 = vmatpush1.msra.mxu0 %v1202
        %1349 = vmatprep.subr.mxu0 %v1207
        %1350 = vmatpush1.msra.mxu0 %v1206
        %1351 = vmatprep.mubr.f32.mxu0 %v946
        %1352 = vmatmul.mubr.f32.gmra.mrb[0].mxu0 %v944
        %v1353 = vpop.f32.mrb[0].mxu0
        %v1354 = vadd.f32 %v1277, %v1353
        %v1355 = vpop.f32.mrb[0].mxu0
        %v1356 = vadd.f32 %v1279, %v1355
        %1357 = vmatprep.mubr.f32.mxu0 %v952
        %1358 = vmatmul.mubr.f32.gmra.mrb[0].mxu0 %v950
        %v1359 = vpop.f32.mrb[0].mxu0
        %v1360 = vadd.f32 %v1283, %v1359
        %v1361 = vpop.f32.mrb[0].mxu0
        %v1362 = vadd.f32 %v1285, %v1361
        %1363 = vdwg.mxu0
        %1364 = vmatprep.subr.mxu0 %v957
        %1365 = vmatpush1.msra.mxu0 %v956
        %1366 = vmatprep.subr.mxu0 %v961
        %1367 = vmatpush1.msra.mxu0 %v960
        %1368 = vmatprep.subr.mxu0 %v965
        %1369 = vmatpush1.msra.mxu0 %v964
        %1370 = vmatprep.subr.mxu0 %v969
        %1371 = vmatpush1.msra.mxu0 %v968
        %1372 = vmatprep.subr.mxu0 %v973
        %1373 = vmatpush1.msra.mxu0 %v972
        %1374 = vmatprep.subr.mxu0 %v977
        %1375 = vmatpush1.msra.mxu0 %v976
        %1376 = vmatprep.subr.mxu0 %v981
        %1377 = vmatpush1.msra.mxu0 %v980
        %1378 = vmatprep.subr.mxu0 %v985
        %1379 = vmatpush1.msra.mxu0 %v984
        %1380 = vmatprep.subr.mxu0 %v989
        %1381 = vmatpush1.msra.mxu0 %v988
        %1382 = vmatprep.subr.mxu0 %v993
        %1383 = vmatpush1.msra.mxu0 %v992
        %1384 = vmatprep.subr.mxu0 %v997
        %1385 = vmatpush1.msra.mxu0 %v996
        %1386 = vmatprep.subr.mxu0 %v1001
        %1387 = vmatpush1.msra.mxu0 %v1000
        %1388 = vmatprep.subr.mxu0 %v1005
        %1389 = vmatpush1.msra.mxu0 %v1004
        %1390 = vmatprep.subr.mxu0 %v1009
        %1391 = vmatpush1.msra.mxu0 %v1008
        %1392 = vmatprep.subr.mxu0 %v1013
        %1393 = vmatpush1.msra.mxu0 %v1012
        %1394 = vmatprep.subr.mxu0 %v1017
        %1395 = vmatpush1.msra.mxu0 %v1016
        %1396 = vmatprep.subr.mxu0 %v1021
        %1397 = vmatpush1.msra.mxu0 %v1020
        %1398 = vmatprep.subr.mxu0 %v1025
        %1399 = vmatpush1.msra.mxu0 %v1024
        %1400 = vmatprep.subr.mxu0 %v1029
        %1401 = vmatpush1.msra.mxu0 %v1028
        %1402 = vmatprep.subr.mxu0 %v1033
        %1403 = vmatpush1.msra.mxu0 %v1032
        %1404 = vmatprep.subr.mxu0 %v1037
        %1405 = vmatpush1.msra.mxu0 %v1036
        %1406 = vmatprep.subr.mxu0 %v1041
        %1407 = vmatpush1.msra.mxu0 %v1040
        %1408 = vmatprep.subr.mxu0 %v1045
        %1409 = vmatpush1.msra.mxu0 %v1044
        %1410 = vmatprep.subr.mxu0 %v1049
        %1411 = vmatpush1.msra.mxu0 %v1048
        %1412 = vmatprep.subr.mxu0 %v1053
        %1413 = vmatpush1.msra.mxu0 %v1052
        %1414 = vmatprep.subr.mxu0 %v1057
        %1415 = vmatpush1.msra.mxu0 %v1056
        %1416 = vmatprep.subr.mxu0 %v1061
        %1417 = vmatpush1.msra.mxu0 %v1060
        %1418 = vmatprep.subr.mxu0 %v1065
        %1419 = vmatpush1.msra.mxu0 %v1064
        %1420 = vmatprep.subr.mxu0 %v1069
        %1421 = vmatpush1.msra.mxu0 %v1068
        %1422 = vmatprep.subr.mxu0 %v1073
        %1423 = vmatpush1.msra.mxu0 %v1072
        %1424 = vmatprep.subr.mxu0 %v1077
        %1425 = vmatpush1.msra.mxu0 %v1076
        %1426 = vmatprep.subr.mxu0 %v1081
        %1427 = vmatpush1.msra.mxu0 %v1080
        %1428 = vmatprep.mubr.f32.mxu0 %v869
        %1429 = vmatmul.mubr.f32.gmra.mrb[0].mxu0 %v867
        %v1430 = vpop.f32.mrb[0].mxu0
        %v1431 = vadd.f32 0.0, %v1430
        %v1432 = vpop.f32.mrb[0].mxu0
        %v1433 = vadd.f32 0.0, %v1432
        %1434 = vmatprep.mubr.f32.mxu0 %v875
        %1435 = vmatmul.mubr.f32.gmra.mrb[0].mxu0 %v873
        %v1436 = vpop.f32.mrb[0].mxu0
        %v1437 = vadd.f32 0.0, %v1436
        %v1438 = vpop.f32.mrb[0].mxu0
        %v1439 = vadd.f32 0.0, %v1438
        %1440 = vdwg.mxu0
        %1441 = vmatprep.subr.mxu0 %v1085
        %1442 = vmatpush1.msra.mxu0 %v1084
        %1443 = vmatprep.subr.mxu0 %v1089
        %1444 = vmatpush1.msra.mxu0 %v1088
        %1445 = vmatprep.subr.mxu0 %v1093
        %1446 = vmatpush1.msra.mxu0 %v1092
        %1447 = vmatprep.subr.mxu0 %v1097
        %1448 = vmatpush1.msra.mxu0 %v1096
        %1449 = vmatprep.subr.mxu0 %v1101
        %1450 = vmatpush1.msra.mxu0 %v1100
        %1451 = vmatprep.subr.mxu0 %v1105
        %1452 = vmatpush1.msra.mxu0 %v1104
        %1453 = vmatprep.subr.mxu0 %v1109
        %1454 = vmatpush1.msra.mxu0 %v1108
        %1455 = vmatprep.subr.mxu0 %v1113
        %1456 = vmatpush1.msra.mxu0 %v1112
        %1457 = vmatprep.subr.mxu0 %v1117
        %1458 = vmatpush1.msra.mxu0 %v1116
        %1459 = vmatprep.subr.mxu0 %v1121
        %1460 = vmatpush1.msra.mxu0 %v1120
        %1461 = vmatprep.subr.mxu0 %v1125
        %1462 = vmatpush1.msra.mxu0 %v1124
        %1463 = vmatprep.subr.mxu0 %v1129
        %1464 = vmatpush1.msra.mxu0 %v1128
        %1465 = vmatprep.subr.mxu0 %v1133
        %1466 = vmatpush1.msra.mxu0 %v1132
        %1467 = vmatprep.subr.mxu0 %v1137
        %1468 = vmatpush1.msra.mxu0 %v1136
        %1469 = vmatprep.subr.mxu0 %v1141
        %1470 = vmatpush1.msra.mxu0 %v1140
        %1471 = vmatprep.subr.mxu0 %v1145
        %1472 = vmatpush1.msra.mxu0 %v1144
        %1473 = vmatprep.subr.mxu0 %v1149
        %1474 = vmatpush1.msra.mxu0 %v1148
        %1475 = vmatprep.subr.mxu0 %v1153
        %1476 = vmatpush1.msra.mxu0 %v1152
        %1477 = vmatprep.subr.mxu0 %v1157
        %1478 = vmatpush1.msra.mxu0 %v1156
        %1479 = vmatprep.subr.mxu0 %v1161
        %1480 = vmatpush1.msra.mxu0 %v1160
        %1481 = vmatprep.subr.mxu0 %v1165
        %1482 = vmatpush1.msra.mxu0 %v1164
        %1483 = vmatprep.subr.mxu0 %v1169
        %1484 = vmatpush1.msra.mxu0 %v1168
        %1485 = vmatprep.subr.mxu0 %v1173
        %1486 = vmatpush1.msra.mxu0 %v1172
        %1487 = vmatprep.subr.mxu0 %v1177
        %1488 = vmatpush1.msra.mxu0 %v1176
        %1489 = vmatprep.subr.mxu0 %v1181
        %1490 = vmatpush1.msra.mxu0 %v1180
        %1491 = vmatprep.subr.mxu0 %v1185
        %1492 = vmatpush1.msra.mxu0 %v1184
        %1493 = vmatprep.subr.mxu0 %v1189
        %1494 = vmatpush1.msra.mxu0 %v1188
        %1495 = vmatprep.subr.mxu0 %v1193
        %1496 = vmatpush1.msra.mxu0 %v1192
        %1497 = vmatprep.subr.mxu0 %v1197
        %1498 = vmatpush1.msra.mxu0 %v1196
        %1499 = vmatprep.subr.mxu0 %v1201
        %1500 = vmatpush1.msra.mxu0 %v1200
        %1501 = vmatprep.subr.mxu0 %v1205
        %1502 = vmatpush1.msra.mxu0 %v1204
        %1503 = vmatprep.subr.mxu0 %v1209
        %1504 = vmatpush1.msra.mxu0 %v1208
        %1505 = vmatprep.mubr.f32.mxu0 %v946
        %1506 = vmatmul.mubr.f32.gmra.mrb[0].mxu0 %v944
        %v1507 = vpop.f32.mrb[0].mxu0
        %v1508 = vadd.f32 %v1431, %v1507
        %v1509 = vpop.f32.mrb[0].mxu0
        %v1510 = vadd.f32 %v1433, %v1509
        %1511 = vmatprep.mubr.f32.mxu0 %v952
        %1512 = vmatmul.mubr.f32.gmra.mrb[0].mxu0 %v950
        %v1513 = vpop.f32.mrb[0].mxu0
        %v1514 = vadd.f32 %v1437, %v1513
        %v1515 = vpop.f32.mrb[0].mxu0
        %v1516 = vadd.f32 %v1439, %v1515
        %1517 = vdwg.mxu0
        %1518 = vmatprep.subr.mxu0 %v536
        %1519 = vmatpush1.msra.mxu0 %v535
        %1520 = vmatprep.subr.mxu0 %v540
        %1521 = vmatpush1.msra.mxu0 %v539
        %1522 = vmatprep.subr.mxu0 %v544
        %1523 = vmatpush1.msra.mxu0 %v543
        %1524 = vmatprep.subr.mxu0 %v548
        %1525 = vmatpush1.msra.mxu0 %v547
        %1526 = vmatprep.subr.mxu0 %v552
        %1527 = vmatpush1.msra.mxu0 %v551
        %1528 = vmatprep.subr.mxu0 %v556
        %1529 = vmatpush1.msra.mxu0 %v555
        %1530 = vmatprep.subr.mxu0 %v560
        %1531 = vmatpush1.msra.mxu0 %v559
        %1532 = vmatprep.subr.mxu0 %v564
        %1533 = vmatpush1.msra.mxu0 %v563
        %1534 = vmatprep.subr.mxu0 %v568
        %1535 = vmatpush1.msra.mxu0 %v567
        %1536 = vmatprep.subr.mxu0 %v572
        %1537 = vmatpush1.msra.mxu0 %v571
        %1538 = vmatprep.subr.mxu0 %v576
        %1539 = vmatpush1.msra.mxu0 %v575
        %1540 = vmatprep.subr.mxu0 %v580
        %1541 = vmatpush1.msra.mxu0 %v579
        %1542 = vmatprep.subr.mxu0 %v584
        %1543 = vmatpush1.msra.mxu0 %v583
        %1544 = vmatprep.subr.mxu0 %v588
        %1545 = vmatpush1.msra.mxu0 %v587
        %1546 = vmatprep.subr.mxu0 %v592
        %1547 = vmatpush1.msra.mxu0 %v591
        %1548 = vmatprep.subr.mxu0 %v596
        %1549 = vmatpush1.msra.mxu0 %v595
        %1550 = vmatprep.subr.mxu0 %v600
        %1551 = vmatpush1.msra.mxu0 %v599
        %1552 = vmatprep.subr.mxu0 %v604
        %1553 = vmatpush1.msra.mxu0 %v603
        %1554 = vmatprep.subr.mxu0 %v608
        %1555 = vmatpush1.msra.mxu0 %v607
        %1556 = vmatprep.subr.mxu0 %v612
        %1557 = vmatpush1.msra.mxu0 %v611
        %1558 = vmatprep.subr.mxu0 %v616
        %1559 = vmatpush1.msra.mxu0 %v615
        %1560 = vmatprep.subr.mxu0 %v620
        %1561 = vmatpush1.msra.mxu0 %v619
        %1562 = vmatprep.subr.mxu0 %v624
        %1563 = vmatpush1.msra.mxu0 %v623
        %1564 = vmatprep.subr.mxu0 %v628
        %1565 = vmatpush1.msra.mxu0 %v627
        %1566 = vmatprep.subr.mxu0 %v632
        %1567 = vmatpush1.msra.mxu0 %v631
        %1568 = vmatprep.subr.mxu0 %v636
        %1569 = vmatpush1.msra.mxu0 %v635
        %1570 = vmatprep.subr.mxu0 %v640
        %1571 = vmatpush1.msra.mxu0 %v639
        %1572 = vmatprep.subr.mxu0 %v644
        %1573 = vmatpush1.msra.mxu0 %v643
        %1574 = vmatprep.subr.mxu0 %v648
        %1575 = vmatpush1.msra.mxu0 %v647
        %1576 = vmatprep.subr.mxu0 %v652
        %1577 = vmatpush1.msra.mxu0 %v651
        %1578 = vmatprep.subr.mxu0 %v656
        %1579 = vmatpush1.msra.mxu0 %v655
        %1580 = vmatprep.subr.mxu0 %v660
        %1581 = vmatpush1.msra.mxu0 %v659
        %1582 = vmatprep.mubr.f32.mxu0 %v527
        %1583 = vmatmul.mubr.f32.gmra.mrb[0].mxu0 %v526
        %v1584 = vpop.f32.mrb[0].mxu0
        %v1585 = vadd.f32 %v1354, %v1584
        %v1586 = vpop.f32.mrb[0].mxu0
        %v1587 = vadd.f32 %v1356, %v1586
        %1588 = vmatprep.mubr.f32.mxu0 %v531
        %1589 = vmatmul.mubr.f32.gmra.mrb[0].mxu0 %v530
        %v1590 = vpop.f32.mrb[0].mxu0
        %v1591 = vadd.f32 %v1360, %v1590
        %v1592 = vpop.f32.mrb[0].mxu0
        %v1593 = vadd.f32 %v1362, %v1592
        %1594 = vdwg.mxu0
        %1595 = vmatprep.subr.mxu0 %v664
        %1596 = vmatpush1.msra.mxu0 %v663
        %1597 = vmatprep.subr.mxu0 %v668
        %1598 = vmatpush1.msra.mxu0 %v667
        %1599 = vmatprep.subr.mxu0 %v672
        %1600 = vmatpush1.msra.mxu0 %v671
        %1601 = vmatprep.subr.mxu0 %v676
        %1602 = vmatpush1.msra.mxu0 %v675
        %1603 = vmatprep.subr.mxu0 %v680
        %1604 = vmatpush1.msra.mxu0 %v679
        %1605 = vmatprep.subr.mxu0 %v684
        %1606 = vmatpush1.msra.mxu0 %v683
        %1607 = vmatprep.subr.mxu0 %v688
        %1608 = vmatpush1.msra.mxu0 %v687
        %1609 = vmatprep.subr.mxu0 %v692
        %1610 = vmatpush1.msra.mxu0 %v691
        %1611 = vmatprep.subr.mxu0 %v696
        %1612 = vmatpush1.msra.mxu0 %v695
        %1613 = vmatprep.subr.mxu0 %v700
        %1614 = vmatpush1.msra.mxu0 %v699
        %1615 = vmatprep.subr.mxu0 %v704
        %1616 = vmatpush1.msra.mxu0 %v703
        %1617 = vmatprep.subr.mxu0 %v708
        %1618 = vmatpush1.msra.mxu0 %v707
        %1619 = vmatprep.subr.mxu0 %v712
        %1620 = vmatpush1.msra.mxu0 %v711
        %1621 = vmatprep.subr.mxu0 %v716
        %1622 = vmatpush1.msra.mxu0 %v715
        %1623 = vmatprep.subr.mxu0 %v720
        %1624 = vmatpush1.msra.mxu0 %v719
        %1625 = vmatprep.subr.mxu0 %v724
        %1626 = vmatpush1.msra.mxu0 %v723
        %1627 = vmatprep.subr.mxu0 %v728
        %1628 = vmatpush1.msra.mxu0 %v727
        %1629 = vmatprep.subr.mxu0 %v732
        %1630 = vmatpush1.msra.mxu0 %v731
        %1631 = vmatprep.subr.mxu0 %v736
        %1632 = vmatpush1.msra.mxu0 %v735
        %1633 = vmatprep.subr.mxu0 %v740
        %1634 = vmatpush1.msra.mxu0 %v739
        %1635 = vmatprep.subr.mxu0 %v744
        %1636 = vmatpush1.msra.mxu0 %v743
        %1637 = vmatprep.subr.mxu0 %v748
        %1638 = vmatpush1.msra.mxu0 %v747
        %1639 = vmatprep.subr.mxu0 %v752
        %1640 = vmatpush1.msra.mxu0 %v751
        %1641 = vmatprep.subr.mxu0 %v756
        %1642 = vmatpush1.msra.mxu0 %v755
        %1643 = vmatprep.subr.mxu0 %v760
        %1644 = vmatpush1.msra.mxu0 %v759
        %1645 = vmatprep.subr.mxu0 %v764
        %1646 = vmatpush1.msra.mxu0 %v763
        %1647 = vmatprep.subr.mxu0 %v768
        %1648 = vmatpush1.msra.mxu0 %v767
        %1649 = vmatprep.subr.mxu0 %v772
        %1650 = vmatpush1.msra.mxu0 %v771
        %1651 = vmatprep.subr.mxu0 %v776
        %1652 = vmatpush1.msra.mxu0 %v775
        %1653 = vmatprep.subr.mxu0 %v780
        %1654 = vmatpush1.msra.mxu0 %v779
        %1655 = vmatprep.subr.mxu0 %v784
        %1656 = vmatpush1.msra.mxu0 %v783
        %1657 = vmatprep.subr.mxu0 %v788
        %1658 = vmatpush1.msra.mxu0 %v787
        %1659 = vmatprep.mubr.f32.mxu0 %v529
        %1660 = vmatmul.mubr.f32.gmra.mrb[0].mxu0 %v528
        %v1661 = vpop.f32.mrb[0].mxu0
        %v1662 = vadd.f32 %v1585, %v1661
        %v1663 = vpop.f32.mrb[0].mxu0
        %v1664 = vadd.f32 %v1587, %v1663
        %1665 = vmatprep.mubr.f32.mxu0 %v533
        %1666 = vmatmul.mubr.f32.gmra.mrb[0].mxu0 %v532
        %v1667 = vpop.f32.mrb[0].mxu0
        %v1668 = vadd.f32 %v1591, %v1667
        %v1669 = vpop.f32.mrb[0].mxu0
        %v1670 = vadd.f32 %v1593, %v1669
        %1671 = vdwg.mxu0
        %1672 = vmatprep.subr.mxu0 %v538
        %1673 = vmatpush1.msra.mxu0 %v537
        %1674 = vmatprep.subr.mxu0 %v542
        %1675 = vmatpush1.msra.mxu0 %v541
        %1676 = vmatprep.subr.mxu0 %v546
        %1677 = vmatpush1.msra.mxu0 %v545
        %1678 = vmatprep.subr.mxu0 %v550
        %1679 = vmatpush1.msra.mxu0 %v549
        %1680 = vmatprep.subr.mxu0 %v554
        %1681 = vmatpush1.msra.mxu0 %v553
        %1682 = vmatprep.subr.mxu0 %v558
        %1683 = vmatpush1.msra.mxu0 %v557
        %1684 = vmatprep.subr.mxu0 %v562
        %1685 = vmatpush1.msra.mxu0 %v561
        %1686 = vmatprep.subr.mxu0 %v566
        %1687 = vmatpush1.msra.mxu0 %v565
        %1688 = vmatprep.subr.mxu0 %v570
        %1689 = vmatpush1.msra.mxu0 %v569
        %1690 = vmatprep.subr.mxu0 %v574
        %1691 = vmatpush1.msra.mxu0 %v573
        %1692 = vmatprep.subr.mxu0 %v578
        %1693 = vmatpush1.msra.mxu0 %v577
        %1694 = vmatprep.subr.mxu0 %v582
        %1695 = vmatpush1.msra.mxu0 %v581
        %1696 = vmatprep.subr.mxu0 %v586
        %1697 = vmatpush1.msra.mxu0 %v585
        %1698 = vmatprep.subr.mxu0 %v590
        %1699 = vmatpush1.msra.mxu0 %v589
        %1700 = vmatprep.subr.mxu0 %v594
        %1701 = vmatpush1.msra.mxu0 %v593
        %1702 = vmatprep.subr.mxu0 %v598
        %1703 = vmatpush1.msra.mxu0 %v597
        %1704 = vmatprep.subr.mxu0 %v602
        %1705 = vmatpush1.msra.mxu0 %v601
        %1706 = vmatprep.subr.mxu0 %v606
        %1707 = vmatpush1.msra.mxu0 %v605
        %1708 = vmatprep.subr.mxu0 %v610
        %1709 = vmatpush1.msra.mxu0 %v609
        %1710 = vmatprep.subr.mxu0 %v614
        %1711 = vmatpush1.msra.mxu0 %v613
        %1712 = vmatprep.subr.mxu0 %v618
        %1713 = vmatpush1.msra.mxu0 %v617
        %1714 = vmatprep.subr.mxu0 %v622
        %1715 = vmatpush1.msra.mxu0 %v621
        %1716 = vmatprep.subr.mxu0 %v626
        %1717 = vmatpush1.msra.mxu0 %v625
        %1718 = vmatprep.subr.mxu0 %v630
        %1719 = vmatpush1.msra.mxu0 %v629
        %1720 = vmatprep.subr.mxu0 %v634
        %1721 = vmatpush1.msra.mxu0 %v633
        %1722 = vmatprep.subr.mxu0 %v638
        %1723 = vmatpush1.msra.mxu0 %v637
        %1724 = vmatprep.subr.mxu0 %v642
        %1725 = vmatpush1.msra.mxu0 %v641
        %1726 = vmatprep.subr.mxu0 %v646
        %1727 = vmatpush1.msra.mxu0 %v645
        %1728 = vmatprep.subr.mxu0 %v650
        %1729 = vmatpush1.msra.mxu0 %v649
        %1730 = vmatprep.subr.mxu0 %v654
        %1731 = vmatpush1.msra.mxu0 %v653
        %1732 = vmatprep.subr.mxu0 %v658
        %1733 = vmatpush1.msra.mxu0 %v657
        %1734 = vmatprep.subr.mxu0 %v662
        %1735 = vmatpush1.msra.mxu0 %v661
        %1736 = vmatprep.mubr.f32.mxu0 %v527
        %1737 = vmatmul.mubr.f32.gmra.mrb[0].mxu0 %v526
        %v1738 = vpop.f32.mrb[0].mxu0
        %v1739 = vadd.f32 %v1508, %v1738
        %v1740 = vpop.f32.mrb[0].mxu0
        %v1741 = vadd.f32 %v1510, %v1740
        %1742 = vmatprep.mubr.f32.mxu0 %v531
        %1743 = vmatmul.mubr.f32.gmra.mrb[0].mxu0 %v530
        %v1744 = vpop.f32.mrb[0].mxu0
        %v1745 = vadd.f32 %v1514, %v1744
        %v1746 = vpop.f32.mrb[0].mxu0
        %v1747 = vadd.f32 %v1516, %v1746
        %1748 = vdwg.mxu0
        %1749 = vmatprep.subr.mxu0 %v666
        %1750 = vmatpush1.msra.mxu0 %v665
        %1751 = vmatprep.subr.mxu0 %v670
        %1752 = vmatpush1.msra.mxu0 %v669
        %1753 = vmatprep.subr.mxu0 %v674
        %1754 = vmatpush1.msra.mxu0 %v673
        %1755 = vmatprep.subr.mxu0 %v678
        %1756 = vmatpush1.msra.mxu0 %v677
        %1757 = vmatprep.subr.mxu0 %v682
        %1758 = vmatpush1.msra.mxu0 %v681
        %1759 = vmatprep.subr.mxu0 %v686
        %1760 = vmatpush1.msra.mxu0 %v685
        %1761 = vmatprep.subr.mxu0 %v690
        %1762 = vmatpush1.msra.mxu0 %v689
        %1763 = vmatprep.subr.mxu0 %v694
        %1764 = vmatpush1.msra.mxu0 %v693
        %1765 = vmatprep.subr.mxu0 %v698
        %1766 = vmatpush1.msra.mxu0 %v697
        %1767 = vmatprep.subr.mxu0 %v702
        %1768 = vmatpush1.msra.mxu0 %v701
        %1769 = vmatprep.subr.mxu0 %v706
        %1770 = vmatpush1.msra.mxu0 %v705
        %1771 = vmatprep.subr.mxu0 %v710
        %1772 = vmatpush1.msra.mxu0 %v709
        %1773 = vmatprep.subr.mxu0 %v714
        %1774 = vmatpush1.msra.mxu0 %v713
        %1775 = vmatprep.subr.mxu0 %v718
        %1776 = vmatpush1.msra.mxu0 %v717
        %1777 = vmatprep.subr.mxu0 %v722
        %1778 = vmatpush1.msra.mxu0 %v721
        %1779 = vmatprep.subr.mxu0 %v726
        %1780 = vmatpush1.msra.mxu0 %v725
        %1781 = vmatprep.subr.mxu0 %v730
        %1782 = vmatpush1.msra.mxu0 %v729
        %1783 = vmatprep.subr.mxu0 %v734
        %1784 = vmatpush1.msra.mxu0 %v733
        %1785 = vmatprep.subr.mxu0 %v738
        %1786 = vmatpush1.msra.mxu0 %v737
        %1787 = vmatprep.subr.mxu0 %v742
        %1788 = vmatpush1.msra.mxu0 %v741
        %1789 = vmatprep.subr.mxu0 %v746
        %1790 = vmatpush1.msra.mxu0 %v745
        %1791 = vmatprep.subr.mxu0 %v750
        %1792 = vmatpush1.msra.mxu0 %v749
        %1793 = vmatprep.subr.mxu0 %v754
        %1794 = vmatpush1.msra.mxu0 %v753
        %1795 = vmatprep.subr.mxu0 %v758
        %1796 = vmatpush1.msra.mxu0 %v757
        %1797 = vmatprep.subr.mxu0 %v762
        %1798 = vmatpush1.msra.mxu0 %v761
        %1799 = vmatprep.subr.mxu0 %v766
        %1800 = vmatpush1.msra.mxu0 %v765
        %1801 = vmatprep.subr.mxu0 %v770
        %1802 = vmatpush1.msra.mxu0 %v769
        %1803 = vmatprep.subr.mxu0 %v774
        %1804 = vmatpush1.msra.mxu0 %v773
        %1805 = vmatprep.subr.mxu0 %v778
        %1806 = vmatpush1.msra.mxu0 %v777
        %1807 = vmatprep.subr.mxu0 %v782
        %1808 = vmatpush1.msra.mxu0 %v781
        %1809 = vmatprep.subr.mxu0 %v786
        %1810 = vmatpush1.msra.mxu0 %v785
        %1811 = vmatprep.subr.mxu0 %v790
        %1812 = vmatpush1.msra.mxu0 %v789
        %1813 = vmatprep.mubr.f32.mxu0 %v529
        %1814 = vmatmul.mubr.f32.gmra.mrb[0].mxu0 %v528
        %v1815 = vpop.f32.mrb[0].mxu0
        %v1816 = vadd.f32 %v1739, %v1815
        %v1817 = vpop.f32.mrb[0].mxu0
        %v1818 = vadd.f32 %v1741, %v1817
        %1819 = vmatprep.mubr.f32.mxu0 %v533
        %1820 = vmatmul.mubr.f32.gmra.mrb[0].mxu0 %v532
        %v1821 = vpop.f32.mrb[0].mxu0
        %v1822 = vadd.f32 %v1745, %v1821
        %v1823 = vpop.f32.mrb[0].mxu0
        %v1824 = vadd.f32 %v1747, %v1823
        %1825 = vdwg.mxu0
        %v1826 = vld [vmem:[#allocation13] sm:$0xff]
        %v1827 = vld [vmem:[#allocation13 + $0x8] sm:$0xff]
        %v1829 = vsel %vm793, %v1826, 0
        %v1832 = vsel %vm793, %v1827, 0
        %1834 = vmatprep.subr.mxu0 %v527
        %1835 = vmatpush1.msra.mxu0 %v526
        %1836 = vmatprep.subr.mxu0 %v531
        %1837 = vmatpush1.msra.mxu0 %v530
        %1838 = vmatprep.subr.mxu0 0.0
        %1839 = vmatpush1.msra.mxu0 0.0
        %1840 = vmatprep.subr.mxu0 0.0
        %1841 = vmatpush1.msra.mxu0 0.0
        %1842 = vmatprep.subr.mxu0 0.0
        %1843 = vmatpush1.msra.mxu0 0.0
        %1844 = vmatprep.subr.mxu0 0.0
        %1845 = vmatpush1.msra.mxu0 0.0
        %1846 = vmatprep.subr.mxu0 0.0
        %1847 = vmatpush1.msra.mxu0 0.0
        %1848 = vmatprep.subr.mxu0 0.0
        %1849 = vmatpush1.msra.mxu0 0.0
        %1850 = vmatprep.subr.mxu0 0.0
        %1851 = vmatpush1.msra.mxu0 0.0
        %1852 = vmatprep.subr.mxu0 0.0
        %1853 = vmatpush1.msra.mxu0 0.0
        %1854 = vmatprep.subr.mxu0 0.0
        %1855 = vmatpush1.msra.mxu0 0.0
        %1856 = vmatprep.subr.mxu0 0.0
        %1857 = vmatpush1.msra.mxu0 0.0
        %1858 = vmatprep.subr.mxu0 0.0
        %1859 = vmatpush1.msra.mxu0 0.0
        %1860 = vmatprep.subr.mxu0 0.0
        %1861 = vmatpush1.msra.mxu0 0.0
        %1862 = vmatprep.subr.mxu0 0.0
        %1863 = vmatpush1.msra.mxu0 0.0
        %1864 = vmatprep.subr.mxu0 0.0
        %1865 = vmatpush1.msra.mxu0 0.0
        %1866 = vmatprep.subr.mxu0 0.0
        %1867 = vmatpush1.msra.mxu0 0.0
        %1868 = vmatprep.subr.mxu0 0.0
        %1869 = vmatpush1.msra.mxu0 0.0
        %1870 = vmatprep.subr.mxu0 0.0
        %1871 = vmatpush1.msra.mxu0 0.0
        %1872 = vmatprep.subr.mxu0 0.0
        %1873 = vmatpush1.msra.mxu0 0.0
        %1874 = vmatprep.subr.mxu0 0.0
        %1875 = vmatpush1.msra.mxu0 0.0
        %1876 = vmatprep.subr.mxu0 0.0
        %1877 = vmatpush1.msra.mxu0 0.0
        %1878 = vmatprep.subr.mxu0 0.0
        %1879 = vmatpush1.msra.mxu0 0.0
        %1880 = vmatprep.subr.mxu0 0.0
        %1881 = vmatpush1.msra.mxu0 0.0
        %1882 = vmatprep.subr.mxu0 0.0
        %1883 = vmatpush1.msra.mxu0 0.0
        %1884 = vmatprep.subr.mxu0 0.0
        %1885 = vmatpush1.msra.mxu0 0.0
        %1886 = vmatprep.subr.mxu0 0.0
        %1887 = vmatpush1.msra.mxu0 0.0
        %1888 = vmatprep.subr.mxu0 0.0
        %1889 = vmatpush1.msra.mxu0 0.0
        %1890 = vmatprep.subr.mxu0 0.0
        %1891 = vmatpush1.msra.mxu0 0.0
        %1892 = vmatprep.subr.mxu0 0.0
        %1893 = vmatpush1.msra.mxu0 0.0
        %1894 = vmatprep.subr.mxu0 0.0
        %1895 = vmatpush1.msra.mxu0 0.0
        %1896 = vmatprep.subr.mxu0 0.0
        %1897 = vmatpush1.msra.mxu0 0.0
        %1898 = vmatprep.mubr.f32.mxu0 0.0
        %1899 = vmatmul.mubr.f32.gmra.mrb[0].mxu0 %v1829
        %v1900 = vpop.f32.mrb[0].mxu0
        %v1901 = vadd.f32 0.0, %v1900
        %v1902 = vpop.f32.mrb[0].mxu0
        %v1903 = vadd.f32 0.0, %v1902
        %1904 = vmatprep.mubr.f32.mxu0 0.0
        %1905 = vmatmul.mubr.f32.gmra.mrb[0].mxu0 %v1832
        %v1906 = vpop.f32.mrb[0].mxu0
        %v1907 = vadd.f32 0.0, %v1906
        %v1908 = vpop.f32.mrb[0].mxu0
        %v1909 = vadd.f32 0.0, %v1908
        %1910 = vdwg.mxu0
        %1911 = vmatprep.subr.mxu0 %v529
        %1912 = vmatpush1.msra.mxu0 %v528
        %1913 = vmatprep.subr.mxu0 %v533
        %1914 = vmatpush1.msra.mxu0 %v532
        %1915 = vmatprep.subr.mxu0 0.0
        %1916 = vmatpush1.msra.mxu0 0.0
        %1917 = vmatprep.subr.mxu0 0.0
        %1918 = vmatpush1.msra.mxu0 0.0
        %1919 = vmatprep.subr.mxu0 0.0
        %1920 = vmatpush1.msra.mxu0 0.0
        %1921 = vmatprep.subr.mxu0 0.0
        %1922 = vmatpush1.msra.mxu0 0.0
        %1923 = vmatprep.subr.mxu0 0.0
        %1924 = vmatpush1.msra.mxu0 0.0
        %1925 = vmatprep.subr.mxu0 0.0
        %1926 = vmatpush1.msra.mxu0 0.0
        %1927 = vmatprep.subr.mxu0 0.0
        %1928 = vmatpush1.msra.mxu0 0.0
        %1929 = vmatprep.subr.mxu0 0.0
        %1930 = vmatpush1.msra.mxu0 0.0
        %1931 = vmatprep.subr.mxu0 0.0
        %1932 = vmatpush1.msra.mxu0 0.0
        %1933 = vmatprep.subr.mxu0 0.0
        %1934 = vmatpush1.msra.mxu0 0.0
        %1935 = vmatprep.subr.mxu0 0.0
        %1936 = vmatpush1.msra.mxu0 0.0
        %1937 = vmatprep.subr.mxu0 0.0
        %1938 = vmatpush1.msra.mxu0 0.0
        %1939 = vmatprep.subr.mxu0 0.0
        %1940 = vmatpush1.msra.mxu0 0.0
        %1941 = vmatprep.subr.mxu0 0.0
        %1942 = vmatpush1.msra.mxu0 0.0
        %1943 = vmatprep.subr.mxu0 0.0
        %1944 = vmatpush1.msra.mxu0 0.0
        %1945 = vmatprep.subr.mxu0 0.0
        %1946 = vmatpush1.msra.mxu0 0.0
        %1947 = vmatprep.subr.mxu0 0.0
        %1948 = vmatpush1.msra.mxu0 0.0
        %1949 = vmatprep.subr.mxu0 0.0
        %1950 = vmatpush1.msra.mxu0 0.0
        %1951 = vmatprep.subr.mxu0 0.0
        %1952 = vmatpush1.msra.mxu0 0.0
        %1953 = vmatprep.subr.mxu0 0.0
        %1954 = vmatpush1.msra.mxu0 0.0
        %1955 = vmatprep.subr.mxu0 0.0
        %1956 = vmatpush1.msra.mxu0 0.0
        %1957 = vmatprep.subr.mxu0 0.0
        %1958 = vmatpush1.msra.mxu0 0.0
        %1959 = vmatprep.subr.mxu0 0.0
        %1960 = vmatpush1.msra.mxu0 0.0
        %1961 = vmatprep.subr.mxu0 0.0
        %1962 = vmatpush1.msra.mxu0 0.0
        %1963 = vmatprep.subr.mxu0 0.0
        %1964 = vmatpush1.msra.mxu0 0.0
        %1965 = vmatprep.subr.mxu0 0.0
        %1966 = vmatpush1.msra.mxu0 0.0
        %1967 = vmatprep.subr.mxu0 0.0
        %1968 = vmatpush1.msra.mxu0 0.0
        %1969 = vmatprep.subr.mxu0 0.0
        %1970 = vmatpush1.msra.mxu0 0.0
        %1971 = vmatprep.subr.mxu0 0.0
        %1972 = vmatpush1.msra.mxu0 0.0
        %1973 = vmatprep.subr.mxu0 0.0
        %1974 = vmatpush1.msra.mxu0 0.0
        %1975 = vmatprep.mubr.f32.mxu0 0.0
        %1976 = vmatmul.mubr.f32.gmra.mrb[0].mxu0 %v1829
        %v1977 = vpop.f32.mrb[0].mxu0
        %v1978 = vadd.f32 0.0, %v1977
        %v1979 = vpop.f32.mrb[0].mxu0
        %v1980 = vadd.f32 0.0, %v1979
        %1981 = vmatprep.mubr.f32.mxu0 0.0
        %1982 = vmatmul.mubr.f32.gmra.mrb[0].mxu0 %v1832
        %v1983 = vpop.f32.mrb[0].mxu0
        %v1984 = vadd.f32 0.0, %v1983
        %v1985 = vpop.f32.mrb[0].mxu0
        %v1986 = vadd.f32 0.0, %v1985
        %1987 = vdwg.mxu0
        %s1988 = scalar_lea.vmem [#allocation5], 4096
        %v1989 = vld [vmem:[%s1988] sm:$0xff]
        %v1990 = vld [vmem:[%s1988 + $0x8] sm:$0xff]
        %v1991 = vld [vmem:[%s1988 + $0x10] sm:$0xff]
        %v1992 = vld [vmem:[%s1988 + $0x18] sm:$0xff]
        %v1993 = vld [vmem:[%s1988 + $0x20] sm:$0xff]
        %v1994 = vld [vmem:[%s1988 + $0x28] sm:$0xff]
        %v1995 = vld [vmem:[%s1988 + $0x30] sm:$0xff]
        %v1996 = vld [vmem:[%s1988 + $0x38] sm:$0xff]
        %v1997 = vld [vmem:[%s1988 + $0x40] sm:$0xff]
        %v1998 = vld [vmem:[%s1988 + $0x48] sm:$0xff]
        %v1999 = vld [vmem:[%s1988 + $0x50] sm:$0xff]
        %v2000 = vld [vmem:[%s1988 + $0x58] sm:$0xff]
        %v2001 = vld [vmem:[%s1988 + $0x60] sm:$0xff]
        %v2002 = vld [vmem:[%s1988 + $0x68] sm:$0xff]
        %v2003 = vld [vmem:[%s1988 + $0x70] sm:$0xff]
        %v2004 = vld [vmem:[%s1988 + $0x78] sm:$0xff]
        %v2005 = vld [vmem:[%s1988 + $0x80] sm:$0xff]
        %v2006 = vld [vmem:[%s1988 + $0x88] sm:$0xff]
        %v2007 = vld [vmem:[%s1988 + $0x90] sm:$0xff]
        %v2008 = vld [vmem:[%s1988 + $0x98] sm:$0xff]
        %v2009 = vld [vmem:[%s1988 + $0xa0] sm:$0xff]
        %v2010 = vld [vmem:[%s1988 + $0xa8] sm:$0xff]
        %v2011 = vld [vmem:[%s1988 + $0xb0] sm:$0xff]
        %v2012 = vld [vmem:[%s1988 + $0xb8] sm:$0xff]
        %v2013 = vld [vmem:[%s1988 + $0xc0] sm:$0xff]
        %v2014 = vld [vmem:[%s1988 + $0xc8] sm:$0xff]
        %v2015 = vld [vmem:[%s1988 + $0xd0] sm:$0xff]
        %v2016 = vld [vmem:[%s1988 + $0xd8] sm:$0xff]
        %v2017 = vld [vmem:[%s1988 + $0xe0] sm:$0xff]
        %v2018 = vld [vmem:[%s1988 + $0xe8] sm:$0xff]
        %v2019 = vld [vmem:[%s1988 + $0xf0] sm:$0xff]
        %v2020 = vld [vmem:[%s1988 + $0xf8] sm:$0xff]
        %v2021 = vld [vmem:[%s1988 + $0x100] sm:$0xff]
        %v2022 = vld [vmem:[%s1988 + $0x108] sm:$0xff]
        %v2023 = vld [vmem:[%s1988 + $0x110] sm:$0xff]
        %v2024 = vld [vmem:[%s1988 + $0x118] sm:$0xff]
        %v2025 = vld [vmem:[%s1988 + $0x120] sm:$0xff]
        %v2026 = vld [vmem:[%s1988 + $0x128] sm:$0xff]
        %v2027 = vld [vmem:[%s1988 + $0x130] sm:$0xff]
        %v2028 = vld [vmem:[%s1988 + $0x138] sm:$0xff]
        %v2029 = vld [vmem:[%s1988 + $0x140] sm:$0xff]
        %v2030 = vld [vmem:[%s1988 + $0x148] sm:$0xff]
        %v2031 = vld [vmem:[%s1988 + $0x150] sm:$0xff]
        %v2032 = vld [vmem:[%s1988 + $0x158] sm:$0xff]
        %v2033 = vld [vmem:[%s1988 + $0x160] sm:$0xff]
        %v2034 = vld [vmem:[%s1988 + $0x168] sm:$0xff]
        %v2035 = vld [vmem:[%s1988 + $0x170] sm:$0xff]
        %v2036 = vld [vmem:[%s1988 + $0x178] sm:$0xff]
        %v2037 = vld [vmem:[%s1988 + $0x180] sm:$0xff]
        %v2038 = vld [vmem:[%s1988 + $0x188] sm:$0xff]
        %v2039 = vld [vmem:[%s1988 + $0x190] sm:$0xff]
        %v2040 = vld [vmem:[%s1988 + $0x198] sm:$0xff]
        %v2041 = vld [vmem:[%s1988 + $0x1a0] sm:$0xff]
        %v2042 = vld [vmem:[%s1988 + $0x1a8] sm:$0xff]
        %v2043 = vld [vmem:[%s1988 + $0x1b0] sm:$0xff]
        %v2044 = vld [vmem:[%s1988 + $0x1b8] sm:$0xff]
        %v2045 = vld [vmem:[%s1988 + $0x1c0] sm:$0xff]
        %v2046 = vld [vmem:[%s1988 + $0x1c8] sm:$0xff]
        %v2047 = vld [vmem:[%s1988 + $0x1d0] sm:$0xff]
        %v2048 = vld [vmem:[%s1988 + $0x1d8] sm:$0xff]
        %v2049 = vld [vmem:[%s1988 + $0x1e0] sm:$0xff]
        %v2050 = vld [vmem:[%s1988 + $0x1e8] sm:$0xff]
        %v2051 = vld [vmem:[%s1988 + $0x1f0] sm:$0xff]
        %v2052 = vld [vmem:[%s1988 + $0x1f8] sm:$0xff]
        %v2053 = vld [vmem:[%s1988 + $0x200] sm:$0xff]
        %v2054 = vld [vmem:[%s1988 + $0x208] sm:$0xff]
        %v2055 = vld [vmem:[%s1988 + $0x210] sm:$0xff]
        %v2056 = vld [vmem:[%s1988 + $0x218] sm:$0xff]
        %v2057 = vld [vmem:[%s1988 + $0x220] sm:$0xff]
        %v2058 = vld [vmem:[%s1988 + $0x228] sm:$0xff]
        %v2059 = vld [vmem:[%s1988 + $0x230] sm:$0xff]
        %v2060 = vld [vmem:[%s1988 + $0x238] sm:$0xff]
        %v2061 = vld [vmem:[%s1988 + $0x240] sm:$0xff]
        %v2062 = vld [vmem:[%s1988 + $0x248] sm:$0xff]
        %v2063 = vld [vmem:[%s1988 + $0x250] sm:$0xff]
        %v2064 = vld [vmem:[%s1988 + $0x258] sm:$0xff]
        %v2065 = vld [vmem:[%s1988 + $0x260] sm:$0xff]
        %v2066 = vld [vmem:[%s1988 + $0x268] sm:$0xff]
        %v2067 = vld [vmem:[%s1988 + $0x270] sm:$0xff]
        %v2068 = vld [vmem:[%s1988 + $0x278] sm:$0xff]
        %v2069 = vld [vmem:[%s1988 + $0x280] sm:$0xff]
        %v2070 = vld [vmem:[%s1988 + $0x288] sm:$0xff]
        %v2071 = vld [vmem:[%s1988 + $0x290] sm:$0xff]
        %v2072 = vld [vmem:[%s1988 + $0x298] sm:$0xff]
        %v2073 = vld [vmem:[%s1988 + $0x2a0] sm:$0xff]
        %v2074 = vld [vmem:[%s1988 + $0x2a8] sm:$0xff]
        %v2075 = vld [vmem:[%s1988 + $0x2b0] sm:$0xff]
        %v2076 = vld [vmem:[%s1988 + $0x2b8] sm:$0xff]
        %v2077 = vld [vmem:[%s1988 + $0x2c0] sm:$0xff]
        %v2078 = vld [vmem:[%s1988 + $0x2c8] sm:$0xff]
        %v2079 = vld [vmem:[%s1988 + $0x2d0] sm:$0xff]
        %v2080 = vld [vmem:[%s1988 + $0x2d8] sm:$0xff]
        %v2081 = vld [vmem:[%s1988 + $0x2e0] sm:$0xff]
        %v2082 = vld [vmem:[%s1988 + $0x2e8] sm:$0xff]
        %v2083 = vld [vmem:[%s1988 + $0x2f0] sm:$0xff]
        %v2084 = vld [vmem:[%s1988 + $0x2f8] sm:$0xff]
        %v2085 = vld [vmem:[%s1988 + $0x300] sm:$0xff]
        %v2086 = vld [vmem:[%s1988 + $0x308] sm:$0xff]
        %v2087 = vld [vmem:[%s1988 + $0x310] sm:$0xff]
        %v2088 = vld [vmem:[%s1988 + $0x318] sm:$0xff]
        %v2089 = vld [vmem:[%s1988 + $0x320] sm:$0xff]
        %v2090 = vld [vmem:[%s1988 + $0x328] sm:$0xff]
        %v2091 = vld [vmem:[%s1988 + $0x330] sm:$0xff]
        %v2092 = vld [vmem:[%s1988 + $0x338] sm:$0xff]
        %v2093 = vld [vmem:[%s1988 + $0x340] sm:$0xff]
        %v2094 = vld [vmem:[%s1988 + $0x348] sm:$0xff]
        %v2095 = vld [vmem:[%s1988 + $0x350] sm:$0xff]
        %v2096 = vld [vmem:[%s1988 + $0x358] sm:$0xff]
        %v2097 = vld [vmem:[%s1988 + $0x360] sm:$0xff]
        %v2098 = vld [vmem:[%s1988 + $0x368] sm:$0xff]
        %v2099 = vld [vmem:[%s1988 + $0x370] sm:$0xff]
        %v2100 = vld [vmem:[%s1988 + $0x378] sm:$0xff]
        %v2101 = vld [vmem:[%s1988 + $0x380] sm:$0xff]
        %v2102 = vld [vmem:[%s1988 + $0x388] sm:$0xff]
        %v2103 = vld [vmem:[%s1988 + $0x390] sm:$0xff]
        %v2104 = vld [vmem:[%s1988 + $0x398] sm:$0xff]
        %v2105 = vld [vmem:[%s1988 + $0x3a0] sm:$0xff]
        %v2106 = vld [vmem:[%s1988 + $0x3a8] sm:$0xff]
        %v2107 = vld [vmem:[%s1988 + $0x3b0] sm:$0xff]
        %v2108 = vld [vmem:[%s1988 + $0x3b8] sm:$0xff]
        %v2109 = vld [vmem:[%s1988 + $0x3c0] sm:$0xff]
        %v2110 = vld [vmem:[%s1988 + $0x3c8] sm:$0xff]
        %v2111 = vld [vmem:[%s1988 + $0x3d0] sm:$0xff]
        %v2112 = vld [vmem:[%s1988 + $0x3d8] sm:$0xff]
        %v2113 = vld [vmem:[%s1988 + $0x3e0] sm:$0xff]
        %v2114 = vld [vmem:[%s1988 + $0x3e8] sm:$0xff]
        %v2115 = vld [vmem:[%s1988 + $0x3f0] sm:$0xff]
        %v2116 = vld [vmem:[%s1988 + $0x3f8] sm:$0xff]
        %v2117 = vld [vmem:[%s1988 + $0x400] sm:$0xff]
        %v2118 = vld [vmem:[%s1988 + $0x408] sm:$0xff]
        %v2119 = vld [vmem:[%s1988 + $0x410] sm:$0xff]
        %v2120 = vld [vmem:[%s1988 + $0x418] sm:$0xff]
        %v2121 = vld [vmem:[%s1988 + $0x420] sm:$0xff]
        %v2122 = vld [vmem:[%s1988 + $0x428] sm:$0xff]
        %v2123 = vld [vmem:[%s1988 + $0x430] sm:$0xff]
        %v2124 = vld [vmem:[%s1988 + $0x438] sm:$0xff]
        %v2125 = vld [vmem:[%s1988 + $0x440] sm:$0xff]
        %v2126 = vld [vmem:[%s1988 + $0x448] sm:$0xff]
        %v2127 = vld [vmem:[%s1988 + $0x450] sm:$0xff]
        %v2128 = vld [vmem:[%s1988 + $0x458] sm:$0xff]
        %v2129 = vld [vmem:[%s1988 + $0x460] sm:$0xff]
        %v2130 = vld [vmem:[%s1988 + $0x468] sm:$0xff]
        %v2131 = vld [vmem:[%s1988 + $0x470] sm:$0xff]
        %v2132 = vld [vmem:[%s1988 + $0x478] sm:$0xff]
        %v2133 = vld [vmem:[%s1988 + $0x480] sm:$0xff]
        %v2134 = vld [vmem:[%s1988 + $0x488] sm:$0xff]
        %v2135 = vld [vmem:[%s1988 + $0x490] sm:$0xff]
        %v2136 = vld [vmem:[%s1988 + $0x498] sm:$0xff]
        %v2137 = vld [vmem:[%s1988 + $0x4a0] sm:$0xff]
        %v2138 = vld [vmem:[%s1988 + $0x4a8] sm:$0xff]
        %v2139 = vld [vmem:[%s1988 + $0x4b0] sm:$0xff]
        %v2140 = vld [vmem:[%s1988 + $0x4b8] sm:$0xff]
        %v2141 = vld [vmem:[%s1988 + $0x4c0] sm:$0xff]
        %v2142 = vld [vmem:[%s1988 + $0x4c8] sm:$0xff]
        %v2143 = vld [vmem:[%s1988 + $0x4d0] sm:$0xff]
        %v2144 = vld [vmem:[%s1988 + $0x4d8] sm:$0xff]
        %v2145 = vld [vmem:[%s1988 + $0x4e0] sm:$0xff]
        %v2146 = vld [vmem:[%s1988 + $0x4e8] sm:$0xff]
        %v2147 = vld [vmem:[%s1988 + $0x4f0] sm:$0xff]
        %v2148 = vld [vmem:[%s1988 + $0x4f8] sm:$0xff]
        %v2149 = vld [vmem:[%s1988 + $0x500] sm:$0xff]
        %v2150 = vld [vmem:[%s1988 + $0x508] sm:$0xff]
        %v2151 = vld [vmem:[%s1988 + $0x510] sm:$0xff]
        %v2152 = vld [vmem:[%s1988 + $0x518] sm:$0xff]
        %v2153 = vld [vmem:[%s1988 + $0x520] sm:$0xff]
        %v2154 = vld [vmem:[%s1988 + $0x528] sm:$0xff]
        %v2155 = vld [vmem:[%s1988 + $0x530] sm:$0xff]
        %v2156 = vld [vmem:[%s1988 + $0x538] sm:$0xff]
        %v2157 = vld [vmem:[%s1988 + $0x540] sm:$0xff]
        %v2158 = vld [vmem:[%s1988 + $0x548] sm:$0xff]
        %v2159 = vld [vmem:[%s1988 + $0x550] sm:$0xff]
        %v2160 = vld [vmem:[%s1988 + $0x558] sm:$0xff]
        %v2161 = vld [vmem:[%s1988 + $0x560] sm:$0xff]
        %v2162 = vld [vmem:[%s1988 + $0x568] sm:$0xff]
        %v2163 = vld [vmem:[%s1988 + $0x570] sm:$0xff]
        %v2164 = vld [vmem:[%s1988 + $0x578] sm:$0xff]
        %v2165 = vld [vmem:[%s1988 + $0x580] sm:$0xff]
        %v2166 = vld [vmem:[%s1988 + $0x588] sm:$0xff]
        %v2167 = vld [vmem:[%s1988 + $0x590] sm:$0xff]
        %v2168 = vld [vmem:[%s1988 + $0x598] sm:$0xff]
        %v2169 = vld [vmem:[%s1988 + $0x5a0] sm:$0xff]
        %v2170 = vld [vmem:[%s1988 + $0x5a8] sm:$0xff]
        %v2171 = vld [vmem:[%s1988 + $0x5b0] sm:$0xff]
        %v2172 = vld [vmem:[%s1988 + $0x5b8] sm:$0xff]
        %v2173 = vld [vmem:[%s1988 + $0x5c0] sm:$0xff]
        %v2174 = vld [vmem:[%s1988 + $0x5c8] sm:$0xff]
        %v2175 = vld [vmem:[%s1988 + $0x5d0] sm:$0xff]
        %v2176 = vld [vmem:[%s1988 + $0x5d8] sm:$0xff]
        %v2177 = vld [vmem:[%s1988 + $0x5e0] sm:$0xff]
        %v2178 = vld [vmem:[%s1988 + $0x5e8] sm:$0xff]
        %v2179 = vld [vmem:[%s1988 + $0x5f0] sm:$0xff]
        %v2180 = vld [vmem:[%s1988 + $0x5f8] sm:$0xff]
        %v2181 = vld [vmem:[%s1988 + $0x600] sm:$0xff]
        %v2182 = vld [vmem:[%s1988 + $0x608] sm:$0xff]
        %v2183 = vld [vmem:[%s1988 + $0x610] sm:$0xff]
        %v2184 = vld [vmem:[%s1988 + $0x618] sm:$0xff]
        %v2185 = vld [vmem:[%s1988 + $0x620] sm:$0xff]
        %v2186 = vld [vmem:[%s1988 + $0x628] sm:$0xff]
        %v2187 = vld [vmem:[%s1988 + $0x630] sm:$0xff]
        %v2188 = vld [vmem:[%s1988 + $0x638] sm:$0xff]
        %v2189 = vld [vmem:[%s1988 + $0x640] sm:$0xff]
        %v2190 = vld [vmem:[%s1988 + $0x648] sm:$0xff]
        %v2191 = vld [vmem:[%s1988 + $0x650] sm:$0xff]
        %v2192 = vld [vmem:[%s1988 + $0x658] sm:$0xff]
        %v2193 = vld [vmem:[%s1988 + $0x660] sm:$0xff]
        %v2194 = vld [vmem:[%s1988 + $0x668] sm:$0xff]
        %v2195 = vld [vmem:[%s1988 + $0x670] sm:$0xff]
        %v2196 = vld [vmem:[%s1988 + $0x678] sm:$0xff]
        %v2197 = vld [vmem:[%s1988 + $0x680] sm:$0xff]
        %v2198 = vld [vmem:[%s1988 + $0x688] sm:$0xff]
        %v2199 = vld [vmem:[%s1988 + $0x690] sm:$0xff]
        %v2200 = vld [vmem:[%s1988 + $0x698] sm:$0xff]
        %v2201 = vld [vmem:[%s1988 + $0x6a0] sm:$0xff]
        %v2202 = vld [vmem:[%s1988 + $0x6a8] sm:$0xff]
        %v2203 = vld [vmem:[%s1988 + $0x6b0] sm:$0xff]
        %v2204 = vld [vmem:[%s1988 + $0x6b8] sm:$0xff]
        %v2205 = vld [vmem:[%s1988 + $0x6c0] sm:$0xff]
        %v2206 = vld [vmem:[%s1988 + $0x6c8] sm:$0xff]
        %v2207 = vld [vmem:[%s1988 + $0x6d0] sm:$0xff]
        %v2208 = vld [vmem:[%s1988 + $0x6d8] sm:$0xff]
        %v2209 = vld [vmem:[%s1988 + $0x6e0] sm:$0xff]
        %v2210 = vld [vmem:[%s1988 + $0x6e8] sm:$0xff]
        %v2211 = vld [vmem:[%s1988 + $0x6f0] sm:$0xff]
        %v2212 = vld [vmem:[%s1988 + $0x6f8] sm:$0xff]
        %v2213 = vld [vmem:[%s1988 + $0x700] sm:$0xff]
        %v2214 = vld [vmem:[%s1988 + $0x708] sm:$0xff]
        %v2215 = vld [vmem:[%s1988 + $0x710] sm:$0xff]
        %v2216 = vld [vmem:[%s1988 + $0x718] sm:$0xff]
        %v2217 = vld [vmem:[%s1988 + $0x720] sm:$0xff]
        %v2218 = vld [vmem:[%s1988 + $0x728] sm:$0xff]
        %v2219 = vld [vmem:[%s1988 + $0x730] sm:$0xff]
        %v2220 = vld [vmem:[%s1988 + $0x738] sm:$0xff]
        %v2221 = vld [vmem:[%s1988 + $0x740] sm:$0xff]
        %v2222 = vld [vmem:[%s1988 + $0x748] sm:$0xff]
        %v2223 = vld [vmem:[%s1988 + $0x750] sm:$0xff]
        %v2224 = vld [vmem:[%s1988 + $0x758] sm:$0xff]
        %v2225 = vld [vmem:[%s1988 + $0x760] sm:$0xff]
        %v2226 = vld [vmem:[%s1988 + $0x768] sm:$0xff]
        %v2227 = vld [vmem:[%s1988 + $0x770] sm:$0xff]
        %v2228 = vld [vmem:[%s1988 + $0x778] sm:$0xff]
        %v2229 = vld [vmem:[%s1988 + $0x780] sm:$0xff]
        %v2230 = vld [vmem:[%s1988 + $0x788] sm:$0xff]
        %v2231 = vld [vmem:[%s1988 + $0x790] sm:$0xff]
        %v2232 = vld [vmem:[%s1988 + $0x798] sm:$0xff]
        %v2233 = vld [vmem:[%s1988 + $0x7a0] sm:$0xff]
        %v2234 = vld [vmem:[%s1988 + $0x7a8] sm:$0xff]
        %v2235 = vld [vmem:[%s1988 + $0x7b0] sm:$0xff]
        %v2236 = vld [vmem:[%s1988 + $0x7b8] sm:$0xff]
        %v2237 = vld [vmem:[%s1988 + $0x7c0] sm:$0xff]
        %v2238 = vld [vmem:[%s1988 + $0x7c8] sm:$0xff]
        %v2239 = vld [vmem:[%s1988 + $0x7d0] sm:$0xff]
        %v2240 = vld [vmem:[%s1988 + $0x7d8] sm:$0xff]
        %v2241 = vld [vmem:[%s1988 + $0x7e0] sm:$0xff]
        %v2242 = vld [vmem:[%s1988 + $0x7e8] sm:$0xff]
        %v2243 = vld [vmem:[%s1988 + $0x7f0] sm:$0xff]
        %v2244 = vld [vmem:[%s1988 + $0x7f8] sm:$0xff]
        %2245 = vmatprep.subr.mxu0 %v1990
        %2246 = vmatpush1.msra.mxu0 %v1989
        %2247 = vmatprep.subr.mxu0 %v1994
        %2248 = vmatpush1.msra.mxu0 %v1993
        %2249 = vmatprep.subr.mxu0 %v1998
        %2250 = vmatpush1.msra.mxu0 %v1997
        %2251 = vmatprep.subr.mxu0 %v2002
        %2252 = vmatpush1.msra.mxu0 %v2001
        %2253 = vmatprep.subr.mxu0 %v2006
        %2254 = vmatpush1.msra.mxu0 %v2005
        %2255 = vmatprep.subr.mxu0 %v2010
        %2256 = vmatpush1.msra.mxu0 %v2009
        %2257 = vmatprep.subr.mxu0 %v2014
        %2258 = vmatpush1.msra.mxu0 %v2013
        %2259 = vmatprep.subr.mxu0 %v2018
        %2260 = vmatpush1.msra.mxu0 %v2017
        %2261 = vmatprep.subr.mxu0 %v2022
        %2262 = vmatpush1.msra.mxu0 %v2021
        %2263 = vmatprep.subr.mxu0 %v2026
        %2264 = vmatpush1.msra.mxu0 %v2025
        %2265 = vmatprep.subr.mxu0 %v2030
        %2266 = vmatpush1.msra.mxu0 %v2029
        %2267 = vmatprep.subr.mxu0 %v2034
        %2268 = vmatpush1.msra.mxu0 %v2033
        %2269 = vmatprep.subr.mxu0 %v2038
        %2270 = vmatpush1.msra.mxu0 %v2037
        %2271 = vmatprep.subr.mxu0 %v2042
        %2272 = vmatpush1.msra.mxu0 %v2041
        %2273 = vmatprep.subr.mxu0 %v2046
        %2274 = vmatpush1.msra.mxu0 %v2045
        %2275 = vmatprep.subr.mxu0 %v2050
        %2276 = vmatpush1.msra.mxu0 %v2049
        %2277 = vmatprep.subr.mxu0 %v2054
        %2278 = vmatpush1.msra.mxu0 %v2053
        %2279 = vmatprep.subr.mxu0 %v2058
        %2280 = vmatpush1.msra.mxu0 %v2057
        %2281 = vmatprep.subr.mxu0 %v2062
        %2282 = vmatpush1.msra.mxu0 %v2061
        %2283 = vmatprep.subr.mxu0 %v2066
        %2284 = vmatpush1.msra.mxu0 %v2065
        %2285 = vmatprep.subr.mxu0 %v2070
        %2286 = vmatpush1.msra.mxu0 %v2069
        %2287 = vmatprep.subr.mxu0 %v2074
        %2288 = vmatpush1.msra.mxu0 %v2073
        %2289 = vmatprep.subr.mxu0 %v2078
        %2290 = vmatpush1.msra.mxu0 %v2077
        %2291 = vmatprep.subr.mxu0 %v2082
        %2292 = vmatpush1.msra.mxu0 %v2081
        %2293 = vmatprep.subr.mxu0 %v2086
        %2294 = vmatpush1.msra.mxu0 %v2085
        %2295 = vmatprep.subr.mxu0 %v2090
        %2296 = vmatpush1.msra.mxu0 %v2089
        %2297 = vmatprep.subr.mxu0 %v2094
        %2298 = vmatpush1.msra.mxu0 %v2093
        %2299 = vmatprep.subr.mxu0 %v2098
        %2300 = vmatpush1.msra.mxu0 %v2097
        %2301 = vmatprep.subr.mxu0 %v2102
        %2302 = vmatpush1.msra.mxu0 %v2101
        %2303 = vmatprep.subr.mxu0 %v2106
        %2304 = vmatpush1.msra.mxu0 %v2105
        %2305 = vmatprep.subr.mxu0 %v2110
        %2306 = vmatpush1.msra.mxu0 %v2109
        %2307 = vmatprep.subr.mxu0 %v2114
        %2308 = vmatpush1.msra.mxu0 %v2113
        %2309 = vmatprep.mubr.f32.mxu0 %v1903
        %2310 = vmatmul.mubr.f32.gmra.mrb[0].mxu0 %v1901
        %v2311 = vpop.f32.mrb[0].mxu0
        %v2312 = vadd.f32 0.0, %v2311
        %v2313 = vpop.f32.mrb[0].mxu0
        %v2314 = vadd.f32 0.0, %v2313
        %2315 = vmatprep.mubr.f32.mxu0 %v1909
        %2316 = vmatmul.mubr.f32.gmra.mrb[0].mxu0 %v1907
        %v2317 = vpop.f32.mrb[0].mxu0
        %v2318 = vadd.f32 0.0, %v2317
        %v2319 = vpop.f32.mrb[0].mxu0
        %v2320 = vadd.f32 0.0, %v2319
        %2321 = vdwg.mxu0
        %2322 = vmatprep.subr.mxu0 %v2118
        %2323 = vmatpush1.msra.mxu0 %v2117
        %2324 = vmatprep.subr.mxu0 %v2122
        %2325 = vmatpush1.msra.mxu0 %v2121
        %2326 = vmatprep.subr.mxu0 %v2126
        %2327 = vmatpush1.msra.mxu0 %v2125
        %2328 = vmatprep.subr.mxu0 %v2130
        %2329 = vmatpush1.msra.mxu0 %v2129
        %2330 = vmatprep.subr.mxu0 %v2134
        %2331 = vmatpush1.msra.mxu0 %v2133
        %2332 = vmatprep.subr.mxu0 %v2138
        %2333 = vmatpush1.msra.mxu0 %v2137
        %2334 = vmatprep.subr.mxu0 %v2142
        %2335 = vmatpush1.msra.mxu0 %v2141
        %2336 = vmatprep.subr.mxu0 %v2146
        %2337 = vmatpush1.msra.mxu0 %v2145
        %2338 = vmatprep.subr.mxu0 %v2150
        %2339 = vmatpush1.msra.mxu0 %v2149
        %2340 = vmatprep.subr.mxu0 %v2154
        %2341 = vmatpush1.msra.mxu0 %v2153
        %2342 = vmatprep.subr.mxu0 %v2158
        %2343 = vmatpush1.msra.mxu0 %v2157
        %2344 = vmatprep.subr.mxu0 %v2162
        %2345 = vmatpush1.msra.mxu0 %v2161
        %2346 = vmatprep.subr.mxu0 %v2166
        %2347 = vmatpush1.msra.mxu0 %v2165
        %2348 = vmatprep.subr.mxu0 %v2170
        %2349 = vmatpush1.msra.mxu0 %v2169
        %2350 = vmatprep.subr.mxu0 %v2174
        %2351 = vmatpush1.msra.mxu0 %v2173
        %2352 = vmatprep.subr.mxu0 %v2178
        %2353 = vmatpush1.msra.mxu0 %v2177
        %2354 = vmatprep.subr.mxu0 %v2182
        %2355 = vmatpush1.msra.mxu0 %v2181
        %2356 = vmatprep.subr.mxu0 %v2186
        %2357 = vmatpush1.msra.mxu0 %v2185
        %2358 = vmatprep.subr.mxu0 %v2190
        %2359 = vmatpush1.msra.mxu0 %v2189
        %2360 = vmatprep.subr.mxu0 %v2194
        %2361 = vmatpush1.msra.mxu0 %v2193
        %2362 = vmatprep.subr.mxu0 %v2198
        %2363 = vmatpush1.msra.mxu0 %v2197
        %2364 = vmatprep.subr.mxu0 %v2202
        %2365 = vmatpush1.msra.mxu0 %v2201
        %2366 = vmatprep.subr.mxu0 %v2206
        %2367 = vmatpush1.msra.mxu0 %v2205
        %2368 = vmatprep.subr.mxu0 %v2210
        %2369 = vmatpush1.msra.mxu0 %v2209
        %2370 = vmatprep.subr.mxu0 %v2214
        %2371 = vmatpush1.msra.mxu0 %v2213
        %2372 = vmatprep.subr.mxu0 %v2218
        %2373 = vmatpush1.msra.mxu0 %v2217
        %2374 = vmatprep.subr.mxu0 %v2222
        %2375 = vmatpush1.msra.mxu0 %v2221
        %2376 = vmatprep.subr.mxu0 %v2226
        %2377 = vmatpush1.msra.mxu0 %v2225
        %2378 = vmatprep.subr.mxu0 %v2230
        %2379 = vmatpush1.msra.mxu0 %v2229
        %2380 = vmatprep.subr.mxu0 %v2234
        %2381 = vmatpush1.msra.mxu0 %v2233
        %2382 = vmatprep.subr.mxu0 %v2238
        %2383 = vmatpush1.msra.mxu0 %v2237
        %2384 = vmatprep.subr.mxu0 %v2242
        %2385 = vmatpush1.msra.mxu0 %v2241
        %2386 = vmatprep.mubr.f32.mxu0 %v1980
        %2387 = vmatmul.mubr.f32.gmra.mrb[0].mxu0 %v1978
        %v2388 = vpop.f32.mrb[0].mxu0
        %v2389 = vadd.f32 %v2312, %v2388
        %v2390 = vpop.f32.mrb[0].mxu0
        %v2391 = vadd.f32 %v2314, %v2390
        %2392 = vmatprep.mubr.f32.mxu0 %v1986
        %2393 = vmatmul.mubr.f32.gmra.mrb[0].mxu0 %v1984
        %v2394 = vpop.f32.mrb[0].mxu0
        %v2395 = vadd.f32 %v2318, %v2394
        %v2396 = vpop.f32.mrb[0].mxu0
        %v2397 = vadd.f32 %v2320, %v2396
        %2398 = vdwg.mxu0
        %2399 = vmatprep.subr.mxu0 %v1992
        %2400 = vmatpush1.msra.mxu0 %v1991
        %2401 = vmatprep.subr.mxu0 %v1996
        %2402 = vmatpush1.msra.mxu0 %v1995
        %2403 = vmatprep.subr.mxu0 %v2000
        %2404 = vmatpush1.msra.mxu0 %v1999
        %2405 = vmatprep.subr.mxu0 %v2004
        %2406 = vmatpush1.msra.mxu0 %v2003
        %2407 = vmatprep.subr.mxu0 %v2008
        %2408 = vmatpush1.msra.mxu0 %v2007
        %2409 = vmatprep.subr.mxu0 %v2012
        %2410 = vmatpush1.msra.mxu0 %v2011
        %2411 = vmatprep.subr.mxu0 %v2016
        %2412 = vmatpush1.msra.mxu0 %v2015
        %2413 = vmatprep.subr.mxu0 %v2020
        %2414 = vmatpush1.msra.mxu0 %v2019
        %2415 = vmatprep.subr.mxu0 %v2024
        %2416 = vmatpush1.msra.mxu0 %v2023
        %2417 = vmatprep.subr.mxu0 %v2028
        %2418 = vmatpush1.msra.mxu0 %v2027
        %2419 = vmatprep.subr.mxu0 %v2032
        %2420 = vmatpush1.msra.mxu0 %v2031
        %2421 = vmatprep.subr.mxu0 %v2036
        %2422 = vmatpush1.msra.mxu0 %v2035
        %2423 = vmatprep.subr.mxu0 %v2040
        %2424 = vmatpush1.msra.mxu0 %v2039
        %2425 = vmatprep.subr.mxu0 %v2044
        %2426 = vmatpush1.msra.mxu0 %v2043
        %2427 = vmatprep.subr.mxu0 %v2048
        %2428 = vmatpush1.msra.mxu0 %v2047
        %2429 = vmatprep.subr.mxu0 %v2052
        %2430 = vmatpush1.msra.mxu0 %v2051
        %2431 = vmatprep.subr.mxu0 %v2056
        %2432 = vmatpush1.msra.mxu0 %v2055
        %2433 = vmatprep.subr.mxu0 %v2060
        %2434 = vmatpush1.msra.mxu0 %v2059
        %2435 = vmatprep.subr.mxu0 %v2064
        %2436 = vmatpush1.msra.mxu0 %v2063
        %2437 = vmatprep.subr.mxu0 %v2068
        %2438 = vmatpush1.msra.mxu0 %v2067
        %2439 = vmatprep.subr.mxu0 %v2072
        %2440 = vmatpush1.msra.mxu0 %v2071
        %2441 = vmatprep.subr.mxu0 %v2076
        %2442 = vmatpush1.msra.mxu0 %v2075
        %2443 = vmatprep.subr.mxu0 %v2080
        %2444 = vmatpush1.msra.mxu0 %v2079
        %2445 = vmatprep.subr.mxu0 %v2084
        %2446 = vmatpush1.msra.mxu0 %v2083
        %2447 = vmatprep.subr.mxu0 %v2088
        %2448 = vmatpush1.msra.mxu0 %v2087
        %2449 = vmatprep.subr.mxu0 %v2092
        %2450 = vmatpush1.msra.mxu0 %v2091
        %2451 = vmatprep.subr.mxu0 %v2096
        %2452 = vmatpush1.msra.mxu0 %v2095
        %2453 = vmatprep.subr.mxu0 %v2100
        %2454 = vmatpush1.msra.mxu0 %v2099
        %2455 = vmatprep.subr.mxu0 %v2104
        %2456 = vmatpush1.msra.mxu0 %v2103
        %2457 = vmatprep.subr.mxu0 %v2108
        %2458 = vmatpush1.msra.mxu0 %v2107
        %2459 = vmatprep.subr.mxu0 %v2112
        %2460 = vmatpush1.msra.mxu0 %v2111
        %2461 = vmatprep.subr.mxu0 %v2116
        %2462 = vmatpush1.msra.mxu0 %v2115
        %2463 = vmatprep.mubr.f32.mxu0 %v1903
        %2464 = vmatmul.mubr.f32.gmra.mrb[0].mxu0 %v1901
        %v2465 = vpop.f32.mrb[0].mxu0
        %v2466 = vadd.f32 0.0, %v2465
        %v2467 = vpop.f32.mrb[0].mxu0
        %v2468 = vadd.f32 0.0, %v2467
        %2469 = vmatprep.mubr.f32.mxu0 %v1909
        %2470 = vmatmul.mubr.f32.gmra.mrb[0].mxu0 %v1907
        %v2471 = vpop.f32.mrb[0].mxu0
        %v2472 = vadd.f32 0.0, %v2471
        %v2473 = vpop.f32.mrb[0].mxu0
        %v2474 = vadd.f32 0.0, %v2473
        %2475 = vdwg.mxu0
        %2476 = vmatprep.subr.mxu0 %v2120
        %2477 = vmatpush1.msra.mxu0 %v2119
        %2478 = vmatprep.subr.mxu0 %v2124
        %2479 = vmatpush1.msra.mxu0 %v2123
        %2480 = vmatprep.subr.mxu0 %v2128
        %2481 = vmatpush1.msra.mxu0 %v2127
        %2482 = vmatprep.subr.mxu0 %v2132
        %2483 = vmatpush1.msra.mxu0 %v2131
        %2484 = vmatprep.subr.mxu0 %v2136
        %2485 = vmatpush1.msra.mxu0 %v2135
        %2486 = vmatprep.subr.mxu0 %v2140
        %2487 = vmatpush1.msra.mxu0 %v2139
        %2488 = vmatprep.subr.mxu0 %v2144
        %2489 = vmatpush1.msra.mxu0 %v2143
        %2490 = vmatprep.subr.mxu0 %v2148
        %2491 = vmatpush1.msra.mxu0 %v2147
        %2492 = vmatprep.subr.mxu0 %v2152
        %2493 = vmatpush1.msra.mxu0 %v2151
        %2494 = vmatprep.subr.mxu0 %v2156
        %2495 = vmatpush1.msra.mxu0 %v2155
        %2496 = vmatprep.subr.mxu0 %v2160
        %2497 = vmatpush1.msra.mxu0 %v2159
        %2498 = vmatprep.subr.mxu0 %v2164
        %2499 = vmatpush1.msra.mxu0 %v2163
        %2500 = vmatprep.subr.mxu0 %v2168
        %2501 = vmatpush1.msra.mxu0 %v2167
        %2502 = vmatprep.subr.mxu0 %v2172
        %2503 = vmatpush1.msra.mxu0 %v2171
        %2504 = vmatprep.subr.mxu0 %v2176
        %2505 = vmatpush1.msra.mxu0 %v2175
        %2506 = vmatprep.subr.mxu0 %v2180
        %2507 = vmatpush1.msra.mxu0 %v2179
        %2508 = vmatprep.subr.mxu0 %v2184
        %2509 = vmatpush1.msra.mxu0 %v2183
        %2510 = vmatprep.subr.mxu0 %v2188
        %2511 = vmatpush1.msra.mxu0 %v2187
        %2512 = vmatprep.subr.mxu0 %v2192
        %2513 = vmatpush1.msra.mxu0 %v2191
        %2514 = vmatprep.subr.mxu0 %v2196
        %2515 = vmatpush1.msra.mxu0 %v2195
        %2516 = vmatprep.subr.mxu0 %v2200
        %2517 = vmatpush1.msra.mxu0 %v2199
        %2518 = vmatprep.subr.mxu0 %v2204
        %2519 = vmatpush1.msra.mxu0 %v2203
        %2520 = vmatprep.subr.mxu0 %v2208
        %2521 = vmatpush1.msra.mxu0 %v2207
        %2522 = vmatprep.subr.mxu0 %v2212
        %2523 = vmatpush1.msra.mxu0 %v2211
        %2524 = vmatprep.subr.mxu0 %v2216
        %2525 = vmatpush1.msra.mxu0 %v2215
        %2526 = vmatprep.subr.mxu0 %v2220
        %2527 = vmatpush1.msra.mxu0 %v2219
        %2528 = vmatprep.subr.mxu0 %v2224
        %2529 = vmatpush1.msra.mxu0 %v2223
        %2530 = vmatprep.subr.mxu0 %v2228
        %2531 = vmatpush1.msra.mxu0 %v2227
        %2532 = vmatprep.subr.mxu0 %v2232
        %2533 = vmatpush1.msra.mxu0 %v2231
        %2534 = vmatprep.subr.mxu0 %v2236
        %2535 = vmatpush1.msra.mxu0 %v2235
        %2536 = vmatprep.subr.mxu0 %v2240
        %2537 = vmatpush1.msra.mxu0 %v2239
        %2538 = vmatprep.subr.mxu0 %v2244
        %2539 = vmatpush1.msra.mxu0 %v2243
        %2540 = vmatprep.mubr.f32.mxu0 %v1980
        %2541 = vmatmul.mubr.f32.gmra.mrb[0].mxu0 %v1978
        %v2542 = vpop.f32.mrb[0].mxu0
        %v2543 = vadd.f32 %v2466, %v2542
        %v2544 = vpop.f32.mrb[0].mxu0
        %v2545 = vadd.f32 %v2468, %v2544
        %2546 = vmatprep.mubr.f32.mxu0 %v1986
        %2547 = vmatmul.mubr.f32.gmra.mrb[0].mxu0 %v1984
        %v2548 = vpop.f32.mrb[0].mxu0
        %v2549 = vadd.f32 %v2472, %v2548
        %v2550 = vpop.f32.mrb[0].mxu0
        %v2551 = vadd.f32 %v2474, %v2550
        %2552 = vdwg.mxu0
        %v2553 = vadd.f32 %v1662, %v2389
        %v2554 = vadd.f32 %v1664, %v2391
        %v2555 = vadd.f32 %v1816, %v2543
        %v2556 = vadd.f32 %v1818, %v2545
        %v2557 = vadd.f32 %v1668, %v2395
        %v2558 = vadd.f32 %v1670, %v2397
        %v2559 = vadd.f32 %v1822, %v2549
        %v2560 = vadd.f32 %v1824, %v2551
        %v2561 = vld [vmem:[#allocation7] sm:$0xf]
        %v2563 = vlaneseq
        %v2564 = vshrl.u32 %v2563, 7
        %v2565 = vsub.s32 0, %v2564
        %v2566 = vrot.slane %v2561, %v2565
        %v2567 = vlaneseq
        %v2568 = vshrl.u32 %v2567, 7
        %v2569 = vsub.s32 1, %v2568
        %v2570 = vrot.slane %v2561, %v2569
        %v2571 = vlaneseq
        %v2572 = vshrl.u32 %v2571, 7
        %v2573 = vsub.s32 2, %v2572
        %v2574 = vrot.slane %v2561, %v2573
        %v2575 = vlaneseq
        %v2576 = vshrl.u32 %v2575, 7
        %v2577 = vsub.s32 3, %v2576
        %v2578 = vrot.slane %v2561, %v2577
        %v2583 = vadd.f32 %v2553, %v2566
        %v2584 = vadd.f32 %v2554, %v2570
        %v2585 = vadd.f32 %v2555, %v2574
        %v2586 = vadd.f32 %v2556, %v2578
        %v2587 = vadd.f32 %v2557, %v2566
        %v2588 = vadd.f32 %v2558, %v2570
        %v2589 = vadd.f32 %v2559, %v2574
        %v2590 = vadd.f32 %v2560, %v2578
        %v2591 = vmax.f32 %v2583, 0.0
        %v2592 = vmax.f32 %v2584, 0.0
        %v2593 = vmax.f32 %v2585, 0.0
        %v2594 = vmax.f32 %v2586, 0.0
        %v2595 = vmax.f32 %v2587, 0.0
        %v2596 = vmax.f32 %v2588, 0.0
        %v2597 = vmax.f32 %v2589, 0.0
        %v2598 = vmax.f32 %v2590, 0.0
        %s2599 = scalar_lea.vmem [#allocation8], 2048
        %v2600 = vld [vmem:[%s2599] sm:$0xff]
        %v2601 = vld [vmem:[%s2599 + $0x8] sm:$0xff]
        %v2602 = vld [vmem:[%s2599 + $0x10] sm:$0xff]
        %v2603 = vld [vmem:[%s2599 + $0x18] sm:$0xff]
        %v2604 = vld [vmem:[%s2599 + $0x20] sm:$0xff]
        %v2605 = vld [vmem:[%s2599 + $0x28] sm:$0xff]
        %v2606 = vld [vmem:[%s2599 + $0x30] sm:$0xff]
        %v2607 = vld [vmem:[%s2599 + $0x38] sm:$0xff]
        %v2608 = vld [vmem:[%s2599 + $0x40] sm:$0xff]
        %v2609 = vld [vmem:[%s2599 + $0x48] sm:$0xff]
        %v2610 = vld [vmem:[%s2599 + $0x50] sm:$0xff]
        %v2611 = vld [vmem:[%s2599 + $0x58] sm:$0xff]
        %v2612 = vld [vmem:[%s2599 + $0x60] sm:$0xff]
        %v2613 = vld [vmem:[%s2599 + $0x68] sm:$0xff]
        %v2614 = vld [vmem:[%s2599 + $0x70] sm:$0xff]
        %v2615 = vld [vmem:[%s2599 + $0x78] sm:$0xff]
        %v2616 = vld [vmem:[%s2599 + $0x80] sm:$0xff]
        %v2617 = vld [vmem:[%s2599 + $0x88] sm:$0xff]
        %v2618 = vld [vmem:[%s2599 + $0x90] sm:$0xff]
        %v2619 = vld [vmem:[%s2599 + $0x98] sm:$0xff]
        %v2620 = vld [vmem:[%s2599 + $0xa0] sm:$0xff]
        %v2621 = vld [vmem:[%s2599 + $0xa8] sm:$0xff]
        %v2622 = vld [vmem:[%s2599 + $0xb0] sm:$0xff]
        %v2623 = vld [vmem:[%s2599 + $0xb8] sm:$0xff]
        %v2624 = vld [vmem:[%s2599 + $0xc0] sm:$0xff]
        %v2625 = vld [vmem:[%s2599 + $0xc8] sm:$0xff]
        %v2626 = vld [vmem:[%s2599 + $0xd0] sm:$0xff]
        %v2627 = vld [vmem:[%s2599 + $0xd8] sm:$0xff]
        %v2628 = vld [vmem:[%s2599 + $0xe0] sm:$0xff]
        %v2629 = vld [vmem:[%s2599 + $0xe8] sm:$0xff]
        %v2630 = vld [vmem:[%s2599 + $0xf0] sm:$0xff]
        %v2631 = vld [vmem:[%s2599 + $0xf8] sm:$0xff]
        %v2632 = vld [vmem:[%s2599 + $0x100] sm:$0xff]
        %v2633 = vld [vmem:[%s2599 + $0x108] sm:$0xff]
        %v2634 = vld [vmem:[%s2599 + $0x110] sm:$0xff]
        %v2635 = vld [vmem:[%s2599 + $0x118] sm:$0xff]
        %v2636 = vld [vmem:[%s2599 + $0x120] sm:$0xff]
        %v2637 = vld [vmem:[%s2599 + $0x128] sm:$0xff]
        %v2638 = vld [vmem:[%s2599 + $0x130] sm:$0xff]
        %v2639 = vld [vmem:[%s2599 + $0x138] sm:$0xff]
        %v2640 = vld [vmem:[%s2599 + $0x140] sm:$0xff]
        %v2641 = vld [vmem:[%s2599 + $0x148] sm:$0xff]
        %v2642 = vld [vmem:[%s2599 + $0x150] sm:$0xff]
        %v2643 = vld [vmem:[%s2599 + $0x158] sm:$0xff]
        %v2644 = vld [vmem:[%s2599 + $0x160] sm:$0xff]
        %v2645 = vld [vmem:[%s2599 + $0x168] sm:$0xff]
        %v2646 = vld [vmem:[%s2599 + $0x170] sm:$0xff]
        %v2647 = vld [vmem:[%s2599 + $0x178] sm:$0xff]
        %v2648 = vld [vmem:[%s2599 + $0x180] sm:$0xff]
        %v2649 = vld [vmem:[%s2599 + $0x188] sm:$0xff]
        %v2650 = vld [vmem:[%s2599 + $0x190] sm:$0xff]
        %v2651 = vld [vmem:[%s2599 + $0x198] sm:$0xff]
        %v2652 = vld [vmem:[%s2599 + $0x1a0] sm:$0xff]
        %v2653 = vld [vmem:[%s2599 + $0x1a8] sm:$0xff]
        %v2654 = vld [vmem:[%s2599 + $0x1b0] sm:$0xff]
        %v2655 = vld [vmem:[%s2599 + $0x1b8] sm:$0xff]
        %v2656 = vld [vmem:[%s2599 + $0x1c0] sm:$0xff]
        %v2657 = vld [vmem:[%s2599 + $0x1c8] sm:$0xff]
        %v2658 = vld [vmem:[%s2599 + $0x1d0] sm:$0xff]
        %v2659 = vld [vmem:[%s2599 + $0x1d8] sm:$0xff]
        %v2660 = vld [vmem:[%s2599 + $0x1e0] sm:$0xff]
        %v2661 = vld [vmem:[%s2599 + $0x1e8] sm:$0xff]
        %v2662 = vld [vmem:[%s2599 + $0x1f0] sm:$0xff]
        %v2663 = vld [vmem:[%s2599 + $0x1f8] sm:$0xff]
        %v2664 = vld [vmem:[%s2599 + $0x200] sm:$0xff]
        %v2665 = vld [vmem:[%s2599 + $0x208] sm:$0xff]
        %v2666 = vld [vmem:[%s2599 + $0x210] sm:$0xff]
        %v2667 = vld [vmem:[%s2599 + $0x218] sm:$0xff]
        %v2668 = vld [vmem:[%s2599 + $0x220] sm:$0xff]
        %v2669 = vld [vmem:[%s2599 + $0x228] sm:$0xff]
        %v2670 = vld [vmem:[%s2599 + $0x230] sm:$0xff]
        %v2671 = vld [vmem:[%s2599 + $0x238] sm:$0xff]
        %v2672 = vld [vmem:[%s2599 + $0x240] sm:$0xff]
        %v2673 = vld [vmem:[%s2599 + $0x248] sm:$0xff]
        %v2674 = vld [vmem:[%s2599 + $0x250] sm:$0xff]
        %v2675 = vld [vmem:[%s2599 + $0x258] sm:$0xff]
        %v2676 = vld [vmem:[%s2599 + $0x260] sm:$0xff]
        %v2677 = vld [vmem:[%s2599 + $0x268] sm:$0xff]
        %v2678 = vld [vmem:[%s2599 + $0x270] sm:$0xff]
        %v2679 = vld [vmem:[%s2599 + $0x278] sm:$0xff]
        %v2680 = vld [vmem:[%s2599 + $0x280] sm:$0xff]
        %v2681 = vld [vmem:[%s2599 + $0x288] sm:$0xff]
        %v2682 = vld [vmem:[%s2599 + $0x290] sm:$0xff]
        %v2683 = vld [vmem:[%s2599 + $0x298] sm:$0xff]
        %v2684 = vld [vmem:[%s2599 + $0x2a0] sm:$0xff]
        %v2685 = vld [vmem:[%s2599 + $0x2a8] sm:$0xff]
        %v2686 = vld [vmem:[%s2599 + $0x2b0] sm:$0xff]
        %v2687 = vld [vmem:[%s2599 + $0x2b8] sm:$0xff]
        %v2688 = vld [vmem:[%s2599 + $0x2c0] sm:$0xff]
        %v2689 = vld [vmem:[%s2599 + $0x2c8] sm:$0xff]
        %v2690 = vld [vmem:[%s2599 + $0x2d0] sm:$0xff]
        %v2691 = vld [vmem:[%s2599 + $0x2d8] sm:$0xff]
        %v2692 = vld [vmem:[%s2599 + $0x2e0] sm:$0xff]
        %v2693 = vld [vmem:[%s2599 + $0x2e8] sm:$0xff]
        %v2694 = vld [vmem:[%s2599 + $0x2f0] sm:$0xff]
        %v2695 = vld [vmem:[%s2599 + $0x2f8] sm:$0xff]
        %v2696 = vld [vmem:[%s2599 + $0x300] sm:$0xff]
        %v2697 = vld [vmem:[%s2599 + $0x308] sm:$0xff]
        %v2698 = vld [vmem:[%s2599 + $0x310] sm:$0xff]
        %v2699 = vld [vmem:[%s2599 + $0x318] sm:$0xff]
        %v2700 = vld [vmem:[%s2599 + $0x320] sm:$0xff]
        %v2701 = vld [vmem:[%s2599 + $0x328] sm:$0xff]
        %v2702 = vld [vmem:[%s2599 + $0x330] sm:$0xff]
        %v2703 = vld [vmem:[%s2599 + $0x338] sm:$0xff]
        %v2704 = vld [vmem:[%s2599 + $0x340] sm:$0xff]
        %v2705 = vld [vmem:[%s2599 + $0x348] sm:$0xff]
        %v2706 = vld [vmem:[%s2599 + $0x350] sm:$0xff]
        %v2707 = vld [vmem:[%s2599 + $0x358] sm:$0xff]
        %v2708 = vld [vmem:[%s2599 + $0x360] sm:$0xff]
        %v2709 = vld [vmem:[%s2599 + $0x368] sm:$0xff]
        %v2710 = vld [vmem:[%s2599 + $0x370] sm:$0xff]
        %v2711 = vld [vmem:[%s2599 + $0x378] sm:$0xff]
        %v2712 = vld [vmem:[%s2599 + $0x380] sm:$0xff]
        %v2713 = vld [vmem:[%s2599 + $0x388] sm:$0xff]
        %v2714 = vld [vmem:[%s2599 + $0x390] sm:$0xff]
        %v2715 = vld [vmem:[%s2599 + $0x398] sm:$0xff]
        %v2716 = vld [vmem:[%s2599 + $0x3a0] sm:$0xff]
        %v2717 = vld [vmem:[%s2599 + $0x3a8] sm:$0xff]
        %v2718 = vld [vmem:[%s2599 + $0x3b0] sm:$0xff]
        %v2719 = vld [vmem:[%s2599 + $0x3b8] sm:$0xff]
        %v2720 = vld [vmem:[%s2599 + $0x3c0] sm:$0xff]
        %v2721 = vld [vmem:[%s2599 + $0x3c8] sm:$0xff]
        %v2722 = vld [vmem:[%s2599 + $0x3d0] sm:$0xff]
        %v2723 = vld [vmem:[%s2599 + $0x3d8] sm:$0xff]
        %v2724 = vld [vmem:[%s2599 + $0x3e0] sm:$0xff]
        %v2725 = vld [vmem:[%s2599 + $0x3e8] sm:$0xff]
        %v2726 = vld [vmem:[%s2599 + $0x3f0] sm:$0xff]
        %v2727 = vld [vmem:[%s2599 + $0x3f8] sm:$0xff]
        %v2728 = vld [vmem:[%s2599 + $0x400] sm:$0xff]
        %v2729 = vld [vmem:[%s2599 + $0x408] sm:$0xff]
        %v2730 = vld [vmem:[%s2599 + $0x410] sm:$0xff]
        %v2731 = vld [vmem:[%s2599 + $0x418] sm:$0xff]
        %v2732 = vld [vmem:[%s2599 + $0x420] sm:$0xff]
        %v2733 = vld [vmem:[%s2599 + $0x428] sm:$0xff]
        %v2734 = vld [vmem:[%s2599 + $0x430] sm:$0xff]
        %v2735 = vld [vmem:[%s2599 + $0x438] sm:$0xff]
        %v2736 = vld [vmem:[%s2599 + $0x440] sm:$0xff]
        %v2737 = vld [vmem:[%s2599 + $0x448] sm:$0xff]
        %v2738 = vld [vmem:[%s2599 + $0x450] sm:$0xff]
        %v2739 = vld [vmem:[%s2599 + $0x458] sm:$0xff]
        %v2740 = vld [vmem:[%s2599 + $0x460] sm:$0xff]
        %v2741 = vld [vmem:[%s2599 + $0x468] sm:$0xff]
        %v2742 = vld [vmem:[%s2599 + $0x470] sm:$0xff]
        %v2743 = vld [vmem:[%s2599 + $0x478] sm:$0xff]
        %v2744 = vld [vmem:[%s2599 + $0x480] sm:$0xff]
        %v2745 = vld [vmem:[%s2599 + $0x488] sm:$0xff]
        %v2746 = vld [vmem:[%s2599 + $0x490] sm:$0xff]
        %v2747 = vld [vmem:[%s2599 + $0x498] sm:$0xff]
        %v2748 = vld [vmem:[%s2599 + $0x4a0] sm:$0xff]
        %v2749 = vld [vmem:[%s2599 + $0x4a8] sm:$0xff]
        %v2750 = vld [vmem:[%s2599 + $0x4b0] sm:$0xff]
        %v2751 = vld [vmem:[%s2599 + $0x4b8] sm:$0xff]
        %v2752 = vld [vmem:[%s2599 + $0x4c0] sm:$0xff]
        %v2753 = vld [vmem:[%s2599 + $0x4c8] sm:$0xff]
        %v2754 = vld [vmem:[%s2599 + $0x4d0] sm:$0xff]
        %v2755 = vld [vmem:[%s2599 + $0x4d8] sm:$0xff]
        %v2756 = vld [vmem:[%s2599 + $0x4e0] sm:$0xff]
        %v2757 = vld [vmem:[%s2599 + $0x4e8] sm:$0xff]
        %v2758 = vld [vmem:[%s2599 + $0x4f0] sm:$0xff]
        %v2759 = vld [vmem:[%s2599 + $0x4f8] sm:$0xff]
        %v2760 = vld [vmem:[%s2599 + $0x500] sm:$0xff]
        %v2761 = vld [vmem:[%s2599 + $0x508] sm:$0xff]
        %v2762 = vld [vmem:[%s2599 + $0x510] sm:$0xff]
        %v2763 = vld [vmem:[%s2599 + $0x518] sm:$0xff]
        %v2764 = vld [vmem:[%s2599 + $0x520] sm:$0xff]
        %v2765 = vld [vmem:[%s2599 + $0x528] sm:$0xff]
        %v2766 = vld [vmem:[%s2599 + $0x530] sm:$0xff]
        %v2767 = vld [vmem:[%s2599 + $0x538] sm:$0xff]
        %v2768 = vld [vmem:[%s2599 + $0x540] sm:$0xff]
        %v2769 = vld [vmem:[%s2599 + $0x548] sm:$0xff]
        %v2770 = vld [vmem:[%s2599 + $0x550] sm:$0xff]
        %v2771 = vld [vmem:[%s2599 + $0x558] sm:$0xff]
        %v2772 = vld [vmem:[%s2599 + $0x560] sm:$0xff]
        %v2773 = vld [vmem:[%s2599 + $0x568] sm:$0xff]
        %v2774 = vld [vmem:[%s2599 + $0x570] sm:$0xff]
        %v2775 = vld [vmem:[%s2599 + $0x578] sm:$0xff]
        %v2776 = vld [vmem:[%s2599 + $0x580] sm:$0xff]
        %v2777 = vld [vmem:[%s2599 + $0x588] sm:$0xff]
        %v2778 = vld [vmem:[%s2599 + $0x590] sm:$0xff]
        %v2779 = vld [vmem:[%s2599 + $0x598] sm:$0xff]
        %v2780 = vld [vmem:[%s2599 + $0x5a0] sm:$0xff]
        %v2781 = vld [vmem:[%s2599 + $0x5a8] sm:$0xff]
        %v2782 = vld [vmem:[%s2599 + $0x5b0] sm:$0xff]
        %v2783 = vld [vmem:[%s2599 + $0x5b8] sm:$0xff]
        %v2784 = vld [vmem:[%s2599 + $0x5c0] sm:$0xff]
        %v2785 = vld [vmem:[%s2599 + $0x5c8] sm:$0xff]
        %v2786 = vld [vmem:[%s2599 + $0x5d0] sm:$0xff]
        %v2787 = vld [vmem:[%s2599 + $0x5d8] sm:$0xff]
        %v2788 = vld [vmem:[%s2599 + $0x5e0] sm:$0xff]
        %v2789 = vld [vmem:[%s2599 + $0x5e8] sm:$0xff]
        %v2790 = vld [vmem:[%s2599 + $0x5f0] sm:$0xff]
        %v2791 = vld [vmem:[%s2599 + $0x5f8] sm:$0xff]
        %v2792 = vld [vmem:[%s2599 + $0x600] sm:$0xff]
        %v2793 = vld [vmem:[%s2599 + $0x608] sm:$0xff]
        %v2794 = vld [vmem:[%s2599 + $0x610] sm:$0xff]
        %v2795 = vld [vmem:[%s2599 + $0x618] sm:$0xff]
        %v2796 = vld [vmem:[%s2599 + $0x620] sm:$0xff]
        %v2797 = vld [vmem:[%s2599 + $0x628] sm:$0xff]
        %v2798 = vld [vmem:[%s2599 + $0x630] sm:$0xff]
        %v2799 = vld [vmem:[%s2599 + $0x638] sm:$0xff]
        %v2800 = vld [vmem:[%s2599 + $0x640] sm:$0xff]
        %v2801 = vld [vmem:[%s2599 + $0x648] sm:$0xff]
        %v2802 = vld [vmem:[%s2599 + $0x650] sm:$0xff]
        %v2803 = vld [vmem:[%s2599 + $0x658] sm:$0xff]
        %v2804 = vld [vmem:[%s2599 + $0x660] sm:$0xff]
        %v2805 = vld [vmem:[%s2599 + $0x668] sm:$0xff]
        %v2806 = vld [vmem:[%s2599 + $0x670] sm:$0xff]
        %v2807 = vld [vmem:[%s2599 + $0x678] sm:$0xff]
        %v2808 = vld [vmem:[%s2599 + $0x680] sm:$0xff]
        %v2809 = vld [vmem:[%s2599 + $0x688] sm:$0xff]
        %v2810 = vld [vmem:[%s2599 + $0x690] sm:$0xff]
        %v2811 = vld [vmem:[%s2599 + $0x698] sm:$0xff]
        %v2812 = vld [vmem:[%s2599 + $0x6a0] sm:$0xff]
        %v2813 = vld [vmem:[%s2599 + $0x6a8] sm:$0xff]
        %v2814 = vld [vmem:[%s2599 + $0x6b0] sm:$0xff]
        %v2815 = vld [vmem:[%s2599 + $0x6b8] sm:$0xff]
        %v2816 = vld [vmem:[%s2599 + $0x6c0] sm:$0xff]
        %v2817 = vld [vmem:[%s2599 + $0x6c8] sm:$0xff]
        %v2818 = vld [vmem:[%s2599 + $0x6d0] sm:$0xff]
        %v2819 = vld [vmem:[%s2599 + $0x6d8] sm:$0xff]
        %v2820 = vld [vmem:[%s2599 + $0x6e0] sm:$0xff]
        %v2821 = vld [vmem:[%s2599 + $0x6e8] sm:$0xff]
        %v2822 = vld [vmem:[%s2599 + $0x6f0] sm:$0xff]
        %v2823 = vld [vmem:[%s2599 + $0x6f8] sm:$0xff]
        %v2824 = vld [vmem:[%s2599 + $0x700] sm:$0xff]
        %v2825 = vld [vmem:[%s2599 + $0x708] sm:$0xff]
        %v2826 = vld [vmem:[%s2599 + $0x710] sm:$0xff]
        %v2827 = vld [vmem:[%s2599 + $0x718] sm:$0xff]
        %v2828 = vld [vmem:[%s2599 + $0x720] sm:$0xff]
        %v2829 = vld [vmem:[%s2599 + $0x728] sm:$0xff]
        %v2830 = vld [vmem:[%s2599 + $0x730] sm:$0xff]
        %v2831 = vld [vmem:[%s2599 + $0x738] sm:$0xff]
        %v2832 = vld [vmem:[%s2599 + $0x740] sm:$0xff]
        %v2833 = vld [vmem:[%s2599 + $0x748] sm:$0xff]
        %v2834 = vld [vmem:[%s2599 + $0x750] sm:$0xff]
        %v2835 = vld [vmem:[%s2599 + $0x758] sm:$0xff]
        %v2836 = vld [vmem:[%s2599 + $0x760] sm:$0xff]
        %v2837 = vld [vmem:[%s2599 + $0x768] sm:$0xff]
        %v2838 = vld [vmem:[%s2599 + $0x770] sm:$0xff]
        %v2839 = vld [vmem:[%s2599 + $0x778] sm:$0xff]
        %v2840 = vld [vmem:[%s2599 + $0x780] sm:$0xff]
        %v2841 = vld [vmem:[%s2599 + $0x788] sm:$0xff]
        %v2842 = vld [vmem:[%s2599 + $0x790] sm:$0xff]
        %v2843 = vld [vmem:[%s2599 + $0x798] sm:$0xff]
        %v2844 = vld [vmem:[%s2599 + $0x7a0] sm:$0xff]
        %v2845 = vld [vmem:[%s2599 + $0x7a8] sm:$0xff]
        %v2846 = vld [vmem:[%s2599 + $0x7b0] sm:$0xff]
        %v2847 = vld [vmem:[%s2599 + $0x7b8] sm:$0xff]
        %v2848 = vld [vmem:[%s2599 + $0x7c0] sm:$0xff]
        %v2849 = vld [vmem:[%s2599 + $0x7c8] sm:$0xff]
        %v2850 = vld [vmem:[%s2599 + $0x7d0] sm:$0xff]
        %v2851 = vld [vmem:[%s2599 + $0x7d8] sm:$0xff]
        %v2852 = vld [vmem:[%s2599 + $0x7e0] sm:$0xff]
        %v2853 = vld [vmem:[%s2599 + $0x7e8] sm:$0xff]
        %v2854 = vld [vmem:[%s2599 + $0x7f0] sm:$0xff]
        %v2855 = vld [vmem:[%s2599 + $0x7f8] sm:$0xff]
        %2856 = vmatprep.subr.mxu0 %v2592
        %2857 = vmatpush1.msra.mxu0 %v2591
        %2858 = vmatprep.subr.mxu0 %v2596
        %2859 = vmatpush1.msra.mxu0 %v2595
        %2860 = vmatprep.subr.mxu0 0.0
        %2861 = vmatpush1.msra.mxu0 0.0
        %2862 = vmatprep.subr.mxu0 0.0
        %2863 = vmatpush1.msra.mxu0 0.0
        %2864 = vmatprep.subr.mxu0 0.0
        %2865 = vmatpush1.msra.mxu0 0.0
        %2866 = vmatprep.subr.mxu0 0.0
        %2867 = vmatpush1.msra.mxu0 0.0
        %2868 = vmatprep.subr.mxu0 0.0
        %2869 = vmatpush1.msra.mxu0 0.0
        %2870 = vmatprep.subr.mxu0 0.0
        %2871 = vmatpush1.msra.mxu0 0.0
        %2872 = vmatprep.subr.mxu0 0.0
        %2873 = vmatpush1.msra.mxu0 0.0
        %2874 = vmatprep.subr.mxu0 0.0
        %2875 = vmatpush1.msra.mxu0 0.0
        %2876 = vmatprep.subr.mxu0 0.0
        %2877 = vmatpush1.msra.mxu0 0.0
        %2878 = vmatprep.subr.mxu0 0.0
        %2879 = vmatpush1.msra.mxu0 0.0
        %2880 = vmatprep.subr.mxu0 0.0
        %2881 = vmatpush1.msra.mxu0 0.0
        %2882 = vmatprep.subr.mxu0 0.0
        %2883 = vmatpush1.msra.mxu0 0.0
        %2884 = vmatprep.subr.mxu0 0.0
        %2885 = vmatpush1.msra.mxu0 0.0
        %2886 = vmatprep.subr.mxu0 0.0
        %2887 = vmatpush1.msra.mxu0 0.0
        %2888 = vmatprep.subr.mxu0 0.0
        %2889 = vmatpush1.msra.mxu0 0.0
        %2890 = vmatprep.subr.mxu0 0.0
        %2891 = vmatpush1.msra.mxu0 0.0
        %2892 = vmatprep.subr.mxu0 0.0
        %2893 = vmatpush1.msra.mxu0 0.0
        %2894 = vmatprep.subr.mxu0 0.0
        %2895 = vmatpush1.msra.mxu0 0.0
        %2896 = vmatprep.subr.mxu0 0.0
        %2897 = vmatpush1.msra.mxu0 0.0
        %2898 = vmatprep.subr.mxu0 0.0
        %2899 = vmatpush1.msra.mxu0 0.0
        %2900 = vmatprep.subr.mxu0 0.0
        %2901 = vmatpush1.msra.mxu0 0.0
        %2902 = vmatprep.subr.mxu0 0.0
        %2903 = vmatpush1.msra.mxu0 0.0
        %2904 = vmatprep.subr.mxu0 0.0
        %2905 = vmatpush1.msra.mxu0 0.0
        %2906 = vmatprep.subr.mxu0 0.0
        %2907 = vmatpush1.msra.mxu0 0.0
        %2908 = vmatprep.subr.mxu0 0.0
        %2909 = vmatpush1.msra.mxu0 0.0
        %2910 = vmatprep.subr.mxu0 0.0
        %2911 = vmatpush1.msra.mxu0 0.0
        %2912 = vmatprep.subr.mxu0 0.0
        %2913 = vmatpush1.msra.mxu0 0.0
        %2914 = vmatprep.subr.mxu0 0.0
        %2915 = vmatpush1.msra.mxu0 0.0
        %2916 = vmatprep.subr.mxu0 0.0
        %2917 = vmatpush1.msra.mxu0 0.0
        %2918 = vmatprep.subr.mxu0 0.0
        %2919 = vmatpush1.msra.mxu0 0.0
        %2920 = vmatprep.mubr.f32.mxu0 0.0
        %2921 = vmatmul.mubr.f32.gmra.mrb[0].mxu0 %v795
        %v2922 = vpop.f32.mrb[0].mxu0
        %v2923 = vadd.f32 0.0, %v2922
        %v2924 = vpop.f32.mrb[0].mxu0
        %v2925 = vadd.f32 0.0, %v2924
        %2926 = vmatprep.mubr.f32.mxu0 0.0
        %2927 = vmatmul.mubr.f32.gmra.mrb[0].mxu0 %v798
        %v2928 = vpop.f32.mrb[0].mxu0
        %v2929 = vadd.f32 0.0, %v2928
        %v2930 = vpop.f32.mrb[0].mxu0
        %v2931 = vadd.f32 0.0, %v2930
        %2932 = vdwg.mxu0
        %2933 = vmatprep.subr.mxu0 %v2594
        %2934 = vmatpush1.msra.mxu0 %v2593
        %2935 = vmatprep.subr.mxu0 %v2598
        %2936 = vmatpush1.msra.mxu0 %v2597
        %2937 = vmatprep.subr.mxu0 0.0
        %2938 = vmatpush1.msra.mxu0 0.0
        %2939 = vmatprep.subr.mxu0 0.0
        %2940 = vmatpush1.msra.mxu0 0.0
        %2941 = vmatprep.subr.mxu0 0.0
        %2942 = vmatpush1.msra.mxu0 0.0
        %2943 = vmatprep.subr.mxu0 0.0
        %2944 = vmatpush1.msra.mxu0 0.0
        %2945 = vmatprep.subr.mxu0 0.0
        %2946 = vmatpush1.msra.mxu0 0.0
        %2947 = vmatprep.subr.mxu0 0.0
        %2948 = vmatpush1.msra.mxu0 0.0
        %2949 = vmatprep.subr.mxu0 0.0
        %2950 = vmatpush1.msra.mxu0 0.0
        %2951 = vmatprep.subr.mxu0 0.0
        %2952 = vmatpush1.msra.mxu0 0.0
        %2953 = vmatprep.subr.mxu0 0.0
        %2954 = vmatpush1.msra.mxu0 0.0
        %2955 = vmatprep.subr.mxu0 0.0
        %2956 = vmatpush1.msra.mxu0 0.0
        %2957 = vmatprep.subr.mxu0 0.0
        %2958 = vmatpush1.msra.mxu0 0.0
        %2959 = vmatprep.subr.mxu0 0.0
        %2960 = vmatpush1.msra.mxu0 0.0
        %2961 = vmatprep.subr.mxu0 0.0
        %2962 = vmatpush1.msra.mxu0 0.0
        %2963 = vmatprep.subr.mxu0 0.0
        %2964 = vmatpush1.msra.mxu0 0.0
        %2965 = vmatprep.subr.mxu0 0.0
        %2966 = vmatpush1.msra.mxu0 0.0
        %2967 = vmatprep.subr.mxu0 0.0
        %2968 = vmatpush1.msra.mxu0 0.0
        %2969 = vmatprep.subr.mxu0 0.0
        %2970 = vmatpush1.msra.mxu0 0.0
        %2971 = vmatprep.subr.mxu0 0.0
        %2972 = vmatpush1.msra.mxu0 0.0
        %2973 = vmatprep.subr.mxu0 0.0
        %2974 = vmatpush1.msra.mxu0 0.0
        %2975 = vmatprep.subr.mxu0 0.0
        %2976 = vmatpush1.msra.mxu0 0.0
        %2977 = vmatprep.subr.mxu0 0.0
        %2978 = vmatpush1.msra.mxu0 0.0
        %2979 = vmatprep.subr.mxu0 0.0
        %2980 = vmatpush1.msra.mxu0 0.0
        %2981 = vmatprep.subr.mxu0 0.0
        %2982 = vmatpush1.msra.mxu0 0.0
        %2983 = vmatprep.subr.mxu0 0.0
        %2984 = vmatpush1.msra.mxu0 0.0
        %2985 = vmatprep.subr.mxu0 0.0
        %2986 = vmatpush1.msra.mxu0 0.0
        %2987 = vmatprep.subr.mxu0 0.0
        %2988 = vmatpush1.msra.mxu0 0.0
        %2989 = vmatprep.subr.mxu0 0.0
        %2990 = vmatpush1.msra.mxu0 0.0
        %2991 = vmatprep.subr.mxu0 0.0
        %2992 = vmatpush1.msra.mxu0 0.0
        %2993 = vmatprep.subr.mxu0 0.0
        %2994 = vmatpush1.msra.mxu0 0.0
        %2995 = vmatprep.subr.mxu0 0.0
        %2996 = vmatpush1.msra.mxu0 0.0
        %2997 = vmatprep.mubr.f32.mxu0 0.0
        %2998 = vmatmul.mubr.f32.gmra.mrb[0].mxu0 %v795
        %v2999 = vpop.f32.mrb[0].mxu0
        %v3000 = vadd.f32 0.0, %v2999
        %v3001 = vpop.f32.mrb[0].mxu0
        %v3002 = vadd.f32 0.0, %v3001
        %3003 = vmatprep.mubr.f32.mxu0 0.0
        %3004 = vmatmul.mubr.f32.gmra.mrb[0].mxu0 %v798
        %v3005 = vpop.f32.mrb[0].mxu0
        %v3006 = vadd.f32 0.0, %v3005
        %v3007 = vpop.f32.mrb[0].mxu0
        %v3008 = vadd.f32 0.0, %v3007
        %3009 = vdwg.mxu0
        %v3010 = vld [vmem:[#allocation8] sm:$0xff]
        %v3011 = vld [vmem:[#allocation8 + $0x8] sm:$0xff]
        %v3012 = vld [vmem:[#allocation8 + $0x10] sm:$0xff]
        %v3013 = vld [vmem:[#allocation8 + $0x18] sm:$0xff]
        %v3014 = vld [vmem:[#allocation8 + $0x20] sm:$0xff]
        %v3015 = vld [vmem:[#allocation8 + $0x28] sm:$0xff]
        %v3016 = vld [vmem:[#allocation8 + $0x30] sm:$0xff]
        %v3017 = vld [vmem:[#allocation8 + $0x38] sm:$0xff]
        %v3018 = vld [vmem:[#allocation8 + $0x40] sm:$0xff]
        %v3019 = vld [vmem:[#allocation8 + $0x48] sm:$0xff]
        %v3020 = vld [vmem:[#allocation8 + $0x50] sm:$0xff]
        %v3021 = vld [vmem:[#allocation8 + $0x58] sm:$0xff]
        %v3022 = vld [vmem:[#allocation8 + $0x60] sm:$0xff]
        %v3023 = vld [vmem:[#allocation8 + $0x68] sm:$0xff]
        %v3024 = vld [vmem:[#allocation8 + $0x70] sm:$0xff]
        %v3025 = vld [vmem:[#allocation8 + $0x78] sm:$0xff]
        %v3026 = vld [vmem:[#allocation8 + $0x80] sm:$0xff]
        %v3027 = vld [vmem:[#allocation8 + $0x88] sm:$0xff]
        %v3028 = vld [vmem:[#allocation8 + $0x90] sm:$0xff]
        %v3029 = vld [vmem:[#allocation8 + $0x98] sm:$0xff]
        %v3030 = vld [vmem:[#allocation8 + $0xa0] sm:$0xff]
        %v3031 = vld [vmem:[#allocation8 + $0xa8] sm:$0xff]
        %v3032 = vld [vmem:[#allocation8 + $0xb0] sm:$0xff]
        %v3033 = vld [vmem:[#allocation8 + $0xb8] sm:$0xff]
        %v3034 = vld [vmem:[#allocation8 + $0xc0] sm:$0xff]
        %v3035 = vld [vmem:[#allocation8 + $0xc8] sm:$0xff]
        %v3036 = vld [vmem:[#allocation8 + $0xd0] sm:$0xff]
        %v3037 = vld [vmem:[#allocation8 + $0xd8] sm:$0xff]
        %v3038 = vld [vmem:[#allocation8 + $0xe0] sm:$0xff]
        %v3039 = vld [vmem:[#allocation8 + $0xe8] sm:$0xff]
        %v3040 = vld [vmem:[#allocation8 + $0xf0] sm:$0xff]
        %v3041 = vld [vmem:[#allocation8 + $0xf8] sm:$0xff]
        %v3042 = vld [vmem:[#allocation8 + $0x100] sm:$0xff]
        %v3043 = vld [vmem:[#allocation8 + $0x108] sm:$0xff]
        %v3044 = vld [vmem:[#allocation8 + $0x110] sm:$0xff]
        %v3045 = vld [vmem:[#allocation8 + $0x118] sm:$0xff]
        %v3046 = vld [vmem:[#allocation8 + $0x120] sm:$0xff]
        %v3047 = vld [vmem:[#allocation8 + $0x128] sm:$0xff]
        %v3048 = vld [vmem:[#allocation8 + $0x130] sm:$0xff]
        %v3049 = vld [vmem:[#allocation8 + $0x138] sm:$0xff]
        %v3050 = vld [vmem:[#allocation8 + $0x140] sm:$0xff]
        %v3051 = vld [vmem:[#allocation8 + $0x148] sm:$0xff]
        %v3052 = vld [vmem:[#allocation8 + $0x150] sm:$0xff]
        %v3053 = vld [vmem:[#allocation8 + $0x158] sm:$0xff]
        %v3054 = vld [vmem:[#allocation8 + $0x160] sm:$0xff]
        %v3055 = vld [vmem:[#allocation8 + $0x168] sm:$0xff]
        %v3056 = vld [vmem:[#allocation8 + $0x170] sm:$0xff]
        %v3057 = vld [vmem:[#allocation8 + $0x178] sm:$0xff]
        %v3058 = vld [vmem:[#allocation8 + $0x180] sm:$0xff]
        %v3059 = vld [vmem:[#allocation8 + $0x188] sm:$0xff]
        %v3060 = vld [vmem:[#allocation8 + $0x190] sm:$0xff]
        %v3061 = vld [vmem:[#allocation8 + $0x198] sm:$0xff]
        %v3062 = vld [vmem:[#allocation8 + $0x1a0] sm:$0xff]
        %v3063 = vld [vmem:[#allocation8 + $0x1a8] sm:$0xff]
        %v3064 = vld [vmem:[#allocation8 + $0x1b0] sm:$0xff]
        %v3065 = vld [vmem:[#allocation8 + $0x1b8] sm:$0xff]
        %v3066 = vld [vmem:[#allocation8 + $0x1c0] sm:$0xff]
        %v3067 = vld [vmem:[#allocation8 + $0x1c8] sm:$0xff]
        %v3068 = vld [vmem:[#allocation8 + $0x1d0] sm:$0xff]
        %v3069 = vld [vmem:[#allocation8 + $0x1d8] sm:$0xff]
        %v3070 = vld [vmem:[#allocation8 + $0x1e0] sm:$0xff]
        %v3071 = vld [vmem:[#allocation8 + $0x1e8] sm:$0xff]
        %v3072 = vld [vmem:[#allocation8 + $0x1f0] sm:$0xff]
        %v3073 = vld [vmem:[#allocation8 + $0x1f8] sm:$0xff]
        %v3074 = vld [vmem:[#allocation8 + $0x200] sm:$0xff]
        %v3075 = vld [vmem:[#allocation8 + $0x208] sm:$0xff]
        %v3076 = vld [vmem:[#allocation8 + $0x210] sm:$0xff]
        %v3077 = vld [vmem:[#allocation8 + $0x218] sm:$0xff]
        %v3078 = vld [vmem:[#allocation8 + $0x220] sm:$0xff]
        %v3079 = vld [vmem:[#allocation8 + $0x228] sm:$0xff]
        %v3080 = vld [vmem:[#allocation8 + $0x230] sm:$0xff]
        %v3081 = vld [vmem:[#allocation8 + $0x238] sm:$0xff]
        %v3082 = vld [vmem:[#allocation8 + $0x240] sm:$0xff]
        %v3083 = vld [vmem:[#allocation8 + $0x248] sm:$0xff]
        %v3084 = vld [vmem:[#allocation8 + $0x250] sm:$0xff]
        %v3085 = vld [vmem:[#allocation8 + $0x258] sm:$0xff]
        %v3086 = vld [vmem:[#allocation8 + $0x260] sm:$0xff]
        %v3087 = vld [vmem:[#allocation8 + $0x268] sm:$0xff]
        %v3088 = vld [vmem:[#allocation8 + $0x270] sm:$0xff]
        %v3089 = vld [vmem:[#allocation8 + $0x278] sm:$0xff]
        %v3090 = vld [vmem:[#allocation8 + $0x280] sm:$0xff]
        %v3091 = vld [vmem:[#allocation8 + $0x288] sm:$0xff]
        %v3092 = vld [vmem:[#allocation8 + $0x290] sm:$0xff]
        %v3093 = vld [vmem:[#allocation8 + $0x298] sm:$0xff]
        %v3094 = vld [vmem:[#allocation8 + $0x2a0] sm:$0xff]
        %v3095 = vld [vmem:[#allocation8 + $0x2a8] sm:$0xff]
        %v3096 = vld [vmem:[#allocation8 + $0x2b0] sm:$0xff]
        %v3097 = vld [vmem:[#allocation8 + $0x2b8] sm:$0xff]
        %v3098 = vld [vmem:[#allocation8 + $0x2c0] sm:$0xff]
        %v3099 = vld [vmem:[#allocation8 + $0x2c8] sm:$0xff]
        %v3100 = vld [vmem:[#allocation8 + $0x2d0] sm:$0xff]
        %v3101 = vld [vmem:[#allocation8 + $0x2d8] sm:$0xff]
        %v3102 = vld [vmem:[#allocation8 + $0x2e0] sm:$0xff]
        %v3103 = vld [vmem:[#allocation8 + $0x2e8] sm:$0xff]
        %v3104 = vld [vmem:[#allocation8 + $0x2f0] sm:$0xff]
        %v3105 = vld [vmem:[#allocation8 + $0x2f8] sm:$0xff]
        %v3106 = vld [vmem:[#allocation8 + $0x300] sm:$0xff]
        %v3107 = vld [vmem:[#allocation8 + $0x308] sm:$0xff]
        %v3108 = vld [vmem:[#allocation8 + $0x310] sm:$0xff]
        %v3109 = vld [vmem:[#allocation8 + $0x318] sm:$0xff]
        %v3110 = vld [vmem:[#allocation8 + $0x320] sm:$0xff]
        %v3111 = vld [vmem:[#allocation8 + $0x328] sm:$0xff]
        %v3112 = vld [vmem:[#allocation8 + $0x330] sm:$0xff]
        %v3113 = vld [vmem:[#allocation8 + $0x338] sm:$0xff]
        %v3114 = vld [vmem:[#allocation8 + $0x340] sm:$0xff]
        %v3115 = vld [vmem:[#allocation8 + $0x348] sm:$0xff]
        %v3116 = vld [vmem:[#allocation8 + $0x350] sm:$0xff]
        %v3117 = vld [vmem:[#allocation8 + $0x358] sm:$0xff]
        %v3118 = vld [vmem:[#allocation8 + $0x360] sm:$0xff]
        %v3119 = vld [vmem:[#allocation8 + $0x368] sm:$0xff]
        %v3120 = vld [vmem:[#allocation8 + $0x370] sm:$0xff]
        %v3121 = vld [vmem:[#allocation8 + $0x378] sm:$0xff]
        %v3122 = vld [vmem:[#allocation8 + $0x380] sm:$0xff]
        %v3123 = vld [vmem:[#allocation8 + $0x388] sm:$0xff]
        %v3124 = vld [vmem:[#allocation8 + $0x390] sm:$0xff]
        %v3125 = vld [vmem:[#allocation8 + $0x398] sm:$0xff]
        %v3126 = vld [vmem:[#allocation8 + $0x3a0] sm:$0xff]
        %v3127 = vld [vmem:[#allocation8 + $0x3a8] sm:$0xff]
        %v3128 = vld [vmem:[#allocation8 + $0x3b0] sm:$0xff]
        %v3129 = vld [vmem:[#allocation8 + $0x3b8] sm:$0xff]
        %v3130 = vld [vmem:[#allocation8 + $0x3c0] sm:$0xff]
        %v3131 = vld [vmem:[#allocation8 + $0x3c8] sm:$0xff]
        %v3132 = vld [vmem:[#allocation8 + $0x3d0] sm:$0xff]
        %v3133 = vld [vmem:[#allocation8 + $0x3d8] sm:$0xff]
        %v3134 = vld [vmem:[#allocation8 + $0x3e0] sm:$0xff]
        %v3135 = vld [vmem:[#allocation8 + $0x3e8] sm:$0xff]
        %v3136 = vld [vmem:[#allocation8 + $0x3f0] sm:$0xff]
        %v3137 = vld [vmem:[#allocation8 + $0x3f8] sm:$0xff]
        %v3138 = vld [vmem:[#allocation8 + $0x400] sm:$0xff]
        %v3139 = vld [vmem:[#allocation8 + $0x408] sm:$0xff]
        %v3140 = vld [vmem:[#allocation8 + $0x410] sm:$0xff]
        %v3141 = vld [vmem:[#allocation8 + $0x418] sm:$0xff]
        %v3142 = vld [vmem:[#allocation8 + $0x420] sm:$0xff]
        %v3143 = vld [vmem:[#allocation8 + $0x428] sm:$0xff]
        %v3144 = vld [vmem:[#allocation8 + $0x430] sm:$0xff]
        %v3145 = vld [vmem:[#allocation8 + $0x438] sm:$0xff]
        %v3146 = vld [vmem:[#allocation8 + $0x440] sm:$0xff]
        %v3147 = vld [vmem:[#allocation8 + $0x448] sm:$0xff]
        %v3148 = vld [vmem:[#allocation8 + $0x450] sm:$0xff]
        %v3149 = vld [vmem:[#allocation8 + $0x458] sm:$0xff]
        %v3150 = vld [vmem:[#allocation8 + $0x460] sm:$0xff]
        %v3151 = vld [vmem:[#allocation8 + $0x468] sm:$0xff]
        %v3152 = vld [vmem:[#allocation8 + $0x470] sm:$0xff]
        %v3153 = vld [vmem:[#allocation8 + $0x478] sm:$0xff]
        %v3154 = vld [vmem:[#allocation8 + $0x480] sm:$0xff]
        %v3155 = vld [vmem:[#allocation8 + $0x488] sm:$0xff]
        %v3156 = vld [vmem:[#allocation8 + $0x490] sm:$0xff]
        %v3157 = vld [vmem:[#allocation8 + $0x498] sm:$0xff]
        %v3158 = vld [vmem:[#allocation8 + $0x4a0] sm:$0xff]
        %v3159 = vld [vmem:[#allocation8 + $0x4a8] sm:$0xff]
        %v3160 = vld [vmem:[#allocation8 + $0x4b0] sm:$0xff]
        %v3161 = vld [vmem:[#allocation8 + $0x4b8] sm:$0xff]
        %v3162 = vld [vmem:[#allocation8 + $0x4c0] sm:$0xff]
        %v3163 = vld [vmem:[#allocation8 + $0x4c8] sm:$0xff]
        %v3164 = vld [vmem:[#allocation8 + $0x4d0] sm:$0xff]
        %v3165 = vld [vmem:[#allocation8 + $0x4d8] sm:$0xff]
        %v3166 = vld [vmem:[#allocation8 + $0x4e0] sm:$0xff]
        %v3167 = vld [vmem:[#allocation8 + $0x4e8] sm:$0xff]
        %v3168 = vld [vmem:[#allocation8 + $0x4f0] sm:$0xff]
        %v3169 = vld [vmem:[#allocation8 + $0x4f8] sm:$0xff]
        %v3170 = vld [vmem:[#allocation8 + $0x500] sm:$0xff]
        %v3171 = vld [vmem:[#allocation8 + $0x508] sm:$0xff]
        %v3172 = vld [vmem:[#allocation8 + $0x510] sm:$0xff]
        %v3173 = vld [vmem:[#allocation8 + $0x518] sm:$0xff]
        %v3174 = vld [vmem:[#allocation8 + $0x520] sm:$0xff]
        %v3175 = vld [vmem:[#allocation8 + $0x528] sm:$0xff]
        %v3176 = vld [vmem:[#allocation8 + $0x530] sm:$0xff]
        %v3177 = vld [vmem:[#allocation8 + $0x538] sm:$0xff]
        %v3178 = vld [vmem:[#allocation8 + $0x540] sm:$0xff]
        %v3179 = vld [vmem:[#allocation8 + $0x548] sm:$0xff]
        %v3180 = vld [vmem:[#allocation8 + $0x550] sm:$0xff]
        %v3181 = vld [vmem:[#allocation8 + $0x558] sm:$0xff]
        %v3182 = vld [vmem:[#allocation8 + $0x560] sm:$0xff]
        %v3183 = vld [vmem:[#allocation8 + $0x568] sm:$0xff]
        %v3184 = vld [vmem:[#allocation8 + $0x570] sm:$0xff]
        %v3185 = vld [vmem:[#allocation8 + $0x578] sm:$0xff]
        %v3186 = vld [vmem:[#allocation8 + $0x580] sm:$0xff]
        %v3187 = vld [vmem:[#allocation8 + $0x588] sm:$0xff]
        %v3188 = vld [vmem:[#allocation8 + $0x590] sm:$0xff]
        %v3189 = vld [vmem:[#allocation8 + $0x598] sm:$0xff]
        %v3190 = vld [vmem:[#allocation8 + $0x5a0] sm:$0xff]
        %v3191 = vld [vmem:[#allocation8 + $0x5a8] sm:$0xff]
        %v3192 = vld [vmem:[#allocation8 + $0x5b0] sm:$0xff]
        %v3193 = vld [vmem:[#allocation8 + $0x5b8] sm:$0xff]
        %v3194 = vld [vmem:[#allocation8 + $0x5c0] sm:$0xff]
        %v3195 = vld [vmem:[#allocation8 + $0x5c8] sm:$0xff]
        %v3196 = vld [vmem:[#allocation8 + $0x5d0] sm:$0xff]
        %v3197 = vld [vmem:[#allocation8 + $0x5d8] sm:$0xff]
        %v3198 = vld [vmem:[#allocation8 + $0x5e0] sm:$0xff]
        %v3199 = vld [vmem:[#allocation8 + $0x5e8] sm:$0xff]
        %v3200 = vld [vmem:[#allocation8 + $0x5f0] sm:$0xff]
        %v3201 = vld [vmem:[#allocation8 + $0x5f8] sm:$0xff]
        %v3202 = vld [vmem:[#allocation8 + $0x600] sm:$0xff]
        %v3203 = vld [vmem:[#allocation8 + $0x608] sm:$0xff]
        %v3204 = vld [vmem:[#allocation8 + $0x610] sm:$0xff]
        %v3205 = vld [vmem:[#allocation8 + $0x618] sm:$0xff]
        %v3206 = vld [vmem:[#allocation8 + $0x620] sm:$0xff]
        %v3207 = vld [vmem:[#allocation8 + $0x628] sm:$0xff]
        %v3208 = vld [vmem:[#allocation8 + $0x630] sm:$0xff]
        %v3209 = vld [vmem:[#allocation8 + $0x638] sm:$0xff]
        %v3210 = vld [vmem:[#allocation8 + $0x640] sm:$0xff]
        %v3211 = vld [vmem:[#allocation8 + $0x648] sm:$0xff]
        %v3212 = vld [vmem:[#allocation8 + $0x650] sm:$0xff]
        %v3213 = vld [vmem:[#allocation8 + $0x658] sm:$0xff]
        %v3214 = vld [vmem:[#allocation8 + $0x660] sm:$0xff]
        %v3215 = vld [vmem:[#allocation8 + $0x668] sm:$0xff]
        %v3216 = vld [vmem:[#allocation8 + $0x670] sm:$0xff]
        %v3217 = vld [vmem:[#allocation8 + $0x678] sm:$0xff]
        %v3218 = vld [vmem:[#allocation8 + $0x680] sm:$0xff]
        %v3219 = vld [vmem:[#allocation8 + $0x688] sm:$0xff]
        %v3220 = vld [vmem:[#allocation8 + $0x690] sm:$0xff]
        %v3221 = vld [vmem:[#allocation8 + $0x698] sm:$0xff]
        %v3222 = vld [vmem:[#allocation8 + $0x6a0] sm:$0xff]
        %v3223 = vld [vmem:[#allocation8 + $0x6a8] sm:$0xff]
        %v3224 = vld [vmem:[#allocation8 + $0x6b0] sm:$0xff]
        %v3225 = vld [vmem:[#allocation8 + $0x6b8] sm:$0xff]
        %v3226 = vld [vmem:[#allocation8 + $0x6c0] sm:$0xff]
        %v3227 = vld [vmem:[#allocation8 + $0x6c8] sm:$0xff]
        %v3228 = vld [vmem:[#allocation8 + $0x6d0] sm:$0xff]
        %v3229 = vld [vmem:[#allocation8 + $0x6d8] sm:$0xff]
        %v3230 = vld [vmem:[#allocation8 + $0x6e0] sm:$0xff]
        %v3231 = vld [vmem:[#allocation8 + $0x6e8] sm:$0xff]
        %v3232 = vld [vmem:[#allocation8 + $0x6f0] sm:$0xff]
        %v3233 = vld [vmem:[#allocation8 + $0x6f8] sm:$0xff]
        %v3234 = vld [vmem:[#allocation8 + $0x700] sm:$0xff]
        %v3235 = vld [vmem:[#allocation8 + $0x708] sm:$0xff]
        %v3236 = vld [vmem:[#allocation8 + $0x710] sm:$0xff]
        %v3237 = vld [vmem:[#allocation8 + $0x718] sm:$0xff]
        %v3238 = vld [vmem:[#allocation8 + $0x720] sm:$0xff]
        %v3239 = vld [vmem:[#allocation8 + $0x728] sm:$0xff]
        %v3240 = vld [vmem:[#allocation8 + $0x730] sm:$0xff]
        %v3241 = vld [vmem:[#allocation8 + $0x738] sm:$0xff]
        %v3242 = vld [vmem:[#allocation8 + $0x740] sm:$0xff]
        %v3243 = vld [vmem:[#allocation8 + $0x748] sm:$0xff]
        %v3244 = vld [vmem:[#allocation8 + $0x750] sm:$0xff]
        %v3245 = vld [vmem:[#allocation8 + $0x758] sm:$0xff]
        %v3246 = vld [vmem:[#allocation8 + $0x760] sm:$0xff]
        %v3247 = vld [vmem:[#allocation8 + $0x768] sm:$0xff]
        %v3248 = vld [vmem:[#allocation8 + $0x770] sm:$0xff]
        %v3249 = vld [vmem:[#allocation8 + $0x778] sm:$0xff]
        %v3250 = vld [vmem:[#allocation8 + $0x780] sm:$0xff]
        %v3251 = vld [vmem:[#allocation8 + $0x788] sm:$0xff]
        %v3252 = vld [vmem:[#allocation8 + $0x790] sm:$0xff]
        %v3253 = vld [vmem:[#allocation8 + $0x798] sm:$0xff]
        %v3254 = vld [vmem:[#allocation8 + $0x7a0] sm:$0xff]
        %v3255 = vld [vmem:[#allocation8 + $0x7a8] sm:$0xff]
        %v3256 = vld [vmem:[#allocation8 + $0x7b0] sm:$0xff]
        %v3257 = vld [vmem:[#allocation8 + $0x7b8] sm:$0xff]
        %v3258 = vld [vmem:[#allocation8 + $0x7c0] sm:$0xff]
        %v3259 = vld [vmem:[#allocation8 + $0x7c8] sm:$0xff]
        %v3260 = vld [vmem:[#allocation8 + $0x7d0] sm:$0xff]
        %v3261 = vld [vmem:[#allocation8 + $0x7d8] sm:$0xff]
        %v3262 = vld [vmem:[#allocation8 + $0x7e0] sm:$0xff]
        %v3263 = vld [vmem:[#allocation8 + $0x7e8] sm:$0xff]
        %v3264 = vld [vmem:[#allocation8 + $0x7f0] sm:$0xff]
        %v3265 = vld [vmem:[#allocation8 + $0x7f8] sm:$0xff]
        %3266 = vmatprep.subr.mxu0 %v3011
        %3267 = vmatpush1.msra.mxu0 %v3010
        %3268 = vmatprep.subr.mxu0 %v3015
        %3269 = vmatpush1.msra.mxu0 %v3014
        %3270 = vmatprep.subr.mxu0 %v3019
        %3271 = vmatpush1.msra.mxu0 %v3018
        %3272 = vmatprep.subr.mxu0 %v3023
        %3273 = vmatpush1.msra.mxu0 %v3022
        %3274 = vmatprep.subr.mxu0 %v3027
        %3275 = vmatpush1.msra.mxu0 %v3026
        %3276 = vmatprep.subr.mxu0 %v3031
        %3277 = vmatpush1.msra.mxu0 %v3030
        %3278 = vmatprep.subr.mxu0 %v3035
        %3279 = vmatpush1.msra.mxu0 %v3034
        %3280 = vmatprep.subr.mxu0 %v3039
        %3281 = vmatpush1.msra.mxu0 %v3038
        %3282 = vmatprep.subr.mxu0 %v3043
        %3283 = vmatpush1.msra.mxu0 %v3042
        %3284 = vmatprep.subr.mxu0 %v3047
        %3285 = vmatpush1.msra.mxu0 %v3046
        %3286 = vmatprep.subr.mxu0 %v3051
        %3287 = vmatpush1.msra.mxu0 %v3050
        %3288 = vmatprep.subr.mxu0 %v3055
        %3289 = vmatpush1.msra.mxu0 %v3054
        %3290 = vmatprep.subr.mxu0 %v3059
        %3291 = vmatpush1.msra.mxu0 %v3058
        %3292 = vmatprep.subr.mxu0 %v3063
        %3293 = vmatpush1.msra.mxu0 %v3062
        %3294 = vmatprep.subr.mxu0 %v3067
        %3295 = vmatpush1.msra.mxu0 %v3066
        %3296 = vmatprep.subr.mxu0 %v3071
        %3297 = vmatpush1.msra.mxu0 %v3070
        %3298 = vmatprep.subr.mxu0 %v3075
        %3299 = vmatpush1.msra.mxu0 %v3074
        %3300 = vmatprep.subr.mxu0 %v3079
        %3301 = vmatpush1.msra.mxu0 %v3078
        %3302 = vmatprep.subr.mxu0 %v3083
        %3303 = vmatpush1.msra.mxu0 %v3082
        %3304 = vmatprep.subr.mxu0 %v3087
        %3305 = vmatpush1.msra.mxu0 %v3086
        %3306 = vmatprep.subr.mxu0 %v3091
        %3307 = vmatpush1.msra.mxu0 %v3090
        %3308 = vmatprep.subr.mxu0 %v3095
        %3309 = vmatpush1.msra.mxu0 %v3094
        %3310 = vmatprep.subr.mxu0 %v3099
        %3311 = vmatpush1.msra.mxu0 %v3098
        %3312 = vmatprep.subr.mxu0 %v3103
        %3313 = vmatpush1.msra.mxu0 %v3102
        %3314 = vmatprep.subr.mxu0 %v3107
        %3315 = vmatpush1.msra.mxu0 %v3106
        %3316 = vmatprep.subr.mxu0 %v3111
        %3317 = vmatpush1.msra.mxu0 %v3110
        %3318 = vmatprep.subr.mxu0 %v3115
        %3319 = vmatpush1.msra.mxu0 %v3114
        %3320 = vmatprep.subr.mxu0 %v3119
        %3321 = vmatpush1.msra.mxu0 %v3118
        %3322 = vmatprep.subr.mxu0 %v3123
        %3323 = vmatpush1.msra.mxu0 %v3122
        %3324 = vmatprep.subr.mxu0 %v3127
        %3325 = vmatpush1.msra.mxu0 %v3126
        %3326 = vmatprep.subr.mxu0 %v3131
        %3327 = vmatpush1.msra.mxu0 %v3130
        %3328 = vmatprep.subr.mxu0 %v3135
        %3329 = vmatpush1.msra.mxu0 %v3134
        %3330 = vmatprep.mubr.f32.mxu0 %v2925
        %3331 = vmatmul.mubr.f32.gmra.mrb[0].mxu0 %v2923
        %v3332 = vpop.f32.mrb[0].mxu0
        %v3333 = vadd.f32 0.0, %v3332
        %v3334 = vpop.f32.mrb[0].mxu0
        %v3335 = vadd.f32 0.0, %v3334
        %3336 = vmatprep.mubr.f32.mxu0 %v2931
        %3337 = vmatmul.mubr.f32.gmra.mrb[0].mxu0 %v2929
        %v3338 = vpop.f32.mrb[0].mxu0
        %v3339 = vadd.f32 0.0, %v3338
        %v3340 = vpop.f32.mrb[0].mxu0
        %v3341 = vadd.f32 0.0, %v3340
        %3342 = vdwg.mxu0
        %3343 = vmatprep.subr.mxu0 %v3139
        %3344 = vmatpush1.msra.mxu0 %v3138
        %3345 = vmatprep.subr.mxu0 %v3143
        %3346 = vmatpush1.msra.mxu0 %v3142
        %3347 = vmatprep.subr.mxu0 %v3147
        %3348 = vmatpush1.msra.mxu0 %v3146
        %3349 = vmatprep.subr.mxu0 %v3151
        %3350 = vmatpush1.msra.mxu0 %v3150
        %3351 = vmatprep.subr.mxu0 %v3155
        %3352 = vmatpush1.msra.mxu0 %v3154
        %3353 = vmatprep.subr.mxu0 %v3159
        %3354 = vmatpush1.msra.mxu0 %v3158
        %3355 = vmatprep.subr.mxu0 %v3163
        %3356 = vmatpush1.msra.mxu0 %v3162
        %3357 = vmatprep.subr.mxu0 %v3167
        %3358 = vmatpush1.msra.mxu0 %v3166
        %3359 = vmatprep.subr.mxu0 %v3171
        %3360 = vmatpush1.msra.mxu0 %v3170
        %3361 = vmatprep.subr.mxu0 %v3175
        %3362 = vmatpush1.msra.mxu0 %v3174
        %3363 = vmatprep.subr.mxu0 %v3179
        %3364 = vmatpush1.msra.mxu0 %v3178
        %3365 = vmatprep.subr.mxu0 %v3183
        %3366 = vmatpush1.msra.mxu0 %v3182
        %3367 = vmatprep.subr.mxu0 %v3187
        %3368 = vmatpush1.msra.mxu0 %v3186
        %3369 = vmatprep.subr.mxu0 %v3191
        %3370 = vmatpush1.msra.mxu0 %v3190
        %3371 = vmatprep.subr.mxu0 %v3195
        %3372 = vmatpush1.msra.mxu0 %v3194
        %3373 = vmatprep.subr.mxu0 %v3199
        %3374 = vmatpush1.msra.mxu0 %v3198
        %3375 = vmatprep.subr.mxu0 %v3203
        %3376 = vmatpush1.msra.mxu0 %v3202
        %3377 = vmatprep.subr.mxu0 %v3207
        %3378 = vmatpush1.msra.mxu0 %v3206
        %3379 = vmatprep.subr.mxu0 %v3211
        %3380 = vmatpush1.msra.mxu0 %v3210
        %3381 = vmatprep.subr.mxu0 %v3215
        %3382 = vmatpush1.msra.mxu0 %v3214
        %3383 = vmatprep.subr.mxu0 %v3219
        %3384 = vmatpush1.msra.mxu0 %v3218
        %3385 = vmatprep.subr.mxu0 %v3223
        %3386 = vmatpush1.msra.mxu0 %v3222
        %3387 = vmatprep.subr.mxu0 %v3227
        %3388 = vmatpush1.msra.mxu0 %v3226
        %3389 = vmatprep.subr.mxu0 %v3231
        %3390 = vmatpush1.msra.mxu0 %v3230
        %3391 = vmatprep.subr.mxu0 %v3235
        %3392 = vmatpush1.msra.mxu0 %v3234
        %3393 = vmatprep.subr.mxu0 %v3239
        %3394 = vmatpush1.msra.mxu0 %v3238
        %3395 = vmatprep.subr.mxu0 %v3243
        %3396 = vmatpush1.msra.mxu0 %v3242
        %3397 = vmatprep.subr.mxu0 %v3247
        %3398 = vmatpush1.msra.mxu0 %v3246
        %3399 = vmatprep.subr.mxu0 %v3251
        %3400 = vmatpush1.msra.mxu0 %v3250
        %3401 = vmatprep.subr.mxu0 %v3255
        %3402 = vmatpush1.msra.mxu0 %v3254
        %3403 = vmatprep.subr.mxu0 %v3259
        %3404 = vmatpush1.msra.mxu0 %v3258
        %3405 = vmatprep.subr.mxu0 %v3263
        %3406 = vmatpush1.msra.mxu0 %v3262
        %3407 = vmatprep.mubr.f32.mxu0 %v3002
        %3408 = vmatmul.mubr.f32.gmra.mrb[0].mxu0 %v3000
        %v3409 = vpop.f32.mrb[0].mxu0
        %v3410 = vadd.f32 %v3333, %v3409
        %v3411 = vpop.f32.mrb[0].mxu0
        %v3412 = vadd.f32 %v3335, %v3411
        %3413 = vmatprep.mubr.f32.mxu0 %v3008
        %3414 = vmatmul.mubr.f32.gmra.mrb[0].mxu0 %v3006
        %v3415 = vpop.f32.mrb[0].mxu0
        %v3416 = vadd.f32 %v3339, %v3415
        %v3417 = vpop.f32.mrb[0].mxu0
        %v3418 = vadd.f32 %v3341, %v3417
        %3419 = vdwg.mxu0
        %3420 = vmatprep.subr.mxu0 %v3013
        %3421 = vmatpush1.msra.mxu0 %v3012
        %3422 = vmatprep.subr.mxu0 %v3017
        %3423 = vmatpush1.msra.mxu0 %v3016
        %3424 = vmatprep.subr.mxu0 %v3021
        %3425 = vmatpush1.msra.mxu0 %v3020
        %3426 = vmatprep.subr.mxu0 %v3025
        %3427 = vmatpush1.msra.mxu0 %v3024
        %3428 = vmatprep.subr.mxu0 %v3029
        %3429 = vmatpush1.msra.mxu0 %v3028
        %3430 = vmatprep.subr.mxu0 %v3033
        %3431 = vmatpush1.msra.mxu0 %v3032
        %3432 = vmatprep.subr.mxu0 %v3037
        %3433 = vmatpush1.msra.mxu0 %v3036
        %3434 = vmatprep.subr.mxu0 %v3041
        %3435 = vmatpush1.msra.mxu0 %v3040
        %3436 = vmatprep.subr.mxu0 %v3045
        %3437 = vmatpush1.msra.mxu0 %v3044
        %3438 = vmatprep.subr.mxu0 %v3049
        %3439 = vmatpush1.msra.mxu0 %v3048
        %3440 = vmatprep.subr.mxu0 %v3053
        %3441 = vmatpush1.msra.mxu0 %v3052
        %3442 = vmatprep.subr.mxu0 %v3057
        %3443 = vmatpush1.msra.mxu0 %v3056
        %3444 = vmatprep.subr.mxu0 %v3061
        %3445 = vmatpush1.msra.mxu0 %v3060
        %3446 = vmatprep.subr.mxu0 %v3065
        %3447 = vmatpush1.msra.mxu0 %v3064
        %3448 = vmatprep.subr.mxu0 %v3069
        %3449 = vmatpush1.msra.mxu0 %v3068
        %3450 = vmatprep.subr.mxu0 %v3073
        %3451 = vmatpush1.msra.mxu0 %v3072
        %3452 = vmatprep.subr.mxu0 %v3077
        %3453 = vmatpush1.msra.mxu0 %v3076
        %3454 = vmatprep.subr.mxu0 %v3081
        %3455 = vmatpush1.msra.mxu0 %v3080
        %3456 = vmatprep.subr.mxu0 %v3085
        %3457 = vmatpush1.msra.mxu0 %v3084
        %3458 = vmatprep.subr.mxu0 %v3089
        %3459 = vmatpush1.msra.mxu0 %v3088
        %3460 = vmatprep.subr.mxu0 %v3093
        %3461 = vmatpush1.msra.mxu0 %v3092
        %3462 = vmatprep.subr.mxu0 %v3097
        %3463 = vmatpush1.msra.mxu0 %v3096
        %3464 = vmatprep.subr.mxu0 %v3101
        %3465 = vmatpush1.msra.mxu0 %v3100
        %3466 = vmatprep.subr.mxu0 %v3105
        %3467 = vmatpush1.msra.mxu0 %v3104
        %3468 = vmatprep.subr.mxu0 %v3109
        %3469 = vmatpush1.msra.mxu0 %v3108
        %3470 = vmatprep.subr.mxu0 %v3113
        %3471 = vmatpush1.msra.mxu0 %v3112
        %3472 = vmatprep.subr.mxu0 %v3117
        %3473 = vmatpush1.msra.mxu0 %v3116
        %3474 = vmatprep.subr.mxu0 %v3121
        %3475 = vmatpush1.msra.mxu0 %v3120
        %3476 = vmatprep.subr.mxu0 %v3125
        %3477 = vmatpush1.msra.mxu0 %v3124
        %3478 = vmatprep.subr.mxu0 %v3129
        %3479 = vmatpush1.msra.mxu0 %v3128
        %3480 = vmatprep.subr.mxu0 %v3133
        %3481 = vmatpush1.msra.mxu0 %v3132
        %3482 = vmatprep.subr.mxu0 %v3137
        %3483 = vmatpush1.msra.mxu0 %v3136
        %3484 = vmatprep.mubr.f32.mxu0 %v2925
        %3485 = vmatmul.mubr.f32.gmra.mrb[0].mxu0 %v2923
        %v3486 = vpop.f32.mrb[0].mxu0
        %v3487 = vadd.f32 0.0, %v3486
        %v3488 = vpop.f32.mrb[0].mxu0
        %v3489 = vadd.f32 0.0, %v3488
        %3490 = vmatprep.mubr.f32.mxu0 %v2931
        %3491 = vmatmul.mubr.f32.gmra.mrb[0].mxu0 %v2929
        %v3492 = vpop.f32.mrb[0].mxu0
        %v3493 = vadd.f32 0.0, %v3492
        %v3494 = vpop.f32.mrb[0].mxu0
        %v3495 = vadd.f32 0.0, %v3494
        %3496 = vdwg.mxu0
        %3497 = vmatprep.subr.mxu0 %v3141
        %3498 = vmatpush1.msra.mxu0 %v3140
        %3499 = vmatprep.subr.mxu0 %v3145
        %3500 = vmatpush1.msra.mxu0 %v3144
        %3501 = vmatprep.subr.mxu0 %v3149
        %3502 = vmatpush1.msra.mxu0 %v3148
        %3503 = vmatprep.subr.mxu0 %v3153
        %3504 = vmatpush1.msra.mxu0 %v3152
        %3505 = vmatprep.subr.mxu0 %v3157
        %3506 = vmatpush1.msra.mxu0 %v3156
        %3507 = vmatprep.subr.mxu0 %v3161
        %3508 = vmatpush1.msra.mxu0 %v3160
        %3509 = vmatprep.subr.mxu0 %v3165
        %3510 = vmatpush1.msra.mxu0 %v3164
        %3511 = vmatprep.subr.mxu0 %v3169
        %3512 = vmatpush1.msra.mxu0 %v3168
        %3513 = vmatprep.subr.mxu0 %v3173
        %3514 = vmatpush1.msra.mxu0 %v3172
        %3515 = vmatprep.subr.mxu0 %v3177
        %3516 = vmatpush1.msra.mxu0 %v3176
        %3517 = vmatprep.subr.mxu0 %v3181
        %3518 = vmatpush1.msra.mxu0 %v3180
        %3519 = vmatprep.subr.mxu0 %v3185
        %3520 = vmatpush1.msra.mxu0 %v3184
        %3521 = vmatprep.subr.mxu0 %v3189
        %3522 = vmatpush1.msra.mxu0 %v3188
        %3523 = vmatprep.subr.mxu0 %v3193
        %3524 = vmatpush1.msra.mxu0 %v3192
        %3525 = vmatprep.subr.mxu0 %v3197
        %3526 = vmatpush1.msra.mxu0 %v3196
        %3527 = vmatprep.subr.mxu0 %v3201
        %3528 = vmatpush1.msra.mxu0 %v3200
        %3529 = vmatprep.subr.mxu0 %v3205
        %3530 = vmatpush1.msra.mxu0 %v3204
        %3531 = vmatprep.subr.mxu0 %v3209
        %3532 = vmatpush1.msra.mxu0 %v3208
        %3533 = vmatprep.subr.mxu0 %v3213
        %3534 = vmatpush1.msra.mxu0 %v3212
        %3535 = vmatprep.subr.mxu0 %v3217
        %3536 = vmatpush1.msra.mxu0 %v3216
        %3537 = vmatprep.subr.mxu0 %v3221
        %3538 = vmatpush1.msra.mxu0 %v3220
        %3539 = vmatprep.subr.mxu0 %v3225
        %3540 = vmatpush1.msra.mxu0 %v3224
        %3541 = vmatprep.subr.mxu0 %v3229
        %3542 = vmatpush1.msra.mxu0 %v3228
        %3543 = vmatprep.subr.mxu0 %v3233
        %3544 = vmatpush1.msra.mxu0 %v3232
        %3545 = vmatprep.subr.mxu0 %v3237
        %3546 = vmatpush1.msra.mxu0 %v3236
        %3547 = vmatprep.subr.mxu0 %v3241
        %3548 = vmatpush1.msra.mxu0 %v3240
        %3549 = vmatprep.subr.mxu0 %v3245
        %3550 = vmatpush1.msra.mxu0 %v3244
        %3551 = vmatprep.subr.mxu0 %v3249
        %3552 = vmatpush1.msra.mxu0 %v3248
        %3553 = vmatprep.subr.mxu0 %v3253
        %3554 = vmatpush1.msra.mxu0 %v3252
        %3555 = vmatprep.subr.mxu0 %v3257
        %3556 = vmatpush1.msra.mxu0 %v3256
        %3557 = vmatprep.subr.mxu0 %v3261
        %3558 = vmatpush1.msra.mxu0 %v3260
        %3559 = vmatprep.subr.mxu0 %v3265
        %3560 = vmatpush1.msra.mxu0 %v3264
        %3561 = vmatprep.mubr.f32.mxu0 %v3002
        %3562 = vmatmul.mubr.f32.gmra.mrb[0].mxu0 %v3000
        %v3563 = vpop.f32.mrb[0].mxu0
        %v3564 = vadd.f32 %v3487, %v3563
        %v3565 = vpop.f32.mrb[0].mxu0
        %v3566 = vadd.f32 %v3489, %v3565
        %3567 = vmatprep.mubr.f32.mxu0 %v3008
        %3568 = vmatmul.mubr.f32.gmra.mrb[0].mxu0 %v3006
        %v3569 = vpop.f32.mrb[0].mxu0
        %v3570 = vadd.f32 %v3493, %v3569
        %v3571 = vpop.f32.mrb[0].mxu0
        %v3572 = vadd.f32 %v3495, %v3571
        %3573 = vdwg.mxu0
        %3574 = vmatprep.subr.mxu0 %v2601
        %3575 = vmatpush1.msra.mxu0 %v2600
        %3576 = vmatprep.subr.mxu0 %v2605
        %3577 = vmatpush1.msra.mxu0 %v2604
        %3578 = vmatprep.subr.mxu0 %v2609
        %3579 = vmatpush1.msra.mxu0 %v2608
        %3580 = vmatprep.subr.mxu0 %v2613
        %3581 = vmatpush1.msra.mxu0 %v2612
        %3582 = vmatprep.subr.mxu0 %v2617
        %3583 = vmatpush1.msra.mxu0 %v2616
        %3584 = vmatprep.subr.mxu0 %v2621
        %3585 = vmatpush1.msra.mxu0 %v2620
        %3586 = vmatprep.subr.mxu0 %v2625
        %3587 = vmatpush1.msra.mxu0 %v2624
        %3588 = vmatprep.subr.mxu0 %v2629
        %3589 = vmatpush1.msra.mxu0 %v2628
        %3590 = vmatprep.subr.mxu0 %v2633
        %3591 = vmatpush1.msra.mxu0 %v2632
        %3592 = vmatprep.subr.mxu0 %v2637
        %3593 = vmatpush1.msra.mxu0 %v2636
        %3594 = vmatprep.subr.mxu0 %v2641
        %3595 = vmatpush1.msra.mxu0 %v2640
        %3596 = vmatprep.subr.mxu0 %v2645
        %3597 = vmatpush1.msra.mxu0 %v2644
        %3598 = vmatprep.subr.mxu0 %v2649
        %3599 = vmatpush1.msra.mxu0 %v2648
        %3600 = vmatprep.subr.mxu0 %v2653
        %3601 = vmatpush1.msra.mxu0 %v2652
        %3602 = vmatprep.subr.mxu0 %v2657
        %3603 = vmatpush1.msra.mxu0 %v2656
        %3604 = vmatprep.subr.mxu0 %v2661
        %3605 = vmatpush1.msra.mxu0 %v2660
        %3606 = vmatprep.subr.mxu0 %v2665
        %3607 = vmatpush1.msra.mxu0 %v2664
        %3608 = vmatprep.subr.mxu0 %v2669
        %3609 = vmatpush1.msra.mxu0 %v2668
        %3610 = vmatprep.subr.mxu0 %v2673
        %3611 = vmatpush1.msra.mxu0 %v2672
        %3612 = vmatprep.subr.mxu0 %v2677
        %3613 = vmatpush1.msra.mxu0 %v2676
        %3614 = vmatprep.subr.mxu0 %v2681
        %3615 = vmatpush1.msra.mxu0 %v2680
        %3616 = vmatprep.subr.mxu0 %v2685
        %3617 = vmatpush1.msra.mxu0 %v2684
        %3618 = vmatprep.subr.mxu0 %v2689
        %3619 = vmatpush1.msra.mxu0 %v2688
        %3620 = vmatprep.subr.mxu0 %v2693
        %3621 = vmatpush1.msra.mxu0 %v2692
        %3622 = vmatprep.subr.mxu0 %v2697
        %3623 = vmatpush1.msra.mxu0 %v2696
        %3624 = vmatprep.subr.mxu0 %v2701
        %3625 = vmatpush1.msra.mxu0 %v2700
        %3626 = vmatprep.subr.mxu0 %v2705
        %3627 = vmatpush1.msra.mxu0 %v2704
        %3628 = vmatprep.subr.mxu0 %v2709
        %3629 = vmatpush1.msra.mxu0 %v2708
        %3630 = vmatprep.subr.mxu0 %v2713
        %3631 = vmatpush1.msra.mxu0 %v2712
        %3632 = vmatprep.subr.mxu0 %v2717
        %3633 = vmatpush1.msra.mxu0 %v2716
        %3634 = vmatprep.subr.mxu0 %v2721
        %3635 = vmatpush1.msra.mxu0 %v2720
        %3636 = vmatprep.subr.mxu0 %v2725
        %3637 = vmatpush1.msra.mxu0 %v2724
        %3638 = vmatprep.mubr.f32.mxu0 %v2592
        %3639 = vmatmul.mubr.f32.gmra.mrb[0].mxu0 %v2591
        %v3640 = vpop.f32.mrb[0].mxu0
        %v3641 = vadd.f32 %v3410, %v3640
        %v3642 = vpop.f32.mrb[0].mxu0
        %v3643 = vadd.f32 %v3412, %v3642
        %3644 = vmatprep.mubr.f32.mxu0 %v2596
        %3645 = vmatmul.mubr.f32.gmra.mrb[0].mxu0 %v2595
        %v3646 = vpop.f32.mrb[0].mxu0
        %v3647 = vadd.f32 %v3416, %v3646
        %v3648 = vpop.f32.mrb[0].mxu0
        %v3649 = vadd.f32 %v3418, %v3648
        %3650 = vdwg.mxu0
        %3651 = vmatprep.subr.mxu0 %v2729
        %3652 = vmatpush1.msra.mxu0 %v2728
        %3653 = vmatprep.subr.mxu0 %v2733
        %3654 = vmatpush1.msra.mxu0 %v2732
        %3655 = vmatprep.subr.mxu0 %v2737
        %3656 = vmatpush1.msra.mxu0 %v2736
        %3657 = vmatprep.subr.mxu0 %v2741
        %3658 = vmatpush1.msra.mxu0 %v2740
        %3659 = vmatprep.subr.mxu0 %v2745
        %3660 = vmatpush1.msra.mxu0 %v2744
        %3661 = vmatprep.subr.mxu0 %v2749
        %3662 = vmatpush1.msra.mxu0 %v2748
        %3663 = vmatprep.subr.mxu0 %v2753
        %3664 = vmatpush1.msra.mxu0 %v2752
        %3665 = vmatprep.subr.mxu0 %v2757
        %3666 = vmatpush1.msra.mxu0 %v2756
        %3667 = vmatprep.subr.mxu0 %v2761
        %3668 = vmatpush1.msra.mxu0 %v2760
        %3669 = vmatprep.subr.mxu0 %v2765
        %3670 = vmatpush1.msra.mxu0 %v2764
        %3671 = vmatprep.subr.mxu0 %v2769
        %3672 = vmatpush1.msra.mxu0 %v2768
        %3673 = vmatprep.subr.mxu0 %v2773
        %3674 = vmatpush1.msra.mxu0 %v2772
        %3675 = vmatprep.subr.mxu0 %v2777
        %3676 = vmatpush1.msra.mxu0 %v2776
        %3677 = vmatprep.subr.mxu0 %v2781
        %3678 = vmatpush1.msra.mxu0 %v2780
        %3679 = vmatprep.subr.mxu0 %v2785
        %3680 = vmatpush1.msra.mxu0 %v2784
        %3681 = vmatprep.subr.mxu0 %v2789
        %3682 = vmatpush1.msra.mxu0 %v2788
        %3683 = vmatprep.subr.mxu0 %v2793
        %3684 = vmatpush1.msra.mxu0 %v2792
        %3685 = vmatprep.subr.mxu0 %v2797
        %3686 = vmatpush1.msra.mxu0 %v2796
        %3687 = vmatprep.subr.mxu0 %v2801
        %3688 = vmatpush1.msra.mxu0 %v2800
        %3689 = vmatprep.subr.mxu0 %v2805
        %3690 = vmatpush1.msra.mxu0 %v2804
        %3691 = vmatprep.subr.mxu0 %v2809
        %3692 = vmatpush1.msra.mxu0 %v2808
        %3693 = vmatprep.subr.mxu0 %v2813
        %3694 = vmatpush1.msra.mxu0 %v2812
        %3695 = vmatprep.subr.mxu0 %v2817
        %3696 = vmatpush1.msra.mxu0 %v2816
        %3697 = vmatprep.subr.mxu0 %v2821
        %3698 = vmatpush1.msra.mxu0 %v2820
        %3699 = vmatprep.subr.mxu0 %v2825
        %3700 = vmatpush1.msra.mxu0 %v2824
        %3701 = vmatprep.subr.mxu0 %v2829
        %3702 = vmatpush1.msra.mxu0 %v2828
        %3703 = vmatprep.subr.mxu0 %v2833
        %3704 = vmatpush1.msra.mxu0 %v2832
        %3705 = vmatprep.subr.mxu0 %v2837
        %3706 = vmatpush1.msra.mxu0 %v2836
        %3707 = vmatprep.subr.mxu0 %v2841
        %3708 = vmatpush1.msra.mxu0 %v2840
        %3709 = vmatprep.subr.mxu0 %v2845
        %3710 = vmatpush1.msra.mxu0 %v2844
        %3711 = vmatprep.subr.mxu0 %v2849
        %3712 = vmatpush1.msra.mxu0 %v2848
        %3713 = vmatprep.subr.mxu0 %v2853
        %3714 = vmatpush1.msra.mxu0 %v2852
        %3715 = vmatprep.mubr.f32.mxu0 %v2594
        %3716 = vmatmul.mubr.f32.gmra.mrb[0].mxu0 %v2593
        %v3717 = vpop.f32.mrb[0].mxu0
        %v3718 = vadd.f32 %v3641, %v3717
        %v3719 = vpop.f32.mrb[0].mxu0
        %v3720 = vadd.f32 %v3643, %v3719
        %3721 = vmatprep.mubr.f32.mxu0 %v2598
        %3722 = vmatmul.mubr.f32.gmra.mrb[0].mxu0 %v2597
        %v3723 = vpop.f32.mrb[0].mxu0
        %v3724 = vadd.f32 %v3647, %v3723
        %v3725 = vpop.f32.mrb[0].mxu0
        %v3726 = vadd.f32 %v3649, %v3725
        %3727 = vdwg.mxu0
        %3728 = vmatprep.subr.mxu0 %v2603
        %3729 = vmatpush1.msra.mxu0 %v2602
        %3730 = vmatprep.subr.mxu0 %v2607
        %3731 = vmatpush1.msra.mxu0 %v2606
        %3732 = vmatprep.subr.mxu0 %v2611
        %3733 = vmatpush1.msra.mxu0 %v2610
        %3734 = vmatprep.subr.mxu0 %v2615
        %3735 = vmatpush1.msra.mxu0 %v2614
        %3736 = vmatprep.subr.mxu0 %v2619
        %3737 = vmatpush1.msra.mxu0 %v2618
        %3738 = vmatprep.subr.mxu0 %v2623
        %3739 = vmatpush1.msra.mxu0 %v2622
        %3740 = vmatprep.subr.mxu0 %v2627
        %3741 = vmatpush1.msra.mxu0 %v2626
        %3742 = vmatprep.subr.mxu0 %v2631
        %3743 = vmatpush1.msra.mxu0 %v2630
        %3744 = vmatprep.subr.mxu0 %v2635
        %3745 = vmatpush1.msra.mxu0 %v2634
        %3746 = vmatprep.subr.mxu0 %v2639
        %3747 = vmatpush1.msra.mxu0 %v2638
        %3748 = vmatprep.subr.mxu0 %v2643
        %3749 = vmatpush1.msra.mxu0 %v2642
        %3750 = vmatprep.subr.mxu0 %v2647
        %3751 = vmatpush1.msra.mxu0 %v2646
        %3752 = vmatprep.subr.mxu0 %v2651
        %3753 = vmatpush1.msra.mxu0 %v2650
        %3754 = vmatprep.subr.mxu0 %v2655
        %3755 = vmatpush1.msra.mxu0 %v2654
        %3756 = vmatprep.subr.mxu0 %v2659
        %3757 = vmatpush1.msra.mxu0 %v2658
        %3758 = vmatprep.subr.mxu0 %v2663
        %3759 = vmatpush1.msra.mxu0 %v2662
        %3760 = vmatprep.subr.mxu0 %v2667
        %3761 = vmatpush1.msra.mxu0 %v2666
        %3762 = vmatprep.subr.mxu0 %v2671
        %3763 = vmatpush1.msra.mxu0 %v2670
        %3764 = vmatprep.subr.mxu0 %v2675
        %3765 = vmatpush1.msra.mxu0 %v2674
        %3766 = vmatprep.subr.mxu0 %v2679
        %3767 = vmatpush1.msra.mxu0 %v2678
        %3768 = vmatprep.subr.mxu0 %v2683
        %3769 = vmatpush1.msra.mxu0 %v2682
        %3770 = vmatprep.subr.mxu0 %v2687
        %3771 = vmatpush1.msra.mxu0 %v2686
        %3772 = vmatprep.subr.mxu0 %v2691
        %3773 = vmatpush1.msra.mxu0 %v2690
        %3774 = vmatprep.subr.mxu0 %v2695
        %3775 = vmatpush1.msra.mxu0 %v2694
        %3776 = vmatprep.subr.mxu0 %v2699
        %3777 = vmatpush1.msra.mxu0 %v2698
        %3778 = vmatprep.subr.mxu0 %v2703
        %3779 = vmatpush1.msra.mxu0 %v2702
        %3780 = vmatprep.subr.mxu0 %v2707
        %3781 = vmatpush1.msra.mxu0 %v2706
        %3782 = vmatprep.subr.mxu0 %v2711
        %3783 = vmatpush1.msra.mxu0 %v2710
        %3784 = vmatprep.subr.mxu0 %v2715
        %3785 = vmatpush1.msra.mxu0 %v2714
        %3786 = vmatprep.subr.mxu0 %v2719
        %3787 = vmatpush1.msra.mxu0 %v2718
        %3788 = vmatprep.subr.mxu0 %v2723
        %3789 = vmatpush1.msra.mxu0 %v2722
        %3790 = vmatprep.subr.mxu0 %v2727
        %3791 = vmatpush1.msra.mxu0 %v2726
        %3792 = vmatprep.mubr.f32.mxu0 %v2592
        %3793 = vmatmul.mubr.f32.gmra.mrb[0].mxu0 %v2591
        %v3794 = vpop.f32.mrb[0].mxu0
        %v3795 = vadd.f32 %v3564, %v3794
        %v3796 = vpop.f32.mrb[0].mxu0
        %v3797 = vadd.f32 %v3566, %v3796
        %3798 = vmatprep.mubr.f32.mxu0 %v2596
        %3799 = vmatmul.mubr.f32.gmra.mrb[0].mxu0 %v2595
        %v3800 = vpop.f32.mrb[0].mxu0
        %v3801 = vadd.f32 %v3570, %v3800
        %v3802 = vpop.f32.mrb[0].mxu0
        %v3803 = vadd.f32 %v3572, %v3802
        %3804 = vdwg.mxu0
        %3805 = vmatprep.subr.mxu0 %v2731
        %3806 = vmatpush1.msra.mxu0 %v2730
        %3807 = vmatprep.subr.mxu0 %v2735
        %3808 = vmatpush1.msra.mxu0 %v2734
        %3809 = vmatprep.subr.mxu0 %v2739
        %3810 = vmatpush1.msra.mxu0 %v2738
        %3811 = vmatprep.subr.mxu0 %v2743
        %3812 = vmatpush1.msra.mxu0 %v2742
        %3813 = vmatprep.subr.mxu0 %v2747
        %3814 = vmatpush1.msra.mxu0 %v2746
        %3815 = vmatprep.subr.mxu0 %v2751
        %3816 = vmatpush1.msra.mxu0 %v2750
        %3817 = vmatprep.subr.mxu0 %v2755
        %3818 = vmatpush1.msra.mxu0 %v2754
        %3819 = vmatprep.subr.mxu0 %v2759
        %3820 = vmatpush1.msra.mxu0 %v2758
        %3821 = vmatprep.subr.mxu0 %v2763
        %3822 = vmatpush1.msra.mxu0 %v2762
        %3823 = vmatprep.subr.mxu0 %v2767
        %3824 = vmatpush1.msra.mxu0 %v2766
        %3825 = vmatprep.subr.mxu0 %v2771
        %3826 = vmatpush1.msra.mxu0 %v2770
        %3827 = vmatprep.subr.mxu0 %v2775
        %3828 = vmatpush1.msra.mxu0 %v2774
        %3829 = vmatprep.subr.mxu0 %v2779
        %3830 = vmatpush1.msra.mxu0 %v2778
        %3831 = vmatprep.subr.mxu0 %v2783
        %3832 = vmatpush1.msra.mxu0 %v2782
        %3833 = vmatprep.subr.mxu0 %v2787
        %3834 = vmatpush1.msra.mxu0 %v2786
        %3835 = vmatprep.subr.mxu0 %v2791
        %3836 = vmatpush1.msra.mxu0 %v2790
        %3837 = vmatprep.subr.mxu0 %v2795
        %3838 = vmatpush1.msra.mxu0 %v2794
        %3839 = vmatprep.subr.mxu0 %v2799
        %3840 = vmatpush1.msra.mxu0 %v2798
        %3841 = vmatprep.subr.mxu0 %v2803
        %3842 = vmatpush1.msra.mxu0 %v2802
        %3843 = vmatprep.subr.mxu0 %v2807
        %3844 = vmatpush1.msra.mxu0 %v2806
        %3845 = vmatprep.subr.mxu0 %v2811
        %3846 = vmatpush1.msra.mxu0 %v2810
        %3847 = vmatprep.subr.mxu0 %v2815
        %3848 = vmatpush1.msra.mxu0 %v2814
        %3849 = vmatprep.subr.mxu0 %v2819
        %3850 = vmatpush1.msra.mxu0 %v2818
        %3851 = vmatprep.subr.mxu0 %v2823
        %3852 = vmatpush1.msra.mxu0 %v2822
        %3853 = vmatprep.subr.mxu0 %v2827
        %3854 = vmatpush1.msra.mxu0 %v2826
        %3855 = vmatprep.subr.mxu0 %v2831
        %3856 = vmatpush1.msra.mxu0 %v2830
        %3857 = vmatprep.subr.mxu0 %v2835
        %3858 = vmatpush1.msra.mxu0 %v2834
        %3859 = vmatprep.subr.mxu0 %v2839
        %3860 = vmatpush1.msra.mxu0 %v2838
        %3861 = vmatprep.subr.mxu0 %v2843
        %3862 = vmatpush1.msra.mxu0 %v2842
        %3863 = vmatprep.subr.mxu0 %v2847
        %3864 = vmatpush1.msra.mxu0 %v2846
        %3865 = vmatprep.subr.mxu0 %v2851
        %3866 = vmatpush1.msra.mxu0 %v2850
        %3867 = vmatprep.subr.mxu0 %v2855
        %3868 = vmatpush1.msra.mxu0 %v2854
        %3869 = vmatprep.mubr.f32.mxu0 %v2594
        %3870 = vmatmul.mubr.f32.gmra.mrb[0].mxu0 %v2593
        %v3871 = vpop.f32.mrb[0].mxu0
        %v3872 = vadd.f32 %v3795, %v3871
        %v3873 = vpop.f32.mrb[0].mxu0
        %v3874 = vadd.f32 %v3797, %v3873
        %3875 = vmatprep.mubr.f32.mxu0 %v2598
        %3876 = vmatmul.mubr.f32.gmra.mrb[0].mxu0 %v2597
        %v3877 = vpop.f32.mrb[0].mxu0
        %v3878 = vadd.f32 %v3801, %v3877
        %v3879 = vpop.f32.mrb[0].mxu0
        %v3880 = vadd.f32 %v3803, %v3879
        %3881 = vdwg.mxu0
        %3882 = vmatprep.subr.mxu0 %v2592
        %3883 = vmatpush1.msra.mxu0 %v2591
        %3884 = vmatprep.subr.mxu0 %v2596
        %3885 = vmatpush1.msra.mxu0 %v2595
        %3886 = vmatprep.subr.mxu0 0.0
        %3887 = vmatpush1.msra.mxu0 0.0
        %3888 = vmatprep.subr.mxu0 0.0
        %3889 = vmatpush1.msra.mxu0 0.0
        %3890 = vmatprep.subr.mxu0 0.0
        %3891 = vmatpush1.msra.mxu0 0.0
        %3892 = vmatprep.subr.mxu0 0.0
        %3893 = vmatpush1.msra.mxu0 0.0
        %3894 = vmatprep.subr.mxu0 0.0
        %3895 = vmatpush1.msra.mxu0 0.0
        %3896 = vmatprep.subr.mxu0 0.0
        %3897 = vmatpush1.msra.mxu0 0.0
        %3898 = vmatprep.subr.mxu0 0.0
        %3899 = vmatpush1.msra.mxu0 0.0
        %3900 = vmatprep.subr.mxu0 0.0
        %3901 = vmatpush1.msra.mxu0 0.0
        %3902 = vmatprep.subr.mxu0 0.0
        %3903 = vmatpush1.msra.mxu0 0.0
        %3904 = vmatprep.subr.mxu0 0.0
        %3905 = vmatpush1.msra.mxu0 0.0
        %3906 = vmatprep.subr.mxu0 0.0
        %3907 = vmatpush1.msra.mxu0 0.0
        %3908 = vmatprep.subr.mxu0 0.0
        %3909 = vmatpush1.msra.mxu0 0.0
        %3910 = vmatprep.subr.mxu0 0.0
        %3911 = vmatpush1.msra.mxu0 0.0
        %3912 = vmatprep.subr.mxu0 0.0
        %3913 = vmatpush1.msra.mxu0 0.0
        %3914 = vmatprep.subr.mxu0 0.0
        %3915 = vmatpush1.msra.mxu0 0.0
        %3916 = vmatprep.subr.mxu0 0.0
        %3917 = vmatpush1.msra.mxu0 0.0
        %3918 = vmatprep.subr.mxu0 0.0
        %3919 = vmatpush1.msra.mxu0 0.0
        %3920 = vmatprep.subr.mxu0 0.0
        %3921 = vmatpush1.msra.mxu0 0.0
        %3922 = vmatprep.subr.mxu0 0.0
        %3923 = vmatpush1.msra.mxu0 0.0
        %3924 = vmatprep.subr.mxu0 0.0
        %3925 = vmatpush1.msra.mxu0 0.0
        %3926 = vmatprep.subr.mxu0 0.0
        %3927 = vmatpush1.msra.mxu0 0.0
        %3928 = vmatprep.subr.mxu0 0.0
        %3929 = vmatpush1.msra.mxu0 0.0
        %3930 = vmatprep.subr.mxu0 0.0
        %3931 = vmatpush1.msra.mxu0 0.0
        %3932 = vmatprep.subr.mxu0 0.0
        %3933 = vmatpush1.msra.mxu0 0.0
        %3934 = vmatprep.subr.mxu0 0.0
        %3935 = vmatpush1.msra.mxu0 0.0
        %3936 = vmatprep.subr.mxu0 0.0
        %3937 = vmatpush1.msra.mxu0 0.0
        %3938 = vmatprep.subr.mxu0 0.0
        %3939 = vmatpush1.msra.mxu0 0.0
        %3940 = vmatprep.subr.mxu0 0.0
        %3941 = vmatpush1.msra.mxu0 0.0
        %3942 = vmatprep.subr.mxu0 0.0
        %3943 = vmatpush1.msra.mxu0 0.0
        %3944 = vmatprep.subr.mxu0 0.0
        %3945 = vmatpush1.msra.mxu0 0.0
        %3946 = vmatprep.mubr.f32.mxu0 0.0
        %3947 = vmatmul.mubr.f32.gmra.mrb[0].mxu0 %v1829
        %v3948 = vpop.f32.mrb[0].mxu0
        %v3949 = vadd.f32 0.0, %v3948
        %v3950 = vpop.f32.mrb[0].mxu0
        %v3951 = vadd.f32 0.0, %v3950
        %3952 = vmatprep.mubr.f32.mxu0 0.0
        %3953 = vmatmul.mubr.f32.gmra.mrb[0].mxu0 %v1832
        %v3954 = vpop.f32.mrb[0].mxu0
        %v3955 = vadd.f32 0.0, %v3954
        %v3956 = vpop.f32.mrb[0].mxu0
        %v3957 = vadd.f32 0.0, %v3956
        %3958 = vdwg.mxu0
        %3959 = vmatprep.subr.mxu0 %v2594
        %3960 = vmatpush1.msra.mxu0 %v2593
        %3961 = vmatprep.subr.mxu0 %v2598
        %3962 = vmatpush1.msra.mxu0 %v2597
        %3963 = vmatprep.subr.mxu0 0.0
        %3964 = vmatpush1.msra.mxu0 0.0
        %3965 = vmatprep.subr.mxu0 0.0
        %3966 = vmatpush1.msra.mxu0 0.0
        %3967 = vmatprep.subr.mxu0 0.0
        %3968 = vmatpush1.msra.mxu0 0.0
        %3969 = vmatprep.subr.mxu0 0.0
        %3970 = vmatpush1.msra.mxu0 0.0
        %3971 = vmatprep.subr.mxu0 0.0
        %3972 = vmatpush1.msra.mxu0 0.0
        %3973 = vmatprep.subr.mxu0 0.0
        %3974 = vmatpush1.msra.mxu0 0.0
        %3975 = vmatprep.subr.mxu0 0.0
        %3976 = vmatpush1.msra.mxu0 0.0
        %3977 = vmatprep.subr.mxu0 0.0
        %3978 = vmatpush1.msra.mxu0 0.0
        %3979 = vmatprep.subr.mxu0 0.0
        %3980 = vmatpush1.msra.mxu0 0.0
        %3981 = vmatprep.subr.mxu0 0.0
        %3982 = vmatpush1.msra.mxu0 0.0
        %3983 = vmatprep.subr.mxu0 0.0
        %3984 = vmatpush1.msra.mxu0 0.0
        %3985 = vmatprep.subr.mxu0 0.0
        %3986 = vmatpush1.msra.mxu0 0.0
        %3987 = vmatprep.subr.mxu0 0.0
        %3988 = vmatpush1.msra.mxu0 0.0
        %3989 = vmatprep.subr.mxu0 0.0
        %3990 = vmatpush1.msra.mxu0 0.0
        %3991 = vmatprep.subr.mxu0 0.0
        %3992 = vmatpush1.msra.mxu0 0.0
        %3993 = vmatprep.subr.mxu0 0.0
        %3994 = vmatpush1.msra.mxu0 0.0
        %3995 = vmatprep.subr.mxu0 0.0
        %3996 = vmatpush1.msra.mxu0 0.0
        %3997 = vmatprep.subr.mxu0 0.0
        %3998 = vmatpush1.msra.mxu0 0.0
        %3999 = vmatprep.subr.mxu0 0.0
        %4000 = vmatpush1.msra.mxu0 0.0
        %4001 = vmatprep.subr.mxu0 0.0
        %4002 = vmatpush1.msra.mxu0 0.0
        %4003 = vmatprep.subr.mxu0 0.0
        %4004 = vmatpush1.msra.mxu0 0.0
        %4005 = vmatprep.subr.mxu0 0.0
        %4006 = vmatpush1.msra.mxu0 0.0
        %4007 = vmatprep.subr.mxu0 0.0
        %4008 = vmatpush1.msra.mxu0 0.0
        %4009 = vmatprep.subr.mxu0 0.0
        %4010 = vmatpush1.msra.mxu0 0.0
        %4011 = vmatprep.subr.mxu0 0.0
        %4012 = vmatpush1.msra.mxu0 0.0
        %4013 = vmatprep.subr.mxu0 0.0
        %4014 = vmatpush1.msra.mxu0 0.0
        %4015 = vmatprep.subr.mxu0 0.0
        %4016 = vmatpush1.msra.mxu0 0.0
        %4017 = vmatprep.subr.mxu0 0.0
        %4018 = vmatpush1.msra.mxu0 0.0
        %4019 = vmatprep.subr.mxu0 0.0
        %4020 = vmatpush1.msra.mxu0 0.0
        %4021 = vmatprep.subr.mxu0 0.0
        %4022 = vmatpush1.msra.mxu0 0.0
        %4023 = vmatprep.mubr.f32.mxu0 0.0
        %4024 = vmatmul.mubr.f32.gmra.mrb[0].mxu0 %v1829
        %v4025 = vpop.f32.mrb[0].mxu0
        %v4026 = vadd.f32 0.0, %v4025
        %v4027 = vpop.f32.mrb[0].mxu0
        %v4028 = vadd.f32 0.0, %v4027
        %4029 = vmatprep.mubr.f32.mxu0 0.0
        %4030 = vmatmul.mubr.f32.gmra.mrb[0].mxu0 %v1832
        %v4031 = vpop.f32.mrb[0].mxu0
        %v4032 = vadd.f32 0.0, %v4031
        %v4033 = vpop.f32.mrb[0].mxu0
        %v4034 = vadd.f32 0.0, %v4033
        %4035 = vdwg.mxu0
        %s4036 = scalar_lea.vmem [#allocation8], 4096
        %v4037 = vld [vmem:[%s4036] sm:$0xff]
        %v4038 = vld [vmem:[%s4036 + $0x8] sm:$0xff]
        %v4039 = vld [vmem:[%s4036 + $0x10] sm:$0xff]
        %v4040 = vld [vmem:[%s4036 + $0x18] sm:$0xff]
        %v4041 = vld [vmem:[%s4036 + $0x20] sm:$0xff]
        %v4042 = vld [vmem:[%s4036 + $0x28] sm:$0xff]
        %v4043 = vld [vmem:[%s4036 + $0x30] sm:$0xff]
        %v4044 = vld [vmem:[%s4036 + $0x38] sm:$0xff]
        %v4045 = vld [vmem:[%s4036 + $0x40] sm:$0xff]
        %v4046 = vld [vmem:[%s4036 + $0x48] sm:$0xff]
        %v4047 = vld [vmem:[%s4036 + $0x50] sm:$0xff]
        %v4048 = vld [vmem:[%s4036 + $0x58] sm:$0xff]
        %v4049 = vld [vmem:[%s4036 + $0x60] sm:$0xff]
        %v4050 = vld [vmem:[%s4036 + $0x68] sm:$0xff]
        %v4051 = vld [vmem:[%s4036 + $0x70] sm:$0xff]
        %v4052 = vld [vmem:[%s4036 + $0x78] sm:$0xff]
        %v4053 = vld [vmem:[%s4036 + $0x80] sm:$0xff]
        %v4054 = vld [vmem:[%s4036 + $0x88] sm:$0xff]
        %v4055 = vld [vmem:[%s4036 + $0x90] sm:$0xff]
        %v4056 = vld [vmem:[%s4036 + $0x98] sm:$0xff]
        %v4057 = vld [vmem:[%s4036 + $0xa0] sm:$0xff]
        %v4058 = vld [vmem:[%s4036 + $0xa8] sm:$0xff]
        %v4059 = vld [vmem:[%s4036 + $0xb0] sm:$0xff]
        %v4060 = vld [vmem:[%s4036 + $0xb8] sm:$0xff]
        %v4061 = vld [vmem:[%s4036 + $0xc0] sm:$0xff]
        %v4062 = vld [vmem:[%s4036 + $0xc8] sm:$0xff]
        %v4063 = vld [vmem:[%s4036 + $0xd0] sm:$0xff]
        %v4064 = vld [vmem:[%s4036 + $0xd8] sm:$0xff]
        %v4065 = vld [vmem:[%s4036 + $0xe0] sm:$0xff]
        %v4066 = vld [vmem:[%s4036 + $0xe8] sm:$0xff]
        %v4067 = vld [vmem:[%s4036 + $0xf0] sm:$0xff]
        %v4068 = vld [vmem:[%s4036 + $0xf8] sm:$0xff]
        %v4069 = vld [vmem:[%s4036 + $0x100] sm:$0xff]
        %v4070 = vld [vmem:[%s4036 + $0x108] sm:$0xff]
        %v4071 = vld [vmem:[%s4036 + $0x110] sm:$0xff]
        %v4072 = vld [vmem:[%s4036 + $0x118] sm:$0xff]
        %v4073 = vld [vmem:[%s4036 + $0x120] sm:$0xff]
        %v4074 = vld [vmem:[%s4036 + $0x128] sm:$0xff]
        %v4075 = vld [vmem:[%s4036 + $0x130] sm:$0xff]
        %v4076 = vld [vmem:[%s4036 + $0x138] sm:$0xff]
        %v4077 = vld [vmem:[%s4036 + $0x140] sm:$0xff]
        %v4078 = vld [vmem:[%s4036 + $0x148] sm:$0xff]
        %v4079 = vld [vmem:[%s4036 + $0x150] sm:$0xff]
        %v4080 = vld [vmem:[%s4036 + $0x158] sm:$0xff]
        %v4081 = vld [vmem:[%s4036 + $0x160] sm:$0xff]
        %v4082 = vld [vmem:[%s4036 + $0x168] sm:$0xff]
        %v4083 = vld [vmem:[%s4036 + $0x170] sm:$0xff]
        %v4084 = vld [vmem:[%s4036 + $0x178] sm:$0xff]
        %v4085 = vld [vmem:[%s4036 + $0x180] sm:$0xff]
        %v4086 = vld [vmem:[%s4036 + $0x188] sm:$0xff]
        %v4087 = vld [vmem:[%s4036 + $0x190] sm:$0xff]
        %v4088 = vld [vmem:[%s4036 + $0x198] sm:$0xff]
        %v4089 = vld [vmem:[%s4036 + $0x1a0] sm:$0xff]
        %v4090 = vld [vmem:[%s4036 + $0x1a8] sm:$0xff]
        %v4091 = vld [vmem:[%s4036 + $0x1b0] sm:$0xff]
        %v4092 = vld [vmem:[%s4036 + $0x1b8] sm:$0xff]
        %v4093 = vld [vmem:[%s4036 + $0x1c0] sm:$0xff]
        %v4094 = vld [vmem:[%s4036 + $0x1c8] sm:$0xff]
        %v4095 = vld [vmem:[%s4036 + $0x1d0] sm:$0xff]
        %v4096 = vld [vmem:[%s4036 + $0x1d8] sm:$0xff]
        %v4097 = vld [vmem:[%s4036 + $0x1e0] sm:$0xff]
        %v4098 = vld [vmem:[%s4036 + $0x1e8] sm:$0xff]
        %v4099 = vld [vmem:[%s4036 + $0x1f0] sm:$0xff]
        %v4100 = vld [vmem:[%s4036 + $0x1f8] sm:$0xff]
        %v4101 = vld [vmem:[%s4036 + $0x200] sm:$0xff]
        %v4102 = vld [vmem:[%s4036 + $0x208] sm:$0xff]
        %v4103 = vld [vmem:[%s4036 + $0x210] sm:$0xff]
        %v4104 = vld [vmem:[%s4036 + $0x218] sm:$0xff]
        %v4105 = vld [vmem:[%s4036 + $0x220] sm:$0xff]
        %v4106 = vld [vmem:[%s4036 + $0x228] sm:$0xff]
        %v4107 = vld [vmem:[%s4036 + $0x230] sm:$0xff]
        %v4108 = vld [vmem:[%s4036 + $0x238] sm:$0xff]
        %v4109 = vld [vmem:[%s4036 + $0x240] sm:$0xff]
        %v4110 = vld [vmem:[%s4036 + $0x248] sm:$0xff]
        %v4111 = vld [vmem:[%s4036 + $0x250] sm:$0xff]
        %v4112 = vld [vmem:[%s4036 + $0x258] sm:$0xff]
        %v4113 = vld [vmem:[%s4036 + $0x260] sm:$0xff]
        %v4114 = vld [vmem:[%s4036 + $0x268] sm:$0xff]
        %v4115 = vld [vmem:[%s4036 + $0x270] sm:$0xff]
        %v4116 = vld [vmem:[%s4036 + $0x278] sm:$0xff]
        %v4117 = vld [vmem:[%s4036 + $0x280] sm:$0xff]
        %v4118 = vld [vmem:[%s4036 + $0x288] sm:$0xff]
        %v4119 = vld [vmem:[%s4036 + $0x290] sm:$0xff]
        %v4120 = vld [vmem:[%s4036 + $0x298] sm:$0xff]
        %v4121 = vld [vmem:[%s4036 + $0x2a0] sm:$0xff]
        %v4122 = vld [vmem:[%s4036 + $0x2a8] sm:$0xff]
        %v4123 = vld [vmem:[%s4036 + $0x2b0] sm:$0xff]
        %v4124 = vld [vmem:[%s4036 + $0x2b8] sm:$0xff]
        %v4125 = vld [vmem:[%s4036 + $0x2c0] sm:$0xff]
        %v4126 = vld [vmem:[%s4036 + $0x2c8] sm:$0xff]
        %v4127 = vld [vmem:[%s4036 + $0x2d0] sm:$0xff]
        %v4128 = vld [vmem:[%s4036 + $0x2d8] sm:$0xff]
        %v4129 = vld [vmem:[%s4036 + $0x2e0] sm:$0xff]
        %v4130 = vld [vmem:[%s4036 + $0x2e8] sm:$0xff]
        %v4131 = vld [vmem:[%s4036 + $0x2f0] sm:$0xff]
        %v4132 = vld [vmem:[%s4036 + $0x2f8] sm:$0xff]
        %v4133 = vld [vmem:[%s4036 + $0x300] sm:$0xff]
        %v4134 = vld [vmem:[%s4036 + $0x308] sm:$0xff]
        %v4135 = vld [vmem:[%s4036 + $0x310] sm:$0xff]
        %v4136 = vld [vmem:[%s4036 + $0x318] sm:$0xff]
        %v4137 = vld [vmem:[%s4036 + $0x320] sm:$0xff]
        %v4138 = vld [vmem:[%s4036 + $0x328] sm:$0xff]
        %v4139 = vld [vmem:[%s4036 + $0x330] sm:$0xff]
        %v4140 = vld [vmem:[%s4036 + $0x338] sm:$0xff]
        %v4141 = vld [vmem:[%s4036 + $0x340] sm:$0xff]
        %v4142 = vld [vmem:[%s4036 + $0x348] sm:$0xff]
        %v4143 = vld [vmem:[%s4036 + $0x350] sm:$0xff]
        %v4144 = vld [vmem:[%s4036 + $0x358] sm:$0xff]
        %v4145 = vld [vmem:[%s4036 + $0x360] sm:$0xff]
        %v4146 = vld [vmem:[%s4036 + $0x368] sm:$0xff]
        %v4147 = vld [vmem:[%s4036 + $0x370] sm:$0xff]
        %v4148 = vld [vmem:[%s4036 + $0x378] sm:$0xff]
        %v4149 = vld [vmem:[%s4036 + $0x380] sm:$0xff]
        %v4150 = vld [vmem:[%s4036 + $0x388] sm:$0xff]
        %v4151 = vld [vmem:[%s4036 + $0x390] sm:$0xff]
        %v4152 = vld [vmem:[%s4036 + $0x398] sm:$0xff]
        %v4153 = vld [vmem:[%s4036 + $0x3a0] sm:$0xff]
        %v4154 = vld [vmem:[%s4036 + $0x3a8] sm:$0xff]
        %v4155 = vld [vmem:[%s4036 + $0x3b0] sm:$0xff]
        %v4156 = vld [vmem:[%s4036 + $0x3b8] sm:$0xff]
        %v4157 = vld [vmem:[%s4036 + $0x3c0] sm:$0xff]
        %v4158 = vld [vmem:[%s4036 + $0x3c8] sm:$0xff]
        %v4159 = vld [vmem:[%s4036 + $0x3d0] sm:$0xff]
        %v4160 = vld [vmem:[%s4036 + $0x3d8] sm:$0xff]
        %v4161 = vld [vmem:[%s4036 + $0x3e0] sm:$0xff]
        %v4162 = vld [vmem:[%s4036 + $0x3e8] sm:$0xff]
        %v4163 = vld [vmem:[%s4036 + $0x3f0] sm:$0xff]
        %v4164 = vld [vmem:[%s4036 + $0x3f8] sm:$0xff]
        %v4165 = vld [vmem:[%s4036 + $0x400] sm:$0xff]
        %v4166 = vld [vmem:[%s4036 + $0x408] sm:$0xff]
        %v4167 = vld [vmem:[%s4036 + $0x410] sm:$0xff]
        %v4168 = vld [vmem:[%s4036 + $0x418] sm:$0xff]
        %v4169 = vld [vmem:[%s4036 + $0x420] sm:$0xff]
        %v4170 = vld [vmem:[%s4036 + $0x428] sm:$0xff]
        %v4171 = vld [vmem:[%s4036 + $0x430] sm:$0xff]
        %v4172 = vld [vmem:[%s4036 + $0x438] sm:$0xff]
        %v4173 = vld [vmem:[%s4036 + $0x440] sm:$0xff]
        %v4174 = vld [vmem:[%s4036 + $0x448] sm:$0xff]
        %v4175 = vld [vmem:[%s4036 + $0x450] sm:$0xff]
        %v4176 = vld [vmem:[%s4036 + $0x458] sm:$0xff]
        %v4177 = vld [vmem:[%s4036 + $0x460] sm:$0xff]
        %v4178 = vld [vmem:[%s4036 + $0x468] sm:$0xff]
        %v4179 = vld [vmem:[%s4036 + $0x470] sm:$0xff]
        %v4180 = vld [vmem:[%s4036 + $0x478] sm:$0xff]
        %v4181 = vld [vmem:[%s4036 + $0x480] sm:$0xff]
        %v4182 = vld [vmem:[%s4036 + $0x488] sm:$0xff]
        %v4183 = vld [vmem:[%s4036 + $0x490] sm:$0xff]
        %v4184 = vld [vmem:[%s4036 + $0x498] sm:$0xff]
        %v4185 = vld [vmem:[%s4036 + $0x4a0] sm:$0xff]
        %v4186 = vld [vmem:[%s4036 + $0x4a8] sm:$0xff]
        %v4187 = vld [vmem:[%s4036 + $0x4b0] sm:$0xff]
        %v4188 = vld [vmem:[%s4036 + $0x4b8] sm:$0xff]
        %v4189 = vld [vmem:[%s4036 + $0x4c0] sm:$0xff]
        %v4190 = vld [vmem:[%s4036 + $0x4c8] sm:$0xff]
        %v4191 = vld [vmem:[%s4036 + $0x4d0] sm:$0xff]
        %v4192 = vld [vmem:[%s4036 + $0x4d8] sm:$0xff]
        %v4193 = vld [vmem:[%s4036 + $0x4e0] sm:$0xff]
        %v4194 = vld [vmem:[%s4036 + $0x4e8] sm:$0xff]
        %v4195 = vld [vmem:[%s4036 + $0x4f0] sm:$0xff]
        %v4196 = vld [vmem:[%s4036 + $0x4f8] sm:$0xff]
        %v4197 = vld [vmem:[%s4036 + $0x500] sm:$0xff]
        %v4198 = vld [vmem:[%s4036 + $0x508] sm:$0xff]
        %v4199 = vld [vmem:[%s4036 + $0x510] sm:$0xff]
        %v4200 = vld [vmem:[%s4036 + $0x518] sm:$0xff]
        %v4201 = vld [vmem:[%s4036 + $0x520] sm:$0xff]
        %v4202 = vld [vmem:[%s4036 + $0x528] sm:$0xff]
        %v4203 = vld [vmem:[%s4036 + $0x530] sm:$0xff]
        %v4204 = vld [vmem:[%s4036 + $0x538] sm:$0xff]
        %v4205 = vld [vmem:[%s4036 + $0x540] sm:$0xff]
        %v4206 = vld [vmem:[%s4036 + $0x548] sm:$0xff]
        %v4207 = vld [vmem:[%s4036 + $0x550] sm:$0xff]
        %v4208 = vld [vmem:[%s4036 + $0x558] sm:$0xff]
        %v4209 = vld [vmem:[%s4036 + $0x560] sm:$0xff]
        %v4210 = vld [vmem:[%s4036 + $0x568] sm:$0xff]
        %v4211 = vld [vmem:[%s4036 + $0x570] sm:$0xff]
        %v4212 = vld [vmem:[%s4036 + $0x578] sm:$0xff]
        %v4213 = vld [vmem:[%s4036 + $0x580] sm:$0xff]
        %v4214 = vld [vmem:[%s4036 + $0x588] sm:$0xff]
        %v4215 = vld [vmem:[%s4036 + $0x590] sm:$0xff]
        %v4216 = vld [vmem:[%s4036 + $0x598] sm:$0xff]
        %v4217 = vld [vmem:[%s4036 + $0x5a0] sm:$0xff]
        %v4218 = vld [vmem:[%s4036 + $0x5a8] sm:$0xff]
        %v4219 = vld [vmem:[%s4036 + $0x5b0] sm:$0xff]
        %v4220 = vld [vmem:[%s4036 + $0x5b8] sm:$0xff]
        %v4221 = vld [vmem:[%s4036 + $0x5c0] sm:$0xff]
        %v4222 = vld [vmem:[%s4036 + $0x5c8] sm:$0xff]
        %v4223 = vld [vmem:[%s4036 + $0x5d0] sm:$0xff]
        %v4224 = vld [vmem:[%s4036 + $0x5d8] sm:$0xff]
        %v4225 = vld [vmem:[%s4036 + $0x5e0] sm:$0xff]
        %v4226 = vld [vmem:[%s4036 + $0x5e8] sm:$0xff]
        %v4227 = vld [vmem:[%s4036 + $0x5f0] sm:$0xff]
        %v4228 = vld [vmem:[%s4036 + $0x5f8] sm:$0xff]
        %v4229 = vld [vmem:[%s4036 + $0x600] sm:$0xff]
        %v4230 = vld [vmem:[%s4036 + $0x608] sm:$0xff]
        %v4231 = vld [vmem:[%s4036 + $0x610] sm:$0xff]
        %v4232 = vld [vmem:[%s4036 + $0x618] sm:$0xff]
        %v4233 = vld [vmem:[%s4036 + $0x620] sm:$0xff]
        %v4234 = vld [vmem:[%s4036 + $0x628] sm:$0xff]
        %v4235 = vld [vmem:[%s4036 + $0x630] sm:$0xff]
        %v4236 = vld [vmem:[%s4036 + $0x638] sm:$0xff]
        %v4237 = vld [vmem:[%s4036 + $0x640] sm:$0xff]
        %v4238 = vld [vmem:[%s4036 + $0x648] sm:$0xff]
        %v4239 = vld [vmem:[%s4036 + $0x650] sm:$0xff]
        %v4240 = vld [vmem:[%s4036 + $0x658] sm:$0xff]
        %v4241 = vld [vmem:[%s4036 + $0x660] sm:$0xff]
        %v4242 = vld [vmem:[%s4036 + $0x668] sm:$0xff]
        %v4243 = vld [vmem:[%s4036 + $0x670] sm:$0xff]
        %v4244 = vld [vmem:[%s4036 + $0x678] sm:$0xff]
        %v4245 = vld [vmem:[%s4036 + $0x680] sm:$0xff]
        %v4246 = vld [vmem:[%s4036 + $0x688] sm:$0xff]
        %v4247 = vld [vmem:[%s4036 + $0x690] sm:$0xff]
        %v4248 = vld [vmem:[%s4036 + $0x698] sm:$0xff]
        %v4249 = vld [vmem:[%s4036 + $0x6a0] sm:$0xff]
        %v4250 = vld [vmem:[%s4036 + $0x6a8] sm:$0xff]
        %v4251 = vld [vmem:[%s4036 + $0x6b0] sm:$0xff]
        %v4252 = vld [vmem:[%s4036 + $0x6b8] sm:$0xff]
        %v4253 = vld [vmem:[%s4036 + $0x6c0] sm:$0xff]
        %v4254 = vld [vmem:[%s4036 + $0x6c8] sm:$0xff]
        %v4255 = vld [vmem:[%s4036 + $0x6d0] sm:$0xff]
        %v4256 = vld [vmem:[%s4036 + $0x6d8] sm:$0xff]
        %v4257 = vld [vmem:[%s4036 + $0x6e0] sm:$0xff]
        %v4258 = vld [vmem:[%s4036 + $0x6e8] sm:$0xff]
        %v4259 = vld [vmem:[%s4036 + $0x6f0] sm:$0xff]
        %v4260 = vld [vmem:[%s4036 + $0x6f8] sm:$0xff]
        %v4261 = vld [vmem:[%s4036 + $0x700] sm:$0xff]
        %v4262 = vld [vmem:[%s4036 + $0x708] sm:$0xff]
        %v4263 = vld [vmem:[%s4036 + $0x710] sm:$0xff]
        %v4264 = vld [vmem:[%s4036 + $0x718] sm:$0xff]
        %v4265 = vld [vmem:[%s4036 + $0x720] sm:$0xff]
        %v4266 = vld [vmem:[%s4036 + $0x728] sm:$0xff]
        %v4267 = vld [vmem:[%s4036 + $0x730] sm:$0xff]
        %v4268 = vld [vmem:[%s4036 + $0x738] sm:$0xff]
        %v4269 = vld [vmem:[%s4036 + $0x740] sm:$0xff]
        %v4270 = vld [vmem:[%s4036 + $0x748] sm:$0xff]
        %v4271 = vld [vmem:[%s4036 + $0x750] sm:$0xff]
        %v4272 = vld [vmem:[%s4036 + $0x758] sm:$0xff]
        %v4273 = vld [vmem:[%s4036 + $0x760] sm:$0xff]
        %v4274 = vld [vmem:[%s4036 + $0x768] sm:$0xff]
        %v4275 = vld [vmem:[%s4036 + $0x770] sm:$0xff]
        %v4276 = vld [vmem:[%s4036 + $0x778] sm:$0xff]
        %v4277 = vld [vmem:[%s4036 + $0x780] sm:$0xff]
        %v4278 = vld [vmem:[%s4036 + $0x788] sm:$0xff]
        %v4279 = vld [vmem:[%s4036 + $0x790] sm:$0xff]
        %v4280 = vld [vmem:[%s4036 + $0x798] sm:$0xff]
        %v4281 = vld [vmem:[%s4036 + $0x7a0] sm:$0xff]
        %v4282 = vld [vmem:[%s4036 + $0x7a8] sm:$0xff]
        %v4283 = vld [vmem:[%s4036 + $0x7b0] sm:$0xff]
        %v4284 = vld [vmem:[%s4036 + $0x7b8] sm:$0xff]
        %v4285 = vld [vmem:[%s4036 + $0x7c0] sm:$0xff]
        %v4286 = vld [vmem:[%s4036 + $0x7c8] sm:$0xff]
        %v4287 = vld [vmem:[%s4036 + $0x7d0] sm:$0xff]
        %v4288 = vld [vmem:[%s4036 + $0x7d8] sm:$0xff]
        %v4289 = vld [vmem:[%s4036 + $0x7e0] sm:$0xff]
        %v4290 = vld [vmem:[%s4036 + $0x7e8] sm:$0xff]
        %v4291 = vld [vmem:[%s4036 + $0x7f0] sm:$0xff]
        %v4292 = vld [vmem:[%s4036 + $0x7f8] sm:$0xff]
        %4293 = vmatprep.subr.mxu0 %v4038
        %4294 = vmatpush1.msra.mxu0 %v4037
        %4295 = vmatprep.subr.mxu0 %v4042
        %4296 = vmatpush1.msra.mxu0 %v4041
        %4297 = vmatprep.subr.mxu0 %v4046
        %4298 = vmatpush1.msra.mxu0 %v4045
        %4299 = vmatprep.subr.mxu0 %v4050
        %4300 = vmatpush1.msra.mxu0 %v4049
        %4301 = vmatprep.subr.mxu0 %v4054
        %4302 = vmatpush1.msra.mxu0 %v4053
        %4303 = vmatprep.subr.mxu0 %v4058
        %4304 = vmatpush1.msra.mxu0 %v4057
        %4305 = vmatprep.subr.mxu0 %v4062
        %4306 = vmatpush1.msra.mxu0 %v4061
        %4307 = vmatprep.subr.mxu0 %v4066
        %4308 = vmatpush1.msra.mxu0 %v4065
        %4309 = vmatprep.subr.mxu0 %v4070
        %4310 = vmatpush1.msra.mxu0 %v4069
        %4311 = vmatprep.subr.mxu0 %v4074
        %4312 = vmatpush1.msra.mxu0 %v4073
        %4313 = vmatprep.subr.mxu0 %v4078
        %4314 = vmatpush1.msra.mxu0 %v4077
        %4315 = vmatprep.subr.mxu0 %v4082
        %4316 = vmatpush1.msra.mxu0 %v4081
        %4317 = vmatprep.subr.mxu0 %v4086
        %4318 = vmatpush1.msra.mxu0 %v4085
        %4319 = vmatprep.subr.mxu0 %v4090
        %4320 = vmatpush1.msra.mxu0 %v4089
        %4321 = vmatprep.subr.mxu0 %v4094
        %4322 = vmatpush1.msra.mxu0 %v4093
        %4323 = vmatprep.subr.mxu0 %v4098
        %4324 = vmatpush1.msra.mxu0 %v4097
        %4325 = vmatprep.subr.mxu0 %v4102
        %4326 = vmatpush1.msra.mxu0 %v4101
        %4327 = vmatprep.subr.mxu0 %v4106
        %4328 = vmatpush1.msra.mxu0 %v4105
        %4329 = vmatprep.subr.mxu0 %v4110
        %4330 = vmatpush1.msra.mxu0 %v4109
        %4331 = vmatprep.subr.mxu0 %v4114
        %4332 = vmatpush1.msra.mxu0 %v4113
        %4333 = vmatprep.subr.mxu0 %v4118
        %4334 = vmatpush1.msra.mxu0 %v4117
        %4335 = vmatprep.subr.mxu0 %v4122
        %4336 = vmatpush1.msra.mxu0 %v4121
        %4337 = vmatprep.subr.mxu0 %v4126
        %4338 = vmatpush1.msra.mxu0 %v4125
        %4339 = vmatprep.subr.mxu0 %v4130
        %4340 = vmatpush1.msra.mxu0 %v4129
        %4341 = vmatprep.subr.mxu0 %v4134
        %4342 = vmatpush1.msra.mxu0 %v4133
        %4343 = vmatprep.subr.mxu0 %v4138
        %4344 = vmatpush1.msra.mxu0 %v4137
        %4345 = vmatprep.subr.mxu0 %v4142
        %4346 = vmatpush1.msra.mxu0 %v4141
        %4347 = vmatprep.subr.mxu0 %v4146
        %4348 = vmatpush1.msra.mxu0 %v4145
        %4349 = vmatprep.subr.mxu0 %v4150
        %4350 = vmatpush1.msra.mxu0 %v4149
        %4351 = vmatprep.subr.mxu0 %v4154
        %4352 = vmatpush1.msra.mxu0 %v4153
        %4353 = vmatprep.subr.mxu0 %v4158
        %4354 = vmatpush1.msra.mxu0 %v4157
        %4355 = vmatprep.subr.mxu0 %v4162
        %4356 = vmatpush1.msra.mxu0 %v4161
        %4357 = vmatprep.mubr.f32.mxu0 %v3951
        %4358 = vmatmul.mubr.f32.gmra.mrb[0].mxu0 %v3949
        %v4359 = vpop.f32.mrb[0].mxu0
        %v4360 = vadd.f32 0.0, %v4359
        %v4361 = vpop.f32.mrb[0].mxu0
        %v4362 = vadd.f32 0.0, %v4361
        %4363 = vmatprep.mubr.f32.mxu0 %v3957
        %4364 = vmatmul.mubr.f32.gmra.mrb[0].mxu0 %v3955
        %v4365 = vpop.f32.mrb[0].mxu0
        %v4366 = vadd.f32 0.0, %v4365
        %v4367 = vpop.f32.mrb[0].mxu0
        %v4368 = vadd.f32 0.0, %v4367
        %4369 = vdwg.mxu0
        %4370 = vmatprep.subr.mxu0 %v4166
        %4371 = vmatpush1.msra.mxu0 %v4165
        %4372 = vmatprep.subr.mxu0 %v4170
        %4373 = vmatpush1.msra.mxu0 %v4169
        %4374 = vmatprep.subr.mxu0 %v4174
        %4375 = vmatpush1.msra.mxu0 %v4173
        %4376 = vmatprep.subr.mxu0 %v4178
        %4377 = vmatpush1.msra.mxu0 %v4177
        %4378 = vmatprep.subr.mxu0 %v4182
        %4379 = vmatpush1.msra.mxu0 %v4181
        %4380 = vmatprep.subr.mxu0 %v4186
        %4381 = vmatpush1.msra.mxu0 %v4185
        %4382 = vmatprep.subr.mxu0 %v4190
        %4383 = vmatpush1.msra.mxu0 %v4189
        %4384 = vmatprep.subr.mxu0 %v4194
        %4385 = vmatpush1.msra.mxu0 %v4193
        %4386 = vmatprep.subr.mxu0 %v4198
        %4387 = vmatpush1.msra.mxu0 %v4197
        %4388 = vmatprep.subr.mxu0 %v4202
        %4389 = vmatpush1.msra.mxu0 %v4201
        %4390 = vmatprep.subr.mxu0 %v4206
        %4391 = vmatpush1.msra.mxu0 %v4205
        %4392 = vmatprep.subr.mxu0 %v4210
        %4393 = vmatpush1.msra.mxu0 %v4209
        %4394 = vmatprep.subr.mxu0 %v4214
        %4395 = vmatpush1.msra.mxu0 %v4213
        %4396 = vmatprep.subr.mxu0 %v4218
        %4397 = vmatpush1.msra.mxu0 %v4217
        %4398 = vmatprep.subr.mxu0 %v4222
        %4399 = vmatpush1.msra.mxu0 %v4221
        %4400 = vmatprep.subr.mxu0 %v4226
        %4401 = vmatpush1.msra.mxu0 %v4225
        %4402 = vmatprep.subr.mxu0 %v4230
        %4403 = vmatpush1.msra.mxu0 %v4229
        %4404 = vmatprep.subr.mxu0 %v4234
        %4405 = vmatpush1.msra.mxu0 %v4233
        %4406 = vmatprep.subr.mxu0 %v4238
        %4407 = vmatpush1.msra.mxu0 %v4237
        %4408 = vmatprep.subr.mxu0 %v4242
        %4409 = vmatpush1.msra.mxu0 %v4241
        %4410 = vmatprep.subr.mxu0 %v4246
        %4411 = vmatpush1.msra.mxu0 %v4245
        %4412 = vmatprep.subr.mxu0 %v4250
        %4413 = vmatpush1.msra.mxu0 %v4249
        %4414 = vmatprep.subr.mxu0 %v4254
        %4415 = vmatpush1.msra.mxu0 %v4253
        %4416 = vmatprep.subr.mxu0 %v4258
        %4417 = vmatpush1.msra.mxu0 %v4257
        %4418 = vmatprep.subr.mxu0 %v4262
        %4419 = vmatpush1.msra.mxu0 %v4261
        %4420 = vmatprep.subr.mxu0 %v4266
        %4421 = vmatpush1.msra.mxu0 %v4265
        %4422 = vmatprep.subr.mxu0 %v4270
        %4423 = vmatpush1.msra.mxu0 %v4269
        %4424 = vmatprep.subr.mxu0 %v4274
        %4425 = vmatpush1.msra.mxu0 %v4273
        %4426 = vmatprep.subr.mxu0 %v4278
        %4427 = vmatpush1.msra.mxu0 %v4277
        %4428 = vmatprep.subr.mxu0 %v4282
        %4429 = vmatpush1.msra.mxu0 %v4281
        %4430 = vmatprep.subr.mxu0 %v4286
        %4431 = vmatpush1.msra.mxu0 %v4285
        %4432 = vmatprep.subr.mxu0 %v4290
        %4433 = vmatpush1.msra.mxu0 %v4289
        %4434 = vmatprep.mubr.f32.mxu0 %v4028
        %4435 = vmatmul.mubr.f32.gmra.mrb[0].mxu0 %v4026
        %v4436 = vpop.f32.mrb[0].mxu0
        %v4437 = vadd.f32 %v4360, %v4436
        %v4438 = vpop.f32.mrb[0].mxu0
        %v4439 = vadd.f32 %v4362, %v4438
        %4440 = vmatprep.mubr.f32.mxu0 %v4034
        %4441 = vmatmul.mubr.f32.gmra.mrb[0].mxu0 %v4032
        %v4442 = vpop.f32.mrb[0].mxu0
        %v4443 = vadd.f32 %v4366, %v4442
        %v4444 = vpop.f32.mrb[0].mxu0
        %v4445 = vadd.f32 %v4368, %v4444
        %4446 = vdwg.mxu0
        %4447 = vmatprep.subr.mxu0 %v4040
        %4448 = vmatpush1.msra.mxu0 %v4039
        %4449 = vmatprep.subr.mxu0 %v4044
        %4450 = vmatpush1.msra.mxu0 %v4043
        %4451 = vmatprep.subr.mxu0 %v4048
        %4452 = vmatpush1.msra.mxu0 %v4047
        %4453 = vmatprep.subr.mxu0 %v4052
        %4454 = vmatpush1.msra.mxu0 %v4051
        %4455 = vmatprep.subr.mxu0 %v4056
        %4456 = vmatpush1.msra.mxu0 %v4055
        %4457 = vmatprep.subr.mxu0 %v4060
        %4458 = vmatpush1.msra.mxu0 %v4059
        %4459 = vmatprep.subr.mxu0 %v4064
        %4460 = vmatpush1.msra.mxu0 %v4063
        %4461 = vmatprep.subr.mxu0 %v4068
        %4462 = vmatpush1.msra.mxu0 %v4067
        %4463 = vmatprep.subr.mxu0 %v4072
        %4464 = vmatpush1.msra.mxu0 %v4071
        %4465 = vmatprep.subr.mxu0 %v4076
        %4466 = vmatpush1.msra.mxu0 %v4075
        %4467 = vmatprep.subr.mxu0 %v4080
        %4468 = vmatpush1.msra.mxu0 %v4079
        %4469 = vmatprep.subr.mxu0 %v4084
        %4470 = vmatpush1.msra.mxu0 %v4083
        %4471 = vmatprep.subr.mxu0 %v4088
        %4472 = vmatpush1.msra.mxu0 %v4087
        %4473 = vmatprep.subr.mxu0 %v4092
        %4474 = vmatpush1.msra.mxu0 %v4091
        %4475 = vmatprep.subr.mxu0 %v4096
        %4476 = vmatpush1.msra.mxu0 %v4095
        %4477 = vmatprep.subr.mxu0 %v4100
        %4478 = vmatpush1.msra.mxu0 %v4099
        %4479 = vmatprep.subr.mxu0 %v4104
        %4480 = vmatpush1.msra.mxu0 %v4103
        %4481 = vmatprep.subr.mxu0 %v4108
        %4482 = vmatpush1.msra.mxu0 %v4107
        %4483 = vmatprep.subr.mxu0 %v4112
        %4484 = vmatpush1.msra.mxu0 %v4111
        %4485 = vmatprep.subr.mxu0 %v4116
        %4486 = vmatpush1.msra.mxu0 %v4115
        %4487 = vmatprep.subr.mxu0 %v4120
        %4488 = vmatpush1.msra.mxu0 %v4119
        %4489 = vmatprep.subr.mxu0 %v4124
        %4490 = vmatpush1.msra.mxu0 %v4123
        %4491 = vmatprep.subr.mxu0 %v4128
        %4492 = vmatpush1.msra.mxu0 %v4127
        %4493 = vmatprep.subr.mxu0 %v4132
        %4494 = vmatpush1.msra.mxu0 %v4131
        %4495 = vmatprep.subr.mxu0 %v4136
        %4496 = vmatpush1.msra.mxu0 %v4135
        %4497 = vmatprep.subr.mxu0 %v4140
        %4498 = vmatpush1.msra.mxu0 %v4139
        %4499 = vmatprep.subr.mxu0 %v4144
        %4500 = vmatpush1.msra.mxu0 %v4143
        %4501 = vmatprep.subr.mxu0 %v4148
        %4502 = vmatpush1.msra.mxu0 %v4147
        %4503 = vmatprep.subr.mxu0 %v4152
        %4504 = vmatpush1.msra.mxu0 %v4151
        %4505 = vmatprep.subr.mxu0 %v4156
        %4506 = vmatpush1.msra.mxu0 %v4155
        %4507 = vmatprep.subr.mxu0 %v4160
        %4508 = vmatpush1.msra.mxu0 %v4159
        %4509 = vmatprep.subr.mxu0 %v4164
        %4510 = vmatpush1.msra.mxu0 %v4163
        %4511 = vmatprep.mubr.f32.mxu0 %v3951
        %4512 = vmatmul.mubr.f32.gmra.mrb[0].mxu0 %v3949
        %v4513 = vpop.f32.mrb[0].mxu0
        %v4514 = vadd.f32 0.0, %v4513
        %v4515 = vpop.f32.mrb[0].mxu0
        %v4516 = vadd.f32 0.0, %v4515
        %4517 = vmatprep.mubr.f32.mxu0 %v3957
        %4518 = vmatmul.mubr.f32.gmra.mrb[0].mxu0 %v3955
        %v4519 = vpop.f32.mrb[0].mxu0
        %v4520 = vadd.f32 0.0, %v4519
        %v4521 = vpop.f32.mrb[0].mxu0
        %v4522 = vadd.f32 0.0, %v4521
        %4523 = vdwg.mxu0
        %4524 = vmatprep.subr.mxu0 %v4168
        %4525 = vmatpush1.msra.mxu0 %v4167
        %4526 = vmatprep.subr.mxu0 %v4172
        %4527 = vmatpush1.msra.mxu0 %v4171
        %4528 = vmatprep.subr.mxu0 %v4176
        %4529 = vmatpush1.msra.mxu0 %v4175
        %4530 = vmatprep.subr.mxu0 %v4180
        %4531 = vmatpush1.msra.mxu0 %v4179
        %4532 = vmatprep.subr.mxu0 %v4184
        %4533 = vmatpush1.msra.mxu0 %v4183
        %4534 = vmatprep.subr.mxu0 %v4188
        %4535 = vmatpush1.msra.mxu0 %v4187
        %4536 = vmatprep.subr.mxu0 %v4192
        %4537 = vmatpush1.msra.mxu0 %v4191
        %4538 = vmatprep.subr.mxu0 %v4196
        %4539 = vmatpush1.msra.mxu0 %v4195
        %4540 = vmatprep.subr.mxu0 %v4200
        %4541 = vmatpush1.msra.mxu0 %v4199
        %4542 = vmatprep.subr.mxu0 %v4204
        %4543 = vmatpush1.msra.mxu0 %v4203
        %4544 = vmatprep.subr.mxu0 %v4208
        %4545 = vmatpush1.msra.mxu0 %v4207
        %4546 = vmatprep.subr.mxu0 %v4212
        %4547 = vmatpush1.msra.mxu0 %v4211
        %4548 = vmatprep.subr.mxu0 %v4216
        %4549 = vmatpush1.msra.mxu0 %v4215
        %4550 = vmatprep.subr.mxu0 %v4220
        %4551 = vmatpush1.msra.mxu0 %v4219
        %4552 = vmatprep.subr.mxu0 %v4224
        %4553 = vmatpush1.msra.mxu0 %v4223
        %4554 = vmatprep.subr.mxu0 %v4228
        %4555 = vmatpush1.msra.mxu0 %v4227
        %4556 = vmatprep.subr.mxu0 %v4232
        %4557 = vmatpush1.msra.mxu0 %v4231
        %4558 = vmatprep.subr.mxu0 %v4236
        %4559 = vmatpush1.msra.mxu0 %v4235
        %4560 = vmatprep.subr.mxu0 %v4240
        %4561 = vmatpush1.msra.mxu0 %v4239
        %4562 = vmatprep.subr.mxu0 %v4244
        %4563 = vmatpush1.msra.mxu0 %v4243
        %4564 = vmatprep.subr.mxu0 %v4248
        %4565 = vmatpush1.msra.mxu0 %v4247
        %4566 = vmatprep.subr.mxu0 %v4252
        %4567 = vmatpush1.msra.mxu0 %v4251
        %4568 = vmatprep.subr.mxu0 %v4256
        %4569 = vmatpush1.msra.mxu0 %v4255
        %4570 = vmatprep.subr.mxu0 %v4260
        %4571 = vmatpush1.msra.mxu0 %v4259
        %4572 = vmatprep.subr.mxu0 %v4264
        %4573 = vmatpush1.msra.mxu0 %v4263
        %4574 = vmatprep.subr.mxu0 %v4268
        %4575 = vmatpush1.msra.mxu0 %v4267
        %4576 = vmatprep.subr.mxu0 %v4272
        %4577 = vmatpush1.msra.mxu0 %v4271
        %4578 = vmatprep.subr.mxu0 %v4276
        %4579 = vmatpush1.msra.mxu0 %v4275
        %4580 = vmatprep.subr.mxu0 %v4280
        %4581 = vmatpush1.msra.mxu0 %v4279
        %4582 = vmatprep.subr.mxu0 %v4284
        %4583 = vmatpush1.msra.mxu0 %v4283
        %4584 = vmatprep.subr.mxu0 %v4288
        %4585 = vmatpush1.msra.mxu0 %v4287
        %4586 = vmatprep.subr.mxu0 %v4292
        %4587 = vmatpush1.msra.mxu0 %v4291
        %4588 = vmatprep.mubr.f32.mxu0 %v4028
        %4589 = vmatmul.mubr.f32.gmra.mrb[0].mxu0 %v4026
        %v4590 = vpop.f32.mrb[0].mxu0
        %v4591 = vadd.f32 %v4514, %v4590
        %v4592 = vpop.f32.mrb[0].mxu0
        %v4593 = vadd.f32 %v4516, %v4592
        %4594 = vmatprep.mubr.f32.mxu0 %v4034
        %4595 = vmatmul.mubr.f32.gmra.mrb[0].mxu0 %v4032
        %v4596 = vpop.f32.mrb[0].mxu0
        %v4597 = vadd.f32 %v4520, %v4596
        %v4598 = vpop.f32.mrb[0].mxu0
        %v4599 = vadd.f32 %v4522, %v4598
        %4600 = vdwg.mxu0
        %v4601 = vadd.f32 %v3718, %v4437
        %v4602 = vadd.f32 %v3720, %v4439
        %v4603 = vadd.f32 %v3872, %v4591
        %v4604 = vadd.f32 %v3874, %v4593
        %v4605 = vadd.f32 %v3724, %v4443
        %v4606 = vadd.f32 %v3726, %v4445
        %v4607 = vadd.f32 %v3878, %v4597
        %v4608 = vadd.f32 %v3880, %v4599
        %v4609 = vld [vmem:[#allocation10] sm:$0xf]
        %v4611 = vlaneseq
        %v4612 = vshrl.u32 %v4611, 7
        %v4613 = vsub.s32 0, %v4612
        %v4614 = vrot.slane %v4609, %v4613
        %v4615 = vlaneseq
        %v4616 = vshrl.u32 %v4615, 7
        %v4617 = vsub.s32 1, %v4616
        %v4618 = vrot.slane %v4609, %v4617
        %v4619 = vlaneseq
        %v4620 = vshrl.u32 %v4619, 7
        %v4621 = vsub.s32 2, %v4620
        %v4622 = vrot.slane %v4609, %v4621
        %v4623 = vlaneseq
        %v4624 = vshrl.u32 %v4623, 7
        %v4625 = vsub.s32 3, %v4624
        %v4626 = vrot.slane %v4609, %v4625
        %v4631 = vadd.f32 %v4601, %v4614
        %v4632 = vadd.f32 %v4602, %v4618
        %v4633 = vadd.f32 %v4603, %v4622
        %v4634 = vadd.f32 %v4604, %v4626
        %v4635 = vadd.f32 %v4605, %v4614
        %v4636 = vadd.f32 %v4606, %v4618
        %v4637 = vadd.f32 %v4607, %v4622
        %v4638 = vadd.f32 %v4608, %v4626
        %v4639 = vadd.f32 %v4631, %v4635
        %v4640 = vrot.slane %v4639, 4
        %v4641 = vadd.f32 %v4639, %v4640
        %v4642 = vrot.slane %v4641, 2
        %v4643 = vadd.f32 %v4641, %v4642
        %v4644 = vrot.slane %v4643, 1
        %v4645 = vadd.f32 %v4643, %v4644
        %v4646 = vadd.f32 %v4632, %v4636
        %v4647 = vrot.slane %v4646, 4
        %v4648 = vadd.f32 %v4646, %v4647
        %v4649 = vrot.slane %v4648, 2
        %v4650 = vadd.f32 %v4648, %v4649
        %v4651 = vrot.slane %v4650, 1
        %v4652 = vadd.f32 %v4650, %v4651
        %v4653 = vadd.f32 %v4633, %v4637
        %v4654 = vrot.slane %v4653, 4
        %v4655 = vadd.f32 %v4653, %v4654
        %v4656 = vrot.slane %v4655, 2
        %v4657 = vadd.f32 %v4655, %v4656
        %v4658 = vrot.slane %v4657, 1
        %v4659 = vadd.f32 %v4657, %v4658
        %v4660 = vadd.f32 %v4634, %v4638
        %v4661 = vrot.slane %v4660, 4
        %v4662 = vadd.f32 %v4660, %v4661
        %v4663 = vrot.slane %v4662, 2
        %v4664 = vadd.f32 %v4662, %v4663
        %v4665 = vrot.slane %v4664, 1
        %v4666 = vadd.f32 %v4664, %v4665
        %v4667 = vld [vmem:[%s7] sm:$0xff]
        %v4668 = vld [vmem:[%s7 + $0x8] sm:$0xff]
        %v4669 = vld [vmem:[%s7 + $0x10] sm:$0xff]
        %v4670 = vld [vmem:[%s7 + $0x18] sm:$0xff]
        %v4671 = vld [vmem:[%s7 + $0x20] sm:$0xff]
        %v4672 = vld [vmem:[%s7 + $0x28] sm:$0xff]
        %v4673 = vld [vmem:[%s7 + $0x30] sm:$0xff]
        %v4674 = vld [vmem:[%s7 + $0x38] sm:$0xff]
        %v4675 = vld [vmem:[%s7 + $0x40] sm:$0xff]
        %v4676 = vld [vmem:[%s7 + $0x48] sm:$0xff]
        %v4677 = vld [vmem:[%s7 + $0x50] sm:$0xff]
        %v4678 = vld [vmem:[%s7 + $0x58] sm:$0xff]
        %v4679 = vld [vmem:[%s7 + $0x60] sm:$0xff]
        %v4680 = vld [vmem:[%s7 + $0x68] sm:$0xff]
        %v4681 = vld [vmem:[%s7 + $0x70] sm:$0xff]
        %v4682 = vld [vmem:[%s7 + $0x78] sm:$0xff]
        %v4683 = vld [vmem:[%s7 + $0x80] sm:$0xff]
        %v4684 = vld [vmem:[%s7 + $0x88] sm:$0xff]
        %v4685 = vld [vmem:[%s7 + $0x90] sm:$0xff]
        %v4686 = vld [vmem:[%s7 + $0x98] sm:$0xff]
        %v4687 = vld [vmem:[%s7 + $0xa0] sm:$0xff]
        %v4688 = vld [vmem:[%s7 + $0xa8] sm:$0xff]
        %v4689 = vld [vmem:[%s7 + $0xb0] sm:$0xff]
        %v4690 = vld [vmem:[%s7 + $0xb8] sm:$0xff]
        %v4691 = vld [vmem:[%s7 + $0xc0] sm:$0xff]
        %v4692 = vld [vmem:[%s7 + $0xc8] sm:$0xff]
        %v4693 = vld [vmem:[%s7 + $0xd0] sm:$0xff]
        %v4694 = vld [vmem:[%s7 + $0xd8] sm:$0xff]
        %v4695 = vld [vmem:[%s7 + $0xe0] sm:$0xff]
        %v4696 = vld [vmem:[%s7 + $0xe8] sm:$0xff]
        %v4697 = vld [vmem:[%s7 + $0xf0] sm:$0xff]
        %v4698 = vld [vmem:[%s7 + $0xf8] sm:$0xff]
        %v4699 = vld [vmem:[%s7 + $0x100] sm:$0xff]
        %v4700 = vld [vmem:[%s7 + $0x108] sm:$0xff]
        %v4701 = vld [vmem:[%s7 + $0x110] sm:$0xff]
        %v4702 = vld [vmem:[%s7 + $0x118] sm:$0xff]
        %v4703 = vld [vmem:[%s7 + $0x120] sm:$0xff]
        %v4704 = vld [vmem:[%s7 + $0x128] sm:$0xff]
        %v4705 = vld [vmem:[%s7 + $0x130] sm:$0xff]
        %v4706 = vld [vmem:[%s7 + $0x138] sm:$0xff]
        %v4707 = vld [vmem:[%s7 + $0x140] sm:$0xff]
        %v4708 = vld [vmem:[%s7 + $0x148] sm:$0xff]
        %v4709 = vld [vmem:[%s7 + $0x150] sm:$0xff]
        %v4710 = vld [vmem:[%s7 + $0x158] sm:$0xff]
        %v4711 = vld [vmem:[%s7 + $0x160] sm:$0xff]
        %v4712 = vld [vmem:[%s7 + $0x168] sm:$0xff]
        %v4713 = vld [vmem:[%s7 + $0x170] sm:$0xff]
        %v4714 = vld [vmem:[%s7 + $0x178] sm:$0xff]
        %v4715 = vld [vmem:[%s7 + $0x180] sm:$0xff]
        %v4716 = vld [vmem:[%s7 + $0x188] sm:$0xff]
        %v4717 = vld [vmem:[%s7 + $0x190] sm:$0xff]
        %v4718 = vld [vmem:[%s7 + $0x198] sm:$0xff]
        %v4719 = vld [vmem:[%s7 + $0x1a0] sm:$0xff]
        %v4720 = vld [vmem:[%s7 + $0x1a8] sm:$0xff]
        %v4721 = vld [vmem:[%s7 + $0x1b0] sm:$0xff]
        %v4722 = vld [vmem:[%s7 + $0x1b8] sm:$0xff]
        %v4723 = vld [vmem:[%s7 + $0x1c0] sm:$0xff]
        %v4724 = vld [vmem:[%s7 + $0x1c8] sm:$0xff]
        %v4725 = vld [vmem:[%s7 + $0x1d0] sm:$0xff]
        %v4726 = vld [vmem:[%s7 + $0x1d8] sm:$0xff]
        %v4727 = vld [vmem:[%s7 + $0x1e0] sm:$0xff]
        %v4728 = vld [vmem:[%s7 + $0x1e8] sm:$0xff]
        %v4729 = vld [vmem:[%s7 + $0x1f0] sm:$0xff]
        %v4730 = vld [vmem:[%s7 + $0x1f8] sm:$0xff]
        %v4731 = vld [vmem:[#allocation14] sm:$0x1]
        %4732 = vmatprep.subr.mxu0 0.0
        %4733 = vmatpush1.msra.mxu0 %v4667
        %4734 = vmatprep.subr.mxu0 0.0
        %4735 = vmatpush1.msra.mxu0 %v4668
        %4736 = vmatprep.subr.mxu0 0.0
        %4737 = vmatpush1.msra.mxu0 %v4669
        %4738 = vmatprep.subr.mxu0 0.0
        %4739 = vmatpush1.msra.mxu0 %v4670
        %4740 = vmatprep.subr.mxu0 0.0
        %4741 = vmatpush1.msra.mxu0 %v4671
        %4742 = vmatprep.subr.mxu0 0.0
        %4743 = vmatpush1.msra.mxu0 %v4672
        %4744 = vmatprep.subr.mxu0 0.0
        %4745 = vmatpush1.msra.mxu0 %v4673
        %4746 = vmatprep.subr.mxu0 0.0
        %4747 = vmatpush1.msra.mxu0 %v4674
        %4748 = vmatprep.subr.mxu0 0.0
        %4749 = vmatpush1.msra.mxu0 %v4675
        %4750 = vmatprep.subr.mxu0 0.0
        %4751 = vmatpush1.msra.mxu0 %v4676
        %4752 = vmatprep.subr.mxu0 0.0
        %4753 = vmatpush1.msra.mxu0 %v4677
        %4754 = vmatprep.subr.mxu0 0.0
        %4755 = vmatpush1.msra.mxu0 %v4678
        %4756 = vmatprep.subr.mxu0 0.0
        %4757 = vmatpush1.msra.mxu0 %v4679
        %4758 = vmatprep.subr.mxu0 0.0
        %4759 = vmatpush1.msra.mxu0 %v4680
        %4760 = vmatprep.subr.mxu0 0.0
        %4761 = vmatpush1.msra.mxu0 %v4681
        %4762 = vmatprep.subr.mxu0 0.0
        %4763 = vmatpush1.msra.mxu0 %v4682
        %4764 = vmatprep.subr.mxu0 0.0
        %4765 = vmatpush1.msra.mxu0 %v4683
        %4766 = vmatprep.subr.mxu0 0.0
        %4767 = vmatpush1.msra.mxu0 %v4684
        %4768 = vmatprep.subr.mxu0 0.0
        %4769 = vmatpush1.msra.mxu0 %v4685
        %4770 = vmatprep.subr.mxu0 0.0
        %4771 = vmatpush1.msra.mxu0 %v4686
        %4772 = vmatprep.subr.mxu0 0.0
        %4773 = vmatpush1.msra.mxu0 %v4687
        %4774 = vmatprep.subr.mxu0 0.0
        %4775 = vmatpush1.msra.mxu0 %v4688
        %4776 = vmatprep.subr.mxu0 0.0
        %4777 = vmatpush1.msra.mxu0 %v4689
        %4778 = vmatprep.subr.mxu0 0.0
        %4779 = vmatpush1.msra.mxu0 %v4690
        %4780 = vmatprep.subr.mxu0 0.0
        %4781 = vmatpush1.msra.mxu0 %v4691
        %4782 = vmatprep.subr.mxu0 0.0
        %4783 = vmatpush1.msra.mxu0 %v4692
        %4784 = vmatprep.subr.mxu0 0.0
        %4785 = vmatpush1.msra.mxu0 %v4693
        %4786 = vmatprep.subr.mxu0 0.0
        %4787 = vmatpush1.msra.mxu0 %v4694
        %4788 = vmatprep.subr.mxu0 0.0
        %4789 = vmatpush1.msra.mxu0 %v4695
        %4790 = vmatprep.subr.mxu0 0.0
        %4791 = vmatpush1.msra.mxu0 %v4696
        %4792 = vmatprep.subr.mxu0 0.0
        %4793 = vmatpush1.msra.mxu0 %v4697
        %4794 = vmatprep.subr.mxu0 0.0
        %4795 = vmatpush1.msra.mxu0 %v4698
        %4796 = vmatprep.mubr.f32.mxu0 %v4652
        %4797 = vmatmul.mubr.f32.gmra.mrb[0].mxu0 %v4645
        %v4798 = vpop.f32.mrb[0].mxu0
        %v4799 = vadd.f32 %v4731, %v4798
        %v4800 = vpop.f32.mrb[0].mxu0
        %4801 = vdwg.mxu0
        %4802 = vmatprep.subr.mxu0 0.0
        %4803 = vmatpush1.msra.mxu0 %v4699
        %4804 = vmatprep.subr.mxu0 0.0
        %4805 = vmatpush1.msra.mxu0 %v4700
        %4806 = vmatprep.subr.mxu0 0.0
        %4807 = vmatpush1.msra.mxu0 %v4701
        %4808 = vmatprep.subr.mxu0 0.0
        %4809 = vmatpush1.msra.mxu0 %v4702
        %4810 = vmatprep.subr.mxu0 0.0
        %4811 = vmatpush1.msra.mxu0 %v4703
        %4812 = vmatprep.subr.mxu0 0.0
        %4813 = vmatpush1.msra.mxu0 %v4704
        %4814 = vmatprep.subr.mxu0 0.0
        %4815 = vmatpush1.msra.mxu0 %v4705
        %4816 = vmatprep.subr.mxu0 0.0
        %4817 = vmatpush1.msra.mxu0 %v4706
        %4818 = vmatprep.subr.mxu0 0.0
        %4819 = vmatpush1.msra.mxu0 %v4707
        %4820 = vmatprep.subr.mxu0 0.0
        %4821 = vmatpush1.msra.mxu0 %v4708
        %4822 = vmatprep.subr.mxu0 0.0
        %4823 = vmatpush1.msra.mxu0 %v4709
        %4824 = vmatprep.subr.mxu0 0.0
        %4825 = vmatpush1.msra.mxu0 %v4710
        %4826 = vmatprep.subr.mxu0 0.0
        %4827 = vmatpush1.msra.mxu0 %v4711
        %4828 = vmatprep.subr.mxu0 0.0
        %4829 = vmatpush1.msra.mxu0 %v4712
        %4830 = vmatprep.subr.mxu0 0.0
        %4831 = vmatpush1.msra.mxu0 %v4713
        %4832 = vmatprep.subr.mxu0 0.0
        %4833 = vmatpush1.msra.mxu0 %v4714
        %4834 = vmatprep.subr.mxu0 0.0
        %4835 = vmatpush1.msra.mxu0 %v4715
        %4836 = vmatprep.subr.mxu0 0.0
        %4837 = vmatpush1.msra.mxu0 %v4716
        %4838 = vmatprep.subr.mxu0 0.0
        %4839 = vmatpush1.msra.mxu0 %v4717
        %4840 = vmatprep.subr.mxu0 0.0
        %4841 = vmatpush1.msra.mxu0 %v4718
        %4842 = vmatprep.subr.mxu0 0.0
        %4843 = vmatpush1.msra.mxu0 %v4719
        %4844 = vmatprep.subr.mxu0 0.0
        %4845 = vmatpush1.msra.mxu0 %v4720
        %4846 = vmatprep.subr.mxu0 0.0
        %4847 = vmatpush1.msra.mxu0 %v4721
        %4848 = vmatprep.subr.mxu0 0.0
        %4849 = vmatpush1.msra.mxu0 %v4722
        %4850 = vmatprep.subr.mxu0 0.0
        %4851 = vmatpush1.msra.mxu0 %v4723
        %4852 = vmatprep.subr.mxu0 0.0
        %4853 = vmatpush1.msra.mxu0 %v4724
        %4854 = vmatprep.subr.mxu0 0.0
        %4855 = vmatpush1.msra.mxu0 %v4725
        %4856 = vmatprep.subr.mxu0 0.0
        %4857 = vmatpush1.msra.mxu0 %v4726
        %4858 = vmatprep.subr.mxu0 0.0
        %4859 = vmatpush1.msra.mxu0 %v4727
        %4860 = vmatprep.subr.mxu0 0.0
        %4861 = vmatpush1.msra.mxu0 %v4728
        %4862 = vmatprep.subr.mxu0 0.0
        %4863 = vmatpush1.msra.mxu0 %v4729
        %4864 = vmatprep.subr.mxu0 0.0
        %4865 = vmatpush1.msra.mxu0 %v4730
        %4866 = vmatprep.mubr.f32.mxu0 %v4666
        %4867 = vmatmul.mubr.f32.gmra.mrb[0].mxu0 %v4659
        %v4868 = vpop.f32.mrb[0].mxu0
        %v4869 = vadd.f32 %v4799, %v4868
        %v4870 = vpop.f32.mrb[0].mxu0
        %4871 = vdwg.mxu0
        %v4872 = vmax.f32 %v4869, 0.0
        %v4873 = vld [vmem:[#allocation16] sm:$0xff]
        %v4874 = vld [vmem:[#allocation16 + $0x8] sm:$0xff]
        %v4875 = vld [vmem:[#allocation17] sm:$0xf]
        %v4878 = vcombine.high %v4873, %v4873
        %v4879 = vcombine.high %v4874, %v4874
        %v4881 = vlaneseq
        %v4882 = vshrl.u32 %v4881, 7
        %v4883 = vsub.s32 0, %v4882
        %v4884 = vrot.slane %v4875, %v4883
        %v4885 = vlaneseq
        %v4886 = vshrl.u32 %v4885, 7
        %v4887 = vsub.s32 1, %v4886
        %v4888 = vrot.slane %v4875, %v4887
        %v4889 = vlaneseq
        %v4890 = vshrl.u32 %v4889, 7
        %v4891 = vsub.s32 2, %v4890
        %v4892 = vrot.slane %v4875, %v4891
        %v4893 = vlaneseq
        %v4894 = vshrl.u32 %v4893, 7
        %v4895 = vsub.s32 3, %v4894
        %v4896 = vrot.slane %v4875, %v4895
        %vm4901 = vcmask 31744
        %v4903 = vsel %vm4901, %v4872, 0
        %vm4905 = vcmask 1043456
        %v4906 = vsel %vm4905, %v4873, 0
        %v4908 = vsel %vm4905, %v4878, 0
        %v4910 = vsel %vm4905, %v4874, 0
        %v4912 = vsel %vm4905, %v4879, 0
        %4914 = vmatprep.subr.mxu0 %v4908
        %4915 = vmatpush1.msra.mxu0 %v4906
        %4916 = vmatprep.subr.mxu0 0.0
        %4917 = vmatpush1.msra.mxu0 0.0
        %4918 = vmatprep.subr.mxu0 0.0
        %4919 = vmatpush1.msra.mxu0 0.0
        %4920 = vmatprep.subr.mxu0 0.0
        %4921 = vmatpush1.msra.mxu0 0.0
        %4922 = vmatprep.subr.mxu0 0.0
        %4923 = vmatpush1.msra.mxu0 0.0
        %4924 = vmatprep.subr.mxu0 0.0
        %4925 = vmatpush1.msra.mxu0 0.0
        %4926 = vmatprep.subr.mxu0 0.0
        %4927 = vmatpush1.msra.mxu0 0.0
        %4928 = vmatprep.subr.mxu0 0.0
        %4929 = vmatpush1.msra.mxu0 0.0
        %4930 = vmatprep.subr.mxu0 0.0
        %4931 = vmatpush1.msra.mxu0 0.0
        %4932 = vmatprep.subr.mxu0 0.0
        %4933 = vmatpush1.msra.mxu0 0.0
        %4934 = vmatprep.subr.mxu0 0.0
        %4935 = vmatpush1.msra.mxu0 0.0
        %4936 = vmatprep.subr.mxu0 0.0
        %4937 = vmatpush1.msra.mxu0 0.0
        %4938 = vmatprep.subr.mxu0 0.0
        %4939 = vmatpush1.msra.mxu0 0.0
        %4940 = vmatprep.subr.mxu0 0.0
        %4941 = vmatpush1.msra.mxu0 0.0
        %4942 = vmatprep.subr.mxu0 0.0
        %4943 = vmatpush1.msra.mxu0 0.0
        %4944 = vmatprep.subr.mxu0 0.0
        %4945 = vmatpush1.msra.mxu0 0.0
        %4946 = vmatprep.subr.mxu0 0.0
        %4947 = vmatpush1.msra.mxu0 0.0
        %4948 = vmatprep.subr.mxu0 0.0
        %4949 = vmatpush1.msra.mxu0 0.0
        %4950 = vmatprep.subr.mxu0 0.0
        %4951 = vmatpush1.msra.mxu0 0.0
        %4952 = vmatprep.subr.mxu0 0.0
        %4953 = vmatpush1.msra.mxu0 0.0
        %4954 = vmatprep.subr.mxu0 0.0
        %4955 = vmatpush1.msra.mxu0 0.0
        %4956 = vmatprep.subr.mxu0 0.0
        %4957 = vmatpush1.msra.mxu0 0.0
        %4958 = vmatprep.subr.mxu0 0.0
        %4959 = vmatpush1.msra.mxu0 0.0
        %4960 = vmatprep.subr.mxu0 0.0
        %4961 = vmatpush1.msra.mxu0 0.0
        %4962 = vmatprep.subr.mxu0 0.0
        %4963 = vmatpush1.msra.mxu0 0.0
        %4964 = vmatprep.subr.mxu0 0.0
        %4965 = vmatpush1.msra.mxu0 0.0
        %4966 = vmatprep.subr.mxu0 0.0
        %4967 = vmatpush1.msra.mxu0 0.0
        %4968 = vmatprep.subr.mxu0 0.0
        %4969 = vmatpush1.msra.mxu0 0.0
        %4970 = vmatprep.subr.mxu0 0.0
        %4971 = vmatpush1.msra.mxu0 0.0
        %4972 = vmatprep.subr.mxu0 0.0
        %4973 = vmatpush1.msra.mxu0 0.0
        %4974 = vmatprep.subr.mxu0 0.0
        %4975 = vmatpush1.msra.mxu0 0.0
        %4976 = vmatprep.subr.mxu0 0.0
        %4977 = vmatpush1.msra.mxu0 0.0
        %4978 = vmatprep.mubr.f32.mxu0 0.0
        %4979 = vmatmul.mubr.f32.gmra.mrb[0].mxu0 %v4903
        %v4980 = vpop.f32.mrb[0].mxu0
        %v4981 = vadd.f32 %v4884, %v4980
        %v4982 = vpop.f32.mrb[0].mxu0
        %v4983 = vadd.f32 %v4888, %v4982
        %4984 = vdwg.mxu0
        %4985 = vmatprep.subr.mxu0 %v4912
        %4986 = vmatpush1.msra.mxu0 %v4910
        %4987 = vmatprep.subr.mxu0 0.0
        %4988 = vmatpush1.msra.mxu0 0.0
        %4989 = vmatprep.subr.mxu0 0.0
        %4990 = vmatpush1.msra.mxu0 0.0
        %4991 = vmatprep.subr.mxu0 0.0
        %4992 = vmatpush1.msra.mxu0 0.0
        %4993 = vmatprep.subr.mxu0 0.0
        %4994 = vmatpush1.msra.mxu0 0.0
        %4995 = vmatprep.subr.mxu0 0.0
        %4996 = vmatpush1.msra.mxu0 0.0
        %4997 = vmatprep.subr.mxu0 0.0
        %4998 = vmatpush1.msra.mxu0 0.0
        %4999 = vmatprep.subr.mxu0 0.0
        %5000 = vmatpush1.msra.mxu0 0.0
        %5001 = vmatprep.subr.mxu0 0.0
        %5002 = vmatpush1.msra.mxu0 0.0
        %5003 = vmatprep.subr.mxu0 0.0
        %5004 = vmatpush1.msra.mxu0 0.0
        %5005 = vmatprep.subr.mxu0 0.0
        %5006 = vmatpush1.msra.mxu0 0.0
        %5007 = vmatprep.subr.mxu0 0.0
        %5008 = vmatpush1.msra.mxu0 0.0
        %5009 = vmatprep.subr.mxu0 0.0
        %5010 = vmatpush1.msra.mxu0 0.0
        %5011 = vmatprep.subr.mxu0 0.0
        %5012 = vmatpush1.msra.mxu0 0.0
        %5013 = vmatprep.subr.mxu0 0.0
        %5014 = vmatpush1.msra.mxu0 0.0
        %5015 = vmatprep.subr.mxu0 0.0
        %5016 = vmatpush1.msra.mxu0 0.0
        %5017 = vmatprep.subr.mxu0 0.0
        %5018 = vmatpush1.msra.mxu0 0.0
        %5019 = vmatprep.subr.mxu0 0.0
        %5020 = vmatpush1.msra.mxu0 0.0
        %5021 = vmatprep.subr.mxu0 0.0
        %5022 = vmatpush1.msra.mxu0 0.0
        %5023 = vmatprep.subr.mxu0 0.0
        %5024 = vmatpush1.msra.mxu0 0.0
        %5025 = vmatprep.subr.mxu0 0.0
        %5026 = vmatpush1.msra.mxu0 0.0
        %5027 = vmatprep.subr.mxu0 0.0
        %5028 = vmatpush1.msra.mxu0 0.0
        %5029 = vmatprep.subr.mxu0 0.0
        %5030 = vmatpush1.msra.mxu0 0.0
        %5031 = vmatprep.subr.mxu0 0.0
        %5032 = vmatpush1.msra.mxu0 0.0
        %5033 = vmatprep.subr.mxu0 0.0
        %5034 = vmatpush1.msra.mxu0 0.0
        %5035 = vmatprep.subr.mxu0 0.0
        %5036 = vmatpush1.msra.mxu0 0.0
        %5037 = vmatprep.subr.mxu0 0.0
        %5038 = vmatpush1.msra.mxu0 0.0
        %5039 = vmatprep.subr.mxu0 0.0
        %5040 = vmatpush1.msra.mxu0 0.0
        %5041 = vmatprep.subr.mxu0 0.0
        %5042 = vmatpush1.msra.mxu0 0.0
        %5043 = vmatprep.subr.mxu0 0.0
        %5044 = vmatpush1.msra.mxu0 0.0
        %5045 = vmatprep.subr.mxu0 0.0
        %5046 = vmatpush1.msra.mxu0 0.0
        %5047 = vmatprep.subr.mxu0 0.0
        %5048 = vmatpush1.msra.mxu0 0.0
        %5049 = vmatprep.mubr.f32.mxu0 0.0
        %5050 = vmatmul.mubr.f32.gmra.mrb[0].mxu0 %v4903
        %v5051 = vpop.f32.mrb[0].mxu0
        %v5052 = vadd.f32 %v4892, %v5051
        %v5053 = vpop.f32.mrb[0].mxu0
        %v5054 = vadd.f32 %v4896, %v5053
        %5055 = vdwg.mxu0
        %v5056 = vsub.f32 0.0, %v4981
        %v5057 = vsub.f32 0.0, %v4983
        %v5058 = vsub.f32 0.0, %v5052
        %v5059 = vsub.f32 0.0, %v5054
        %v5060 = vmul.f32 %v5056, 1.442695
        %v5061 = vpow.pop %v5060
        %v5062 = vmul.f32 %v5057, 1.442695
        %v5063 = vpow.pop %v5062
        %v5064 = vmul.f32 %v5058, 1.442695
        %v5065 = vpow.pop %v5064
        %v5066 = vmul.f32 %v5059, 1.442695
        %v5067 = vpow.pop %v5066
        %v5068 = vadd.f32 %v5061, 1.0
        %v5069 = vadd.f32 %v5063, 1.0
        %v5070 = vadd.f32 %v5065, 1.0
        %v5071 = vadd.f32 %v5067, 1.0
        %v5072 = vrcp.pop %v5068
        %v5073 = vrcp.pop %v5069
        %v5074 = vrcp.pop %v5070
        %v5075 = vrcp.pop %v5071
        %v5076 = vlaneseq
        %v5077 = vshrl.u32 %v5076, 7
        %v5078 = vsub.s32 0, %v5077
        %v5079 = vrot.slane %v5072, %v5078
        %v5080 = vlaneseq
        %v5081 = vshrl.u32 %v5080, 7
        %v5082 = vsub.s32 0, %v5081
        %v5083 = vrot.slane %v5073, %v5082
        %v5084 = vlaneseq
        %v5085 = vshrl.u32 %v5084, 7
        %v5086 = vsub.s32 0, %v5085
        %v5087 = vrot.slane %v5074, %v5086
        %v5088 = vlaneseq
        %v5089 = vshrl.u32 %v5088, 7
        %v5090 = vsub.s32 0, %v5089
        %v5091 = vrot.slane %v5075, %v5090
        %v5092 = vmul.f32 %v4631, %v5079
        %v5093 = vmul.f32 %v4632, %v5083
        %v5094 = vmul.f32 %v4633, %v5087
        %v5095 = vmul.f32 %v4634, %v5091
        %v5096 = vmul.f32 %v4635, %v5079
        %v5097 = vmul.f32 %v4636, %v5083
        %v5098 = vmul.f32 %v4637, %v5087
        %v5099 = vmul.f32 %v4638, %v5091
        %v5100 = vadd.f32 %v5092, %v526
        %v5101 = vadd.f32 %v5093, %v527
        %v5102 = vadd.f32 %v5094, %v528
        %v5103 = vadd.f32 %v5095, %v529
        %v5104 = vadd.f32 %v5096, %v530
        %v5105 = vadd.f32 %v5097, %v531
        %v5106 = vadd.f32 %v5098, %v532
        %v5107 = vadd.f32 %v5099, %v533
        %5108 = vst [vmem:[%s525] sm:$0xff] %v5100
        %5109 = vst [vmem:[%s525 + $0x8] sm:$0xff] %v5101
        %5110 = vst [vmem:[%s525 + $0x10] sm:$0xff] %v5102
        %5111 = vst [vmem:[%s525 + $0x18] sm:$0xff] %v5103
        %5112 = vst [vmem:[%s525 + $0x20] sm:$0xff] %v5104
        %5113 = vst [vmem:[%s525 + $0x28] sm:$0xff] %v5105
        %5114 = vst [vmem:[%s525 + $0x30] sm:$0xff] %v5106
        %5115 = vst [vmem:[%s525 + $0x38] sm:$0xff] %v5107
        %s5116 = sand.u32 %s277, 1
        %s5117 = scalar_lea.sflag [#allocation4], %s5116
        %s5118 = sand.u32 %s277, 1
        %s5119 = smul.addr %s5118, 64
        %s5120 = scalar_lea.vmem [#allocation19], %s5119
        // Predicated region
        $region105: #{tpu_custom_call.1} parent=63 // pred_check
          %p5121 = pneg %p287
        $region106: #{tpu_custom_call.1} parent=63 // pred_check_branch
          %5123 = sbr.rel (%p5121) target = $region108
        $region107: #{tpu_custom_call.1} parent=63 // pred_region
          %s5125 = ssub.s32 1024, 1024
          %5126 = vsyncadd %s5117, %s5125
          %s5127 = smul.addr %s33, 8
          %s5128 = smul.addr %s5127, 128
          %s5129 = scalar_lea.hbm %s11, %s5128
          %s5130 = sshll.u32 %s5120, 4
          %s5131 = int_to_ptr.vmem [resolvable:$true] %s5130
          %5136 = dma.vmem_to_hbm [thread:$0]  %s5131, 1024, %s5129, %s5117, 512, 512, 32
        $region108: #{tpu_custom_call.1} parent=63 // pred_fallthru
          _
      $region64: #{tpu_custom_call.1} parent=5 // pred_fallthru
        _
      %p5137 = scmp.le.s32.totalorder 2, %s28
      // Predicated region
      $region109: #{tpu_custom_call.1} parent=5 // pred_check
        %p5138 = pneg %p5137
      $region110: #{tpu_custom_call.1} parent=5 // pred_check_branch
        %5140 = sbr.rel (%p5138) target = $region112
      $region111: #{tpu_custom_call.1} parent=5 // pred_region
        %s5141 = ssub.s32 %s28, 2
        // Predicated region
        $region113: #{tpu_custom_call.1} parent=111 // pred_check
          %p5142 = pneg %p293
        $region114: #{tpu_custom_call.1} parent=111 // pred_check_branch
          %5144 = sbr.rel (%p5142) target = $region116
        $region115: #{tpu_custom_call.1} parent=111 // pred_region
          %s5145 = sand.u32 %s278, 1
          %s5146 = scalar_lea.sflag [#allocation4], %s5145
          %s5147 = sand.u32 %s278, 1
          %s5148 = smul.addr %s5147, 64
          %s5149 = scalar_lea.vmem [#allocation19], %s5148
          %5150 = dma.done %s5146, 1024
        $region116: #{tpu_custom_call.1} parent=111 // pred_fallthru
          _
      $region112: #{tpu_custom_call.1} parent=5 // pred_fallthru
        _
    $region6: #{tpu_custom_call.1} parent=1 // loop_footer
      %s32 = sadd.s32 1, %s28
    $region7: #{tpu_custom_call.1} parent=1 // loop_footer_branch
      %27 = sbr.rel target = $region3
    $region8: #{tpu_custom_call.1} parent=1 // loop_exit
      _
    %5151 = vsyncpa [#allocation3], 1
    %s5152 = scalar_lea.sflag [#allocation3], 1
    %5153 = vsyncpa %s5152, 1
    %5154 = vsyncpa [#allocation6], 1
    %5155 = vsyncpa [#allocation9], 1
    %5156 = vsyncpa [#allocation12], 1
    %5157 = vsyncpa [#allocation15], 1
    %5158 = vsyncpa [#allocation18], 1
    %5159 = vsyncpa [#allocation4], 1
    %s5160 = scalar_lea.sflag [#allocation4], 1
    %5161 = vsyncpa %s5160, 1

</llo_original>
